<compile_context>
chip_gen: v7x
topology: tpu7x:2x2x1
jax: 0.10.0
libtpu: 0.0.40
codegen_flags: <defaults>
</compile_context>

<pallas_src>
import functools

import jax
import jax.numpy as jnp
from jax.experimental import pallas as pl
from jax.experimental.pallas import tpu as pltpu

EPS = 1e-5
KSIZE = 5          # conv kernel size
C1_OUT = 6         # b1 output channels
C2_OUT = 16        # b2 output channels


def _round_up(x, m):
    return (x + m - 1) // m * m


# --------------------------------------------------------------------------
# pallas_call helpers: single grid step, full-array blocks resident in VMEM.
# --------------------------------------------------------------------------
def _full_spec(shape):
    nd = len(shape)
    return pl.BlockSpec(shape, lambda i, _nd=nd: (0,) * _nd)


def _call(kernel, out_shape, in_shapes, scratch_shapes=()):
    return pl.pallas_call(
        kernel,
        out_shape=jax.ShapeDtypeStruct(out_shape, jnp.float32),
        grid=(1,),
        in_specs=[_full_spec(s) for s in in_shapes],
        out_specs=_full_spec(out_shape),
        scratch_shapes=list(scratch_shapes),
    )


# --------------------------------------------------------------------------
# Kernel 1: BN0 (folded) + conv1 + BN1 + maxpool(2,2) + ReLU.
# --------------------------------------------------------------------------
def _block1_kernel(xs_ref, p1_ref, w1_ref, e1_ref, g0_ref, b0_ref,
                   g1_ref, b1_ref, o_ref):
    # ---- BN0 statistics (training mode, biased variance) from the input slab.
    xs = xs_ref[...]                                           # (Cin, N*H*W)
    inv_m = 1.0 / xs.shape[1]
    mean0 = jnp.sum(xs, axis=1, keepdims=True) * inv_m
    var0 = jnp.maximum(jnp.sum(xs * xs, axis=1, keepdims=True) * inv_m
                       - mean0 * mean0, 0.0)
    scale0 = g0_ref[...] * jax.lax.rsqrt(var0 + EPS)           # (Cin, 1)
    shift0 = b0_ref[...] - mean0 * scale0                      # (Cin, 1)

    # ---- Fold the BN0 affine into the conv1 weights / bias (E1 expands per-channel
    #      scale/shift to the K = Cin*5*5 contraction dim, zeros in the K padding).
    e1 = e1_ref[...]                                           # (Cin, Kp)
    scale_k = jnp.sum(scale0 * e1, axis=0, keepdims=True)      # (1, Kp)
    shift_k = jnp.sum(shift0 * e1, axis=0, keepdims=True)      # (1, Kp)
    w1 = w1_ref[...]                                           # (C1, Kp)
    w_eff = w1 * scale_k
    bias = jnp.sum(w1 * shift_k, axis=1, keepdims=True)        # (C1, 1)

    # ---- conv1 on the four pooling phases (im2col matmuls on the MXU).
    c = [jnp.dot(w_eff, p1_ref[p], preferred_element_type=jnp.float32) + bias
         for p in range(4)]                                    # 4 x (C1, M1)

    # ---- BN1 statistics over all 4*M1 conv outputs (single pass, clamped var).
    inv_n = 1.0 / (4.0 * c[0].shape[1])
    s = jnp.sum(c[0] + c[1] + c[2] + c[3], axis=1, keepdims=True)
    ss = jnp.sum(c[0] * c[0] + c[1] * c[1] + c[2] * c[2] + c[3] * c[3],
                 axis=1, keepdims=True)
    mean1 = s * inv_n
    var1 = jnp.maximum(ss * inv_n - mean1 * mean1, 0.0)
    scale1 = g1_ref[...] * jax.lax.rsqrt(var1 + EPS)           # (C1, 1)
    shift1 = b1_ref[...] - mean1 * scale1                      # (C1, 1)

    # ---- normalize (scale/shift) -> maxpool = max over phases -> ReLU.
    pooled = jnp.maximum(
        jnp.maximum(c[0] * scale1 + shift1, c[1] * scale1 + shift1),
        jnp.maximum(c[2] * scale1 + shift1, c[3] * scale1 + shift1))
    o_ref[...] = jnp.maximum(pooled, 0.0)                      # (C1, M1)


# --------------------------------------------------------------------------
# Kernel 2: conv2 + BN2 + maxpool + ReLU + flatten + full FC head.
# --------------------------------------------------------------------------
def _block2_fc_kernel(p2_ref, w2_ref, g2_ref, b2_ref,
                      wf1_ref, bf1_ref, wf2_ref, bf2_ref, wf3_ref, bf3_ref,
                      o_ref, f2_scr, xf_scr, *, n_batch, spatial):
    # ---- conv2 on the four pooling phases.
    w2 = w2_ref[...]                                           # (C2, Kp)
    c = [jnp.dot(w2, p2_ref[p], preferred_element_type=jnp.float32)
         for p in range(4)]                                    # 4 x (C2, M2)

    # ---- BN2 statistics (single pass over all 4 phases, clamped variance).
    inv_n = 1.0 / (4.0 * c[0].shape[1])
    s = jnp.sum(c[0] + c[1] + c[2] + c[3], axis=1, keepdims=True)
    ss = jnp.sum(c[0] * c[0] + c[1] * c[1] + c[2] * c[2] + c[3] * c[3],
                 axis=1, keepdims=True)
    mean = s * inv_n
    var = jnp.maximum(ss * inv_n - mean * mean, 0.0)
    scale = g2_ref[...] * jax.lax.rsqrt(var + EPS)             # (C2, 1)
    shift = b2_ref[...] - mean * scale                         # (C2, 1)

    pooled = jnp.maximum(
        jnp.maximum(c[0] * scale + shift, c[1] * scale + shift),
        jnp.maximum(c[2] * scale + shift, c[3] * scale + shift))
    f2_scr[...] = jnp.maximum(pooled, 0.0)                     # (C2, N*spatial)

    # ---- NCHW flatten via VMEM copies: xflat[n, ch*S + s] = f2[ch, n*S + s].
    n_ch = f2_scr.shape[0]
    for n in range(n_batch):
        for ch in range(n_ch):
            xf_scr[pl.ds(n, 1), pl.ds(ch * spatial, spatial)] = \
                f2_scr[pl.ds(ch, 1), pl.ds(n * spatial, spatial)]

    # ---- fused FC head (weights already stored as (in, out)).
    xf = xf_scr[...]                                           # (N, 400)
    h = jnp.dot(xf, wf1_ref[...], preferred_element_type=jnp.float32) + bf1_ref[...]
    h = jnp.maximum(h, 0.0)
    h = jnp.dot(h, wf2_ref[...], preferred_element_type=jnp.float32) + bf2_ref[...]
    h = jnp.maximum(h, 0.0)
    o_ref[...] = (jnp.dot(h, wf3_ref[...], preferred_element_type=jnp.float32)
                  + bf3_ref[...])


# --------------------------------------------------------------------------
# Host-side im2col (layout only), decomposed into the 4 max-pool phases and
# zero-padded along the contraction dim to a multiple of 128.
# --------------------------------------------------------------------------
def _im2col_pool_phases(a, kpad):
    """a: (C, N, H, W) -> (4, kpad, N * ((H-4)//2) * ((W-4)//2)).

    Row k = ci*25 + i*5 + j of phase (p, q) holds a[ci, n, 2Y+p+i, 2X+q+j];
    rows [C*25, kpad) are zero padding for full-width MXU passes.
    """
    C, N, H, W = a.shape
    Ho, Wo = H - KSIZE + 1, W - KSIZE + 1
    Ph, Pw = Ho // 2, Wo // 2
    K = C * KSIZE * KSIZE
    cols = []
    for ci in range(C):
        for i in range(KSIZE):
            for j in range(KSIZE):
                cols.append(a[ci, :, i:i + Ho, j:j + Wo])      # (N, Ho, Wo)
    full = jnp.stack(cols, axis=0)                             # (K, N, Ho, Wo)
    mats = [full[:, :, p::2, q::2].reshape(K, N * Ph * Pw)
            for p in range(2) for q in range(2)]
    out = jnp.stack(mats, axis=0)                              # (4, K, M)
    return jnp.pad(out, ((0, 0), (0, kpad - K), (0, 0)))


# --------------------------------------------------------------------------
# Parameters (deterministic init, pre-packed/pre-transposed for the kernels).
# --------------------------------------------------------------------------
def init_params(key, in_channels, n_class):
    ks = jax.random.split(key, 8)
    k1 = in_channels * KSIZE * KSIZE
    k1p = _round_up(k1, 128)
    k2 = C1_OUT * KSIZE * KSIZE
    k2p = _round_up(k2, 128)
    n_feat = C2_OUT * 5 * 5                                    # 400

    w1 = 0.1 * jax.random.normal(ks[0], (C1_OUT, in_channels, KSIZE, KSIZE),
                                 jnp.float32)
    w2 = 0.1 * jax.random.normal(ks[1], (C2_OUT, C1_OUT, KSIZE, KSIZE),
                                 jnp.float32)

    # channel -> K expansion matrix used to fold BN0 into conv1 (0 in K padding).
    kidx = jnp.arange(k1p)
    e1 = ((kidx[None, :] // (KSIZE * KSIZE)) == jnp.arange(in_channels)[:, None]) \
        & (kidx[None, :] < k1)

    return {
        # b0: BatchNorm2d(in_channels)
        "g0": jnp.ones((in_channels, 1), jnp.float32),
        "b0": jnp.zeros((in_channels, 1), jnp.float32),
        # b1: Conv2d(in_channels, 6, 5, bias=False) + BN(6)   (K padded to 128)
        "w1p": jnp.pad(w1.reshape(C1_OUT, k1), ((0, 0), (0, k1p - k1))),
        "e1": e1.astype(jnp.float32),
        "g1": jnp.ones((C1_OUT, 1), jnp.float32),
        "b1": jnp.zeros((C1_OUT, 1), jnp.float32),
        # b2: Conv2d(6, 16, 5, bias=False) + BN(16)            (K padded to 256)
        "w2p": jnp.pad(w2.reshape(C2_OUT, k2), ((0, 0), (0, k2p - k2))),
        "g2": jnp.ones((C2_OUT, 1), jnp.float32),
        "b2": jnp.zeros((C2_OUT, 1), jnp.float32),
        # fc head, weights stored pre-transposed as (in, out)
        "wf1": 0.05 * jax.random.normal(ks[2], (n_feat, 120), jnp.float32),
        "bf1": 0.05 * jax.random.normal(ks[3], (1, 120), jnp.float32),
        "wf2": 0.05 * jax.random.normal(ks[4], (120, 84), jnp.float32),
        "bf2": 0.05 * jax.random.normal(ks[5], (1, 84), jnp.float32),
        "wf3": 0.05 * jax.random.normal(ks[6], (84, n_class), jnp.float32),
        "bf3": 0.05 * jax.random.normal(ks[7], (1, n_class), jnp.float32),
    }


# --------------------------------------------------------------------------
# Full forward pass (two fused pallas_calls).
# --------------------------------------------------------------------------
def lenet_forward(params, x):
    """x: (N, Cin, 32, 32) float32 -> logits (N, n_class).  Training-mode BN."""
    N, Cin, H, W = x.shape
    k1p = params["w1p"].shape[1]
    k2p = params["w2p"].shape[1]
    n_class = params["wf3"].shape[1]

    # ---- block 0 + block 1 (single fused kernel) -------------------------
    x_cf = x.transpose(1, 0, 2, 3)                             # (Cin, N, H, W)
    x_slab = x_cf.reshape(Cin, N * H * W)
    p1 = _im2col_pool_phases(x_cf, k1p)                        # (4, k1p, M1)
    m1 = p1.shape[2]
    ph1, pw1 = (H - KSIZE + 1) // 2, (W - KSIZE + 1) // 2      # 14, 14

    f1 = _call(_block1_kernel, (C1_OUT, m1),
               [(Cin, N * H * W), (4, k1p, m1), (C1_OUT, k1p), (Cin, k1p),
                (Cin, 1), (Cin, 1), (C1_OUT, 1), (C1_OUT, 1)])(
        x_slab, p1, params["w1p"], params["e1"],
        params["g0"], params["b0"], params["g1"], params["b1"])

    # ---- block 2 + FC head (single fused kernel) --------------------------
    f1r = f1.reshape(C1_OUT, N, ph1, pw1)                      # (6, N, 14, 14)
    p2 = _im2col_pool_phases(f1r, k2p)                         # (4, k2p, M2)
    m2 = p2.shape[2]
    ph2, pw2 = (ph1 - KSIZE + 1) // 2, (pw1 - KSIZE + 1) // 2  # 5, 5
    spatial = ph2 * pw2                                        # 25
    n_feat = C2_OUT * spatial                                  # 400

    kern = functools.partial(_block2_fc_kernel, n_batch=N, spatial=spatial)
    out = _call(kern, (N, n_class),
                [(4, k2p, m2), (C2_OUT, k2p), (C2_OUT, 1), (C2_OUT, 1),
                 (n_feat, 120), (1, 120), (120, 84), (1, 84),
                 (84, n_class), (1, n_class)],
                scratch_shapes=[pltpu.VMEM((C2_OUT, m2), jnp.float32),
                                pltpu.VMEM((N, n_feat), jnp.float32)])(
        p2, params["w2p"], params["g2"], params["b2"],
        params["wf1"], params["bf1"], params["wf2"], params["bf2"],
        params["wf3"], params["bf3"])
    # TODO(synk): use_feature=True (returning the f0/f1/f2 feature maps) is not
    # materialized by this fused path; f0 is folded into conv1 and only the
    # logits are produced.
    return out


if __name__ == "__main__":
    IN_CHANNELS, N_CLASS = 3, 10
    # LeNet5 geometry requires 32x32 inputs so that 16*5*5 = 400 features come out.
    key = jax.random.PRNGKey(0)
    kx, kp = jax.random.split(key)
    x = jax.random.normal(kx, (2, IN_CHANNELS, 32, 32), jnp.float32)
    params = init_params(kp, IN_CHANNELS, N_CLASS)

    fwd = jax.jit(lenet_forward)
    out = jax.block_until_ready(fwd(params, x))
    assert out.shape == (2, N_CLASS), out.shape
    assert bool(jnp.all(jnp.isfinite(out)))
    print("KERNEL_OK")
</pallas_src>

<mosaic_0001>
module attributes {stable_mosaic.version = 11 : i64} {
  func.func @_block1_kernel(%arg0: i32, %arg1: memref<3x2048xf32, #tpu.memory_space<vmem>>, %arg2: memref<4x128x392xf32, #tpu.memory_space<vmem>>, %arg3: memref<6x128xf32, #tpu.memory_space<vmem>>, %arg4: memref<3x128xf32, #tpu.memory_space<vmem>>, %arg5: memref<3x1xf32, #tpu.memory_space<vmem>>, %arg6: memref<3x1xf32, #tpu.memory_space<vmem>>, %arg7: memref<6x1xf32, #tpu.memory_space<vmem>>, %arg8: memref<6x1xf32, #tpu.memory_space<vmem>>, %arg9: memref<6x392xf32, #tpu.memory_space<vmem>>) attributes {dimension_semantics = [#tpu.dimension_semantics<arbitrary>], iteration_bounds = array<i64: 1>, scalar_prefetch = 0 : i64, scratch_operands = 0 : i64, tpu.core_type = #tpu.core_type<tc>, window_params = [{pipeline_mode = #tpu.pipeline_mode<synchronous>, transform_indices = @transform_0, window_bounds = array<i64: 3, 2048>}, {pipeline_mode = #tpu.pipeline_mode<synchronous>, transform_indices = @transform_1, window_bounds = array<i64: 4, 128, 392>}, {pipeline_mode = #tpu.pipeline_mode<synchronous>, transform_indices = @transform_2, window_bounds = array<i64: 6, 128>}, {pipeline_mode = #tpu.pipeline_mode<synchronous>, transform_indices = @transform_3, window_bounds = array<i64: 3, 128>}, {pipeline_mode = #tpu.pipeline_mode<synchronous>, transform_indices = @transform_4, window_bounds = array<i64: 3, 1>}, {pipeline_mode = #tpu.pipeline_mode<synchronous>, transform_indices = @transform_5, window_bounds = array<i64: 3, 1>}, {pipeline_mode = #tpu.pipeline_mode<synchronous>, transform_indices = @transform_6, window_bounds = array<i64: 6, 1>}, {pipeline_mode = #tpu.pipeline_mode<synchronous>, transform_indices = @transform_7, window_bounds = array<i64: 6, 1>}, {pipeline_mode = #tpu.pipeline_mode<synchronous>, transform_indices = @transform_8, window_bounds = array<i64: 6, 392>}]} {
    %c0 = arith.constant 0 : index
    %c0_0 = arith.constant 0 : index
    %0 = vector.load %arg1[%c0, %c0_0] : memref<3x2048xf32, #tpu.memory_space<vmem>>, vector<3x2048xf32>
    %cst = arith.constant dense<0.000000e+00> : vector<3xf32>
    %1 = vector.multi_reduction <add>, %0, %cst [1] : vector<3x2048xf32> to vector<3xf32>
    %2 = vector.shape_cast %1 : vector<3xf32> to vector<3x1xf32>
    %cst_1 = arith.constant 4.8828125E-4 : f32
    %3 = vector.broadcast %cst_1 : f32 to vector<3x1xf32>
    %4 = arith.mulf %2, %3 : vector<3x1xf32>
    %5 = arith.mulf %0, %0 : vector<3x2048xf32>
    %cst_2 = arith.constant dense<0.000000e+00> : vector<3xf32>
    %6 = vector.multi_reduction <add>, %5, %cst_2 [1] : vector<3x2048xf32> to vector<3xf32>
    %7 = vector.shape_cast %6 : vector<3xf32> to vector<3x1xf32>
    %cst_3 = arith.constant 4.8828125E-4 : f32
    %8 = vector.broadcast %cst_3 : f32 to vector<3x1xf32>
    %9 = arith.mulf %7, %8 : vector<3x1xf32>
    %10 = arith.mulf %4, %4 : vector<3x1xf32>
    %11 = arith.subf %9, %10 : vector<3x1xf32>
    %cst_4 = arith.constant 0.000000e+00 : f32
    %12 = vector.broadcast %cst_4 : f32 to vector<3x1xf32>
    %13 = arith.maximumf %11, %12 : vector<3x1xf32>
    %c0_5 = arith.constant 0 : index
    %c0_6 = arith.constant 0 : index
    %14 = vector.load %arg5[%c0_5, %c0_6] : memref<3x1xf32, #tpu.memory_space<vmem>>, vector<3x1xf32>
    %cst_7 = arith.constant 9.99999974E-6 : f32
    %15 = vector.broadcast %cst_7 : f32 to vector<3x1xf32>
    %16 = arith.addf %13, %15 : vector<3x1xf32>
    %17 = math.rsqrt %16 : vector<3x1xf32>
    %18 = arith.mulf %14, %17 : vector<3x1xf32>
    %c0_8 = arith.constant 0 : index
    %c0_9 = arith.constant 0 : index
    %19 = vector.load %arg6[%c0_8, %c0_9] : memref<3x1xf32, #tpu.memory_space<vmem>>, vector<3x1xf32>
    %20 = arith.mulf %4, %18 : vector<3x1xf32>
    %21 = arith.subf %19, %20 : vector<3x1xf32>
    %c0_10 = arith.constant 0 : index
    %c0_11 = arith.constant 0 : index
    %22 = vector.load %arg4[%c0_10, %c0_11] : memref<3x128xf32, #tpu.memory_space<vmem>>, vector<3x128xf32>
    %23 = vector.broadcast %18 : vector<3x1xf32> to vector<3x128xf32>
    %24 = arith.mulf %23, %22 : vector<3x128xf32>
    %cst_12 = arith.constant dense<0.000000e+00> : vector<128xf32>
    %25 = vector.multi_reduction <add>, %24, %cst_12 [0] : vector<3x128xf32> to vector<128xf32>
    %26 = vector.shape_cast %25 : vector<128xf32> to vector<1x128xf32>
    %27 = vector.broadcast %21 : vector<3x1xf32> to vector<3x128xf32>
    %28 = arith.mulf %27, %22 : vector<3x128xf32>
    %cst_13 = arith.constant dense<0.000000e+00> : vector<128xf32>
    %29 = vector.multi_reduction <add>, %28, %cst_13 [0] : vector<3x128xf32> to vector<128xf32>
    %30 = vector.shape_cast %29 : vector<128xf32> to vector<1x128xf32>
    %c0_14 = arith.constant 0 : index
    %c0_15 = arith.constant 0 : index
    %31 = vector.load %arg3[%c0_14, %c0_15] : memref<6x128xf32, #tpu.memory_space<vmem>>, vector<6x128xf32>
    %32 = vector.broadcast %26 : vector<1x128xf32> to vector<6x128xf32>
    %33 = arith.mulf %31, %32 : vector<6x128xf32>
    %34 = vector.broadcast %30 : vector<1x128xf32> to vector<6x128xf32>
    %35 = arith.mulf %31, %34 : vector<6x128xf32>
    %cst_16 = arith.constant dense<0.000000e+00> : vector<6xf32>
    %36 = vector.multi_reduction <add>, %35, %cst_16 [1] : vector<6x128xf32> to vector<6xf32>
    %37 = vector.shape_cast %36 : vector<6xf32> to vector<6x1xf32>
    %c0_17 = arith.constant 0 : index
    %c0_18 = arith.constant 0 : index
    %c0_19 = arith.constant 0 : index
    %38 = vector.load %arg2[%c0_17, %c0_18, %c0_19] : memref<4x128x392xf32, #tpu.memory_space<vmem>>, vector<1x128x392xf32>
    %39 = vector.shape_cast %38 : vector<1x128x392xf32> to vector<128x392xf32>
    %cst_20 = arith.constant dense<0.000000e+00> : vector<6x392xf32>
    %40 = tpu.matmul %33, %39, %cst_20 {dimension_numbers = #tpu.dot_dimension_numbers<[1], [0], [0], [1], [0, 0, 1, 1], [], []>} : vector<6x128xf32>, vector<128x392xf32>, vector<6x392xf32> -> vector<6x392xf32>
    %41 = vector.broadcast %37 : vector<6x1xf32> to vector<6x392xf32>
    %42 = arith.addf %40, %41 : vector<6x392xf32>
    %c1 = arith.constant 1 : index
    %c0_21 = arith.constant 0 : index
    %c0_22 = arith.constant 0 : index
    %43 = vector.load %arg2[%c1, %c0_21, %c0_22] : memref<4x128x392xf32, #tpu.memory_space<vmem>>, vector<1x128x392xf32>
    %44 = vector.shape_cast %43 : vector<1x128x392xf32> to vector<128x392xf32>
    %cst_23 = arith.constant dense<0.000000e+00> : vector<6x392xf32>
    %45 = tpu.matmul %33, %44, %cst_23 {dimension_numbers = #tpu.dot_dimension_numbers<[1], [0], [0], [1], [0, 0, 1, 1], [], []>} : vector<6x128xf32>, vector<128x392xf32>, vector<6x392xf32> -> vector<6x392xf32>
    %46 = vector.broadcast %37 : vector<6x1xf32> to vector<6x392xf32>
    %47 = arith.addf %45, %46 : vector<6x392xf32>
    %c2 = arith.constant 2 : index
    %c0_24 = arith.constant 0 : index
    %c0_25 = arith.constant 0 : index
    %48 = vector.load %arg2[%c2, %c0_24, %c0_25] : memref<4x128x392xf32, #tpu.memory_space<vmem>>, vector<1x128x392xf32>
    %49 = vector.shape_cast %48 : vector<1x128x392xf32> to vector<128x392xf32>
    %cst_26 = arith.constant dense<0.000000e+00> : vector<6x392xf32>
    %50 = tpu.matmul %33, %49, %cst_26 {dimension_numbers = #tpu.dot_dimension_numbers<[1], [0], [0], [1], [0, 0, 1, 1], [], []>} : vector<6x128xf32>, vector<128x392xf32>, vector<6x392xf32> -> vector<6x392xf32>
    %51 = vector.broadcast %37 : vector<6x1xf32> to vector<6x392xf32>
    %52 = arith.addf %50, %51 : vector<6x392xf32>
    %c3 = arith.constant 3 : index
    %c0_27 = arith.constant 0 : index
    %c0_28 = arith.constant 0 : index
    %53 = vector.load %arg2[%c3, %c0_27, %c0_28] : memref<4x128x392xf32, #tpu.memory_space<vmem>>, vector<1x128x392xf32>
    %54 = vector.shape_cast %53 : vector<1x128x392xf32> to vector<128x392xf32>
    %cst_29 = arith.constant dense<0.000000e+00> : vector<6x392xf32>
    %55 = tpu.matmul %33, %54, %cst_29 {dimension_numbers = #tpu.dot_dimension_numbers<[1], [0], [0], [1], [0, 0, 1, 1], [], []>} : vector<6x128xf32>, vector<128x392xf32>, vector<6x392xf32> -> vector<6x392xf32>
    %56 = vector.broadcast %37 : vector<6x1xf32> to vector<6x392xf32>
    %57 = arith.addf %55, %56 : vector<6x392xf32>
    %58 = arith.addf %42, %47 : vector<6x392xf32>
    %59 = arith.addf %58, %52 : vector<6x392xf32>
    %60 = arith.addf %59, %57 : vector<6x392xf32>
    %cst_30 = arith.constant dense<0.000000e+00> : vector<6xf32>
    %61 = vector.multi_reduction <add>, %60, %cst_30 [1] : vector<6x392xf32> to vector<6xf32>
    %62 = vector.shape_cast %61 : vector<6xf32> to vector<6x1xf32>
    %63 = arith.mulf %42, %42 : vector<6x392xf32>
    %64 = arith.mulf %47, %47 : vector<6x392xf32>
    %65 = arith.addf %63, %64 : vector<6x392xf32>
    %66 = arith.mulf %52, %52 : vector<6x392xf32>
    %67 = arith.addf %65, %66 : vector<6x392xf32>
    %68 = arith.mulf %57, %57 : vector<6x392xf32>
    %69 = arith.addf %67, %68 : vector<6x392xf32>
    %cst_31 = arith.constant dense<0.000000e+00> : vector<6xf32>
    %70 = vector.multi_reduction <add>, %69, %cst_31 [1] : vector<6x392xf32> to vector<6xf32>
    %71 = vector.shape_cast %70 : vector<6xf32> to vector<6x1xf32>
    %cst_32 = arith.constant 6.37755089E-4 : f32
    %72 = vector.broadcast %cst_32 : f32 to vector<6x1xf32>
    %73 = arith.mulf %62, %72 : vector<6x1xf32>
    %cst_33 = arith.constant 6.37755089E-4 : f32
    %74 = vector.broadcast %cst_33 : f32 to vector<6x1xf32>
    %75 = arith.mulf %71, %74 : vector<6x1xf32>
    %76 = arith.mulf %73, %73 : vector<6x1xf32>
    %77 = arith.subf %75, %76 : vector<6x1xf32>
    %cst_34 = arith.constant 0.000000e+00 : f32
    %78 = vector.broadcast %cst_34 : f32 to vector<6x1xf32>
    %79 = arith.maximumf %77, %78 : vector<6x1xf32>
    %c0_35 = arith.constant 0 : index
    %c0_36 = arith.constant 0 : index
    %80 = vector.load %arg7[%c0_35, %c0_36] : memref<6x1xf32, #tpu.memory_space<vmem>>, vector<6x1xf32>
    %cst_37 = arith.constant 9.99999974E-6 : f32
    %81 = vector.broadcast %cst_37 : f32 to vector<6x1xf32>
    %82 = arith.addf %79, %81 : vector<6x1xf32>
    %83 = math.rsqrt %82 : vector<6x1xf32>
    %84 = arith.mulf %80, %83 : vector<6x1xf32>
    %c0_38 = arith.constant 0 : index
    %c0_39 = arith.constant 0 : index
    %85 = vector.load %arg8[%c0_38, %c0_39] : memref<6x1xf32, #tpu.memory_space<vmem>>, vector<6x1xf32>
    %86 = arith.mulf %73, %84 : vector<6x1xf32>
    %87 = arith.subf %85, %86 : vector<6x1xf32>
    %88 = vector.broadcast %84 : vector<6x1xf32> to vector<6x392xf32>
    %89 = arith.mulf %42, %88 : vector<6x392xf32>
    %90 = vector.broadcast %87 : vector<6x1xf32> to vector<6x392xf32>
    %91 = arith.addf %89, %90 : vector<6x392xf32>
    %92 = vector.broadcast %84 : vector<6x1xf32> to vector<6x392xf32>
    %93 = arith.mulf %47, %92 : vector<6x392xf32>
    %94 = vector.broadcast %87 : vector<6x1xf32> to vector<6x392xf32>
    %95 = arith.addf %93, %94 : vector<6x392xf32>
    %96 = arith.maximumf %91, %95 : vector<6x392xf32>
    %97 = vector.broadcast %84 : vector<6x1xf32> to vector<6x392xf32>
    %98 = arith.mulf %52, %97 : vector<6x392xf32>
    %99 = vector.broadcast %87 : vector<6x1xf32> to vector<6x392xf32>
    %100 = arith.addf %98, %99 : vector<6x392xf32>
    %101 = vector.broadcast %84 : vector<6x1xf32> to vector<6x392xf32>
    %102 = arith.mulf %57, %101 : vector<6x392xf32>
    %103 = vector.broadcast %87 : vector<6x1xf32> to vector<6x392xf32>
    %104 = arith.addf %102, %103 : vector<6x392xf32>
    %105 = arith.maximumf %100, %104 : vector<6x392xf32>
    %106 = arith.maximumf %96, %105 : vector<6x392xf32>
    %cst_40 = arith.constant 0.000000e+00 : f32
    %107 = vector.broadcast %cst_40 : f32 to vector<6x392xf32>
    %108 = arith.maximumf %106, %107 : vector<6x392xf32>
    %c0_41 = arith.constant 0 : index
    %c0_42 = arith.constant 0 : index
    %109 = vector.load %arg9[%c0_41, %c0_42] : memref<6x392xf32, #tpu.memory_space<vmem>>, vector<6x392xf32>
    tpu.vector_store %arg9[%c0_41, %c0_42], %108 {strides = array<i32>} : memref<6x392xf32, #tpu.memory_space<vmem>>, vector<6x392xf32>,
    return
  }
  func.func @transform_0(%arg0: i32) -> (i32, i32) {
    %c0_i32 = arith.constant 0 : i32
    %c0_i32_0 = arith.constant 0 : i32
    %c0_i32_1 = arith.constant 0 : i32
    return %c0_i32, %c0_i32_0 : i32, i32
  }
  func.func @transform_1(%arg0: i32) -> (i32, i32, i32) {
    %c0_i32 = arith.constant 0 : i32
    %c0_i32_0 = arith.constant 0 : i32
    %c0_i32_1 = arith.constant 0 : i32
    %c0_i32_2 = arith.constant 0 : i32
    return %c0_i32, %c0_i32_0, %c0_i32_1 : i32, i32, i32
  }
  func.func @transform_2(%arg0: i32) -> (i32, i32) {
    %c0_i32 = arith.constant 0 : i32
    %c0_i32_0 = arith.constant 0 : i32
    %c0_i32_1 = arith.constant 0 : i32
    return %c0_i32, %c0_i32_0 : i32, i32
  }
  func.func @transform_3(%arg0: i32) -> (i32, i32) {
    %c0_i32 = arith.constant 0 : i32
    %c0_i32_0 = arith.constant 0 : i32
    %c0_i32_1 = arith.constant 0 : i32
    return %c0_i32, %c0_i32_0 : i32, i32
  }
  func.func @transform_4(%arg0: i32) -> (i32, i32) {
    %c0_i32 = arith.constant 0 : i32
    %c0_i32_0 = arith.constant 0 : i32
    %c0_i32_1 = arith.constant 0 : i32
    return %c0_i32, %c0_i32_0 : i32, i32
  }
  func.func @transform_5(%arg0: i32) -> (i32, i32) {
    %c0_i32 = arith.constant 0 : i32
    %c0_i32_0 = arith.constant 0 : i32
    %c0_i32_1 = arith.constant 0 : i32
    return %c0_i32, %c0_i32_0 : i32, i32
  }
  func.func @transform_6(%arg0: i32) -> (i32, i32) {
    %c0_i32 = arith.constant 0 : i32
    %c0_i32_0 = arith.constant 0 : i32
    %c0_i32_1 = arith.constant 0 : i32
    return %c0_i32, %c0_i32_0 : i32, i32
  }
  func.func @transform_7(%arg0: i32) -> (i32, i32) {
    %c0_i32 = arith.constant 0 : i32
    %c0_i32_0 = arith.constant 0 : i32
    %c0_i32_1 = arith.constant 0 : i32
    return %c0_i32, %c0_i32_0 : i32, i32
  }
  func.func @transform_8(%arg0: i32) -> (i32, i32) {
    %c0_i32 = arith.constant 0 : i32
    %c0_i32_0 = arith.constant 0 : i32
    %c0_i32_1 = arith.constant 0 : i32
    return %c0_i32, %c0_i32_0 : i32, i32
  }
}

module attributes {stable_mosaic.version = 11 : i64} {
  func.func @_block2_fc_kernel(%arg0: i32, %arg1: memref<4x256x50xf32, #tpu.memory_space<vmem>>, %arg2: memref<16x256xf32, #tpu.memory_space<vmem>>, %arg3: memref<16x1xf32, #tpu.memory_space<vmem>>, %arg4: memref<16x1xf32, #tpu.memory_space<vmem>>, %arg5: memref<400x120xf32, #tpu.memory_space<vmem>>, %arg6: memref<1x120xf32, #tpu.memory_space<vmem>>, %arg7: memref<120x84xf32, #tpu.memory_space<vmem>>, %arg8: memref<1x84xf32, #tpu.memory_space<vmem>>, %arg9: memref<84x10xf32, #tpu.memory_space<vmem>>, %arg10: memref<1x10xf32, #tpu.memory_space<vmem>>, %arg11: memref<2x10xf32, #tpu.memory_space<vmem>>, %arg12: memref<16x50xf32, #tpu.memory_space<vmem>>, %arg13: memref<2x400xf32, #tpu.memory_space<vmem>>) attributes {dimension_semantics = [#tpu.dimension_semantics<arbitrary>], iteration_bounds = array<i64: 1>, scalar_prefetch = 0 : i64, scratch_operands = 2 : i64, tpu.core_type = #tpu.core_type<tc>, window_params = [{pipeline_mode = #tpu.pipeline_mode<synchronous>, transform_indices = @transform_0, window_bounds = array<i64: 4, 256, 50>}, {pipeline_mode = #tpu.pipeline_mode<synchronous>, transform_indices = @transform_1, window_bounds = array<i64: 16, 256>}, {pipeline_mode = #tpu.pipeline_mode<synchronous>, transform_indices = @transform_2, window_bounds = array<i64: 16, 1>}, {pipeline_mode = #tpu.pipeline_mode<synchronous>, transform_indices = @transform_3, window_bounds = array<i64: 16, 1>}, {pipeline_mode = #tpu.pipeline_mode<synchronous>, transform_indices = @transform_4, window_bounds = array<i64: 400, 120>}, {pipeline_mode = #tpu.pipeline_mode<synchronous>, transform_indices = @transform_5, window_bounds = array<i64: 1, 120>}, {pipeline_mode = #tpu.pipeline_mode<synchronous>, transform_indices = @transform_6, window_bounds = array<i64: 120, 84>}, {pipeline_mode = #tpu.pipeline_mode<synchronous>, transform_indices = @transform_7, window_bounds = array<i64: 1, 84>}, {pipeline_mode = #tpu.pipeline_mode<synchronous>, transform_indices = @transform_8, window_bounds = array<i64: 84, 10>}, {pipeline_mode = #tpu.pipeline_mode<synchronous>, transform_indices = @transform_9, window_bounds = array<i64: 1, 10>}, {pipeline_mode = #tpu.pipeline_mode<synchronous>, transform_indices = @transform_10, window_bounds = array<i64: 2, 10>}]} {
    %c0 = arith.constant 0 : index
    %c0_0 = arith.constant 0 : index
    %0 = vector.load %arg2[%c0, %c0_0] : memref<16x256xf32, #tpu.memory_space<vmem>>, vector<16x256xf32>
    %c0_1 = arith.constant 0 : index
    %c0_2 = arith.constant 0 : index
    %c0_3 = arith.constant 0 : index
    %1 = vector.load %arg1[%c0_1, %c0_2, %c0_3] : memref<4x256x50xf32, #tpu.memory_space<vmem>>, vector<1x256x50xf32>
    %2 = vector.shape_cast %1 : vector<1x256x50xf32> to vector<256x50xf32>
    %cst = arith.constant dense<0.000000e+00> : vector<16x50xf32>
    %3 = tpu.matmul %0, %2, %cst {dimension_numbers = #tpu.dot_dimension_numbers<[1], [0], [0], [1], [0, 0, 1, 1], [], []>} : vector<16x256xf32>, vector<256x50xf32>, vector<16x50xf32> -> vector<16x50xf32>
    %c1 = arith.constant 1 : index
    %c0_4 = arith.constant 0 : index
    %c0_5 = arith.constant 0 : index
    %4 = vector.load %arg1[%c1, %c0_4, %c0_5] : memref<4x256x50xf32, #tpu.memory_space<vmem>>, vector<1x256x50xf32>
    %5 = vector.shape_cast %4 : vector<1x256x50xf32> to vector<256x50xf32>
    %cst_6 = arith.constant dense<0.000000e+00> : vector<16x50xf32>
    %6 = tpu.matmul %0, %5, %cst_6 {dimension_numbers = #tpu.dot_dimension_numbers<[1], [0], [0], [1], [0, 0, 1, 1], [], []>} : vector<16x256xf32>, vector<256x50xf32>, vector<16x50xf32> -> vector<16x50xf32>
    %c2 = arith.constant 2 : index
    %c0_7 = arith.constant 0 : index
    %c0_8 = arith.constant 0 : index
    %7 = vector.load %arg1[%c2, %c0_7, %c0_8] : memref<4x256x50xf32, #tpu.memory_space<vmem>>, vector<1x256x50xf32>
    %8 = vector.shape_cast %7 : vector<1x256x50xf32> to vector<256x50xf32>
    %cst_9 = arith.constant dense<0.000000e+00> : vector<16x50xf32>
    %9 = tpu.matmul %0, %8, %cst_9 {dimension_numbers = #tpu.dot_dimension_numbers<[1], [0], [0], [1], [0, 0, 1, 1], [], []>} : vector<16x256xf32>, vector<256x50xf32>, vector<16x50xf32> -> vector<16x50xf32>
    %c3 = arith.constant 3 : index
    %c0_10 = arith.constant 0 : index
    %c0_11 = arith.constant 0 : index
    %10 = vector.load %arg1[%c3, %c0_10, %c0_11] : memref<4x256x50xf32, #tpu.memory_space<vmem>>, vector<1x256x50xf32>
    %11 = vector.shape_cast %10 : vector<1x256x50xf32> to vector<256x50xf32>
    %cst_12 = arith.constant dense<0.000000e+00> : vector<16x50xf32>
    %12 = tpu.matmul %0, %11, %cst_12 {dimension_numbers = #tpu.dot_dimension_numbers<[1], [0], [0], [1], [0, 0, 1, 1], [], []>} : vector<16x256xf32>, vector<256x50xf32>, vector<16x50xf32> -> vector<16x50xf32>
    %13 = arith.addf %3, %6 : vector<16x50xf32>
    %14 = arith.addf %13, %9 : vector<16x50xf32>
    %15 = arith.addf %14, %12 : vector<16x50xf32>
    %cst_13 = arith.constant dense<0.000000e+00> : vector<16xf32>
    %16 = vector.multi_reduction <add>, %15, %cst_13 [1] : vector<16x50xf32> to vector<16xf32>
    %17 = vector.shape_cast %16 : vector<16xf32> to vector<16x1xf32>
    %18 = arith.mulf %3, %3 : vector<16x50xf32>
    %19 = arith.mulf %6, %6 : vector<16x50xf32>
    %20 = arith.addf %18, %19 : vector<16x50xf32>
    %21 = arith.mulf %9, %9 : vector<16x50xf32>
    %22 = arith.addf %20, %21 : vector<16x50xf32>
    %23 = arith.mulf %12, %12 : vector<16x50xf32>
    %24 = arith.addf %22, %23 : vector<16x50xf32>
    %cst_14 = arith.constant dense<0.000000e+00> : vector<16xf32>
    %25 = vector.multi_reduction <add>, %24, %cst_14 [1] : vector<16x50xf32> to vector<16xf32>
    %26 = vector.shape_cast %25 : vector<16xf32> to vector<16x1xf32>
    %cst_15 = arith.constant 5.000000e-03 : f32
    %27 = vector.broadcast %cst_15 : f32 to vector<16x1xf32>
    %28 = arith.mulf %17, %27 : vector<16x1xf32>
    %cst_16 = arith.constant 5.000000e-03 : f32
    %29 = vector.broadcast %cst_16 : f32 to vector<16x1xf32>
    %30 = arith.mulf %26, %29 : vector<16x1xf32>
    %31 = arith.mulf %28, %28 : vector<16x1xf32>
    %32 = arith.subf %30, %31 : vector<16x1xf32>
    %cst_17 = arith.constant 0.000000e+00 : f32
    %33 = vector.broadcast %cst_17 : f32 to vector<16x1xf32>
    %34 = arith.maximumf %32, %33 : vector<16x1xf32>
    %c0_18 = arith.constant 0 : index
    %c0_19 = arith.constant 0 : index
    %35 = vector.load %arg3[%c0_18, %c0_19] : memref<16x1xf32, #tpu.memory_space<vmem>>, vector<16x1xf32>
    %cst_20 = arith.constant 9.99999974E-6 : f32
    %36 = vector.broadcast %cst_20 : f32 to vector<16x1xf32>
    %37 = arith.addf %34, %36 : vector<16x1xf32>
    %38 = math.rsqrt %37 : vector<16x1xf32>
    %39 = arith.mulf %35, %38 : vector<16x1xf32>
    %c0_21 = arith.constant 0 : index
    %c0_22 = arith.constant 0 : index
    %40 = vector.load %arg4[%c0_21, %c0_22] : memref<16x1xf32, #tpu.memory_space<vmem>>, vector<16x1xf32>
    %41 = arith.mulf %28, %39 : vector<16x1xf32>
    %42 = arith.subf %40, %41 : vector<16x1xf32>
    %43 = vector.broadcast %39 : vector<16x1xf32> to vector<16x50xf32>
    %44 = arith.mulf %3, %43 : vector<16x50xf32>
    %45 = vector.broadcast %42 : vector<16x1xf32> to vector<16x50xf32>
    %46 = arith.addf %44, %45 : vector<16x50xf32>
    %47 = vector.broadcast %39 : vector<16x1xf32> to vector<16x50xf32>
    %48 = arith.mulf %6, %47 : vector<16x50xf32>
    %49 = vector.broadcast %42 : vector<16x1xf32> to vector<16x50xf32>
    %50 = arith.addf %48, %49 : vector<16x50xf32>
    %51 = arith.maximumf %46, %50 : vector<16x50xf32>
    %52 = vector.broadcast %39 : vector<16x1xf32> to vector<16x50xf32>
    %53 = arith.mulf %9, %52 : vector<16x50xf32>
    %54 = vector.broadcast %42 : vector<16x1xf32> to vector<16x50xf32>
    %55 = arith.addf %53, %54 : vector<16x50xf32>
    %56 = vector.broadcast %39 : vector<16x1xf32> to vector<16x50xf32>
    %57 = arith.mulf %12, %56 : vector<16x50xf32>
    %58 = vector.broadcast %42 : vector<16x1xf32> to vector<16x50xf32>
    %59 = arith.addf %57, %58 : vector<16x50xf32>
    %60 = arith.maximumf %55, %59 : vector<16x50xf32>
    %61 = arith.maximumf %51, %60 : vector<16x50xf32>
    %cst_23 = arith.constant 0.000000e+00 : f32
    %62 = vector.broadcast %cst_23 : f32 to vector<16x50xf32>
    %63 = arith.maximumf %61, %62 : vector<16x50xf32>
    %c0_24 = arith.constant 0 : index
    %c0_25 = arith.constant 0 : index
    %64 = vector.load %arg12[%c0_24, %c0_25] : memref<16x50xf32, #tpu.memory_space<vmem>>, vector<16x50xf32>
    tpu.vector_store %arg12[%c0_24, %c0_25], %63 {strides = array<i32>} : memref<16x50xf32, #tpu.memory_space<vmem>>, vector<16x50xf32>,
    %c0_26 = arith.constant 0 : index
    %c0_27 = arith.constant 0 : index
    %65 = vector.load %arg12[%c0_26, %c0_27] : memref<16x50xf32, #tpu.memory_space<vmem>>, vector<1x25xf32>
    %c0_28 = arith.constant 0 : index
    %c0_29 = arith.constant 0 : index
    %66 = vector.load %arg13[%c0_28, %c0_29] : memref<2x400xf32, #tpu.memory_space<vmem>>, vector<1x25xf32>
    tpu.vector_store %arg13[%c0_28, %c0_29], %65 {strides = array<i32>} : memref<2x400xf32, #tpu.memory_space<vmem>>, vector<1x25xf32>,
    %c1_30 = arith.constant 1 : index
    %c0_31 = arith.constant 0 : index
    %67 = vector.load %arg12[%c1_30, %c0_31] : memref<16x50xf32, #tpu.memory_space<vmem>>, vector<1x25xf32>
    %c0_32 = arith.constant 0 : index
    %c25 = arith.constant 25 : index
    %68 = vector.load %arg13[%c0_32, %c25] : memref<2x400xf32, #tpu.memory_space<vmem>>, vector<1x25xf32>
    tpu.vector_store %arg13[%c0_32, %c25], %67 {strides = array<i32>} : memref<2x400xf32, #tpu.memory_space<vmem>>, vector<1x25xf32>,
    %c2_33 = arith.constant 2 : index
    %c0_34 = arith.constant 0 : index
    %69 = vector.load %arg12[%c2_33, %c0_34] : memref<16x50xf32, #tpu.memory_space<vmem>>, vector<1x25xf32>
    %c0_35 = arith.constant 0 : index
    %c50 = arith.constant 50 : index
    %70 = vector.load %arg13[%c0_35, %c50] : memref<2x400xf32, #tpu.memory_space<vmem>>, vector<1x25xf32>
    tpu.vector_store %arg13[%c0_35, %c50], %69 {strides = array<i32>} : memref<2x400xf32, #tpu.memory_space<vmem>>, vector<1x25xf32>,
    %c3_36 = arith.constant 3 : index
    %c0_37 = arith.constant 0 : index
    %71 = vector.load %arg12[%c3_36, %c0_37] : memref<16x50xf32, #tpu.memory_space<vmem>>, vector<1x25xf32>
    %c0_38 = arith.constant 0 : index
    %c75 = arith.constant 75 : index
    %72 = vector.load %arg13[%c0_38, %c75] : memref<2x400xf32, #tpu.memory_space<vmem>>, vector<1x25xf32>
    tpu.vector_store %arg13[%c0_38, %c75], %71 {strides = array<i32>} : memref<2x400xf32, #tpu.memory_space<vmem>>, vector<1x25xf32>,
    %c4 = arith.constant 4 : index
    %c0_39 = arith.constant 0 : index
    %73 = vector.load %arg12[%c4, %c0_39] : memref<16x50xf32, #tpu.memory_space<vmem>>, vector<1x25xf32>
    %c0_40 = arith.constant 0 : index
    %c100 = arith.constant 100 : index
    %74 = vector.load %arg13[%c0_40, %c100] : memref<2x400xf32, #tpu.memory_space<vmem>>, vector<1x25xf32>
    tpu.vector_store %arg13[%c0_40, %c100], %73 {strides = array<i32>} : memref<2x400xf32, #tpu.memory_space<vmem>>, vector<1x25xf32>,
    %c5 = arith.constant 5 : index
    %c0_41 = arith.constant 0 : index
    %75 = vector.load %arg12[%c5, %c0_41] : memref<16x50xf32, #tpu.memory_space<vmem>>, vector<1x25xf32>
    %c0_42 = arith.constant 0 : index
    %c125 = arith.constant 125 : index
    %76 = vector.load %arg13[%c0_42, %c125] : memref<2x400xf32, #tpu.memory_space<vmem>>, vector<1x25xf32>
    tpu.vector_store %arg13[%c0_42, %c125], %75 {strides = array<i32>} : memref<2x400xf32, #tpu.memory_space<vmem>>, vector<1x25xf32>,
    %c6 = arith.constant 6 : index
    %c0_43 = arith.constant 0 : index
    %77 = vector.load %arg12[%c6, %c0_43] : memref<16x50xf32, #tpu.memory_space<vmem>>, vector<1x25xf32>
    %c0_44 = arith.constant 0 : index
    %c150 = arith.constant 150 : index
    %78 = vector.load %arg13[%c0_44, %c150] : memref<2x400xf32, #tpu.memory_space<vmem>>, vector<1x25xf32>
    tpu.vector_store %arg13[%c0_44, %c150], %77 {strides = array<i32>} : memref<2x400xf32, #tpu.memory_space<vmem>>, vector<1x25xf32>,
    %c7 = arith.constant 7 : index
    %c0_45 = arith.constant 0 : index
    %79 = vector.load %arg12[%c7, %c0_45] : memref<16x50xf32, #tpu.memory_space<vmem>>, vector<1x25xf32>
    %c0_46 = arith.constant 0 : index
    %c175 = arith.constant 175 : index
    %80 = vector.load %arg13[%c0_46, %c175] : memref<2x400xf32, #tpu.memory_space<vmem>>, vector<1x25xf32>
    tpu.vector_store %arg13[%c0_46, %c175], %79 {strides = array<i32>} : memref<2x400xf32, #tpu.memory_space<vmem>>, vector<1x25xf32>,
    %c8 = arith.constant 8 : index
    %c0_47 = arith.constant 0 : index
    %81 = vector.load %arg12[%c8, %c0_47] : memref<16x50xf32, #tpu.memory_space<vmem>>, vector<1x25xf32>
    %c0_48 = arith.constant 0 : index
    %c200 = arith.constant 200 : index
    %82 = vector.load %arg13[%c0_48, %c200] : memref<2x400xf32, #tpu.memory_space<vmem>>, vector<1x25xf32>
    tpu.vector_store %arg13[%c0_48, %c200], %81 {strides = array<i32>} : memref<2x400xf32, #tpu.memory_space<vmem>>, vector<1x25xf32>,
    %c9 = arith.constant 9 : index
    %c0_49 = arith.constant 0 : index
    %83 = vector.load %arg12[%c9, %c0_49] : memref<16x50xf32, #tpu.memory_space<vmem>>, vector<1x25xf32>
    %c0_50 = arith.constant 0 : index
    %c225 = arith.constant 225 : index
    %84 = vector.load %arg13[%c0_50, %c225] : memref<2x400xf32, #tpu.memory_space<vmem>>, vector<1x25xf32>
    tpu.vector_store %arg13[%c0_50, %c225], %83 {strides = array<i32>} : memref<2x400xf32, #tpu.memory_space<vmem>>, vector<1x25xf32>,
    %c10 = arith.constant 10 : index
    %c0_51 = arith.constant 0 : index
    %85 = vector.load %arg12[%c10, %c0_51] : memref<16x50xf32, #tpu.memory_space<vmem>>, vector<1x25xf32>
    %c0_52 = arith.constant 0 : index
    %c250 = arith.constant 250 : index
    %86 = vector.load %arg13[%c0_52, %c250] : memref<2x400xf32, #tpu.memory_space<vmem>>, vector<1x25xf32>
    tpu.vector_store %arg13[%c0_52, %c250], %85 {strides = array<i32>} : memref<2x400xf32, #tpu.memory_space<vmem>>, vector<1x25xf32>,
    %c11 = arith.constant 11 : index
    %c0_53 = arith.constant 0 : index
    %87 = vector.load %arg12[%c11, %c0_53] : memref<16x50xf32, #tpu.memory_space<vmem>>, vector<1x25xf32>
    %c0_54 = arith.constant 0 : index
    %c275 = arith.constant 275 : index
    %88 = vector.load %arg13[%c0_54, %c275] : memref<2x400xf32, #tpu.memory_space<vmem>>, vector<1x25xf32>
    tpu.vector_store %arg13[%c0_54, %c275], %87 {strides = array<i32>} : memref<2x400xf32, #tpu.memory_space<vmem>>, vector<1x25xf32>,
    %c12 = arith.constant 12 : index
    %c0_55 = arith.constant 0 : index
    %89 = vector.load %arg12[%c12, %c0_55] : memref<16x50xf32, #tpu.memory_space<vmem>>, vector<1x25xf32>
    %c0_56 = arith.constant 0 : index
    %c300 = arith.constant 300 : index
    %90 = vector.load %arg13[%c0_56, %c300] : memref<2x400xf32, #tpu.memory_space<vmem>>, vector<1x25xf32>
    tpu.vector_store %arg13[%c0_56, %c300], %89 {strides = array<i32>} : memref<2x400xf32, #tpu.memory_space<vmem>>, vector<1x25xf32>,
    %c13 = arith.constant 13 : index
    %c0_57 = arith.constant 0 : index
    %91 = vector.load %arg12[%c13, %c0_57] : memref<16x50xf32, #tpu.memory_space<vmem>>, vector<1x25xf32>
    %c0_58 = arith.constant 0 : index
    %c325 = arith.constant 325 : index
    %92 = vector.load %arg13[%c0_58, %c325] : memref<2x400xf32, #tpu.memory_space<vmem>>, vector<1x25xf32>
    tpu.vector_store %arg13[%c0_58, %c325], %91 {strides = array<i32>} : memref<2x400xf32, #tpu.memory_space<vmem>>, vector<1x25xf32>,
    %c14 = arith.constant 14 : index
    %c0_59 = arith.constant 0 : index
    %93 = vector.load %arg12[%c14, %c0_59] : memref<16x50xf32, #tpu.memory_space<vmem>>, vector<1x25xf32>
    %c0_60 = arith.constant 0 : index
    %c350 = arith.constant 350 : index
    %94 = vector.load %arg13[%c0_60, %c350] : memref<2x400xf32, #tpu.memory_space<vmem>>, vector<1x25xf32>
    tpu.vector_store %arg13[%c0_60, %c350], %93 {strides = array<i32>} : memref<2x400xf32, #tpu.memory_space<vmem>>, vector<1x25xf32>,
    %c15 = arith.constant 15 : index
    %c0_61 = arith.constant 0 : index
    %95 = vector.load %arg12[%c15, %c0_61] : memref<16x50xf32, #tpu.memory_space<vmem>>, vector<1x25xf32>
    %c0_62 = arith.constant 0 : index
    %c375 = arith.constant 375 : index
    %96 = vector.load %arg13[%c0_62, %c375] : memref<2x400xf32, #tpu.memory_space<vmem>>, vector<1x25xf32>
    tpu.vector_store %arg13[%c0_62, %c375], %95 {strides = array<i32>} : memref<2x400xf32, #tpu.memory_space<vmem>>, vector<1x25xf32>,
    %c0_63 = arith.constant 0 : index
    %c25_64 = arith.constant 25 : index
    %97 = vector.load %arg12[%c0_63, %c25_64] : memref<16x50xf32, #tpu.memory_space<vmem>>, vector<1x25xf32>
    %c1_65 = arith.constant 1 : index
    %c0_66 = arith.constant 0 : index
    %98 = vector.load %arg13[%c1_65, %c0_66] : memref<2x400xf32, #tpu.memory_space<vmem>>, vector<1x25xf32>
    tpu.vector_store %arg13[%c1_65, %c0_66], %97 {strides = array<i32>} : memref<2x400xf32, #tpu.memory_space<vmem>>, vector<1x25xf32>,
    %c1_67 = arith.constant 1 : index
    %c25_68 = arith.constant 25 : index
    %99 = vector.load %arg12[%c1_67, %c25_68] : memref<16x50xf32, #tpu.memory_space<vmem>>, vector<1x25xf32>
    %c1_69 = arith.constant 1 : index
    %c25_70 = arith.constant 25 : index
    %100 = vector.load %arg13[%c1_69, %c25_70] : memref<2x400xf32, #tpu.memory_space<vmem>>, vector<1x25xf32>
    tpu.vector_store %arg13[%c1_69, %c25_70], %99 {strides = array<i32>} : memref<2x400xf32, #tpu.memory_space<vmem>>, vector<1x25xf32>,
    %c2_71 = arith.constant 2 : index
    %c25_72 = arith.constant 25 : index
    %101 = vector.load %arg12[%c2_71, %c25_72] : memref<16x50xf32, #tpu.memory_space<vmem>>, vector<1x25xf32>
    %c1_73 = arith.constant 1 : index
    %c50_74 = arith.constant 50 : index
    %102 = vector.load %arg13[%c1_73, %c50_74] : memref<2x400xf32, #tpu.memory_space<vmem>>, vector<1x25xf32>
    tpu.vector_store %arg13[%c1_73, %c50_74], %101 {strides = array<i32>} : memref<2x400xf32, #tpu.memory_space<vmem>>, vector<1x25xf32>,
    %c3_75 = arith.constant 3 : index
    %c25_76 = arith.constant 25 : index
    %103 = vector.load %arg12[%c3_75, %c25_76] : memref<16x50xf32, #tpu.memory_space<vmem>>, vector<1x25xf32>
    %c1_77 = arith.constant 1 : index
    %c75_78 = arith.constant 75 : index
    %104 = vector.load %arg13[%c1_77, %c75_78] : memref<2x400xf32, #tpu.memory_space<vmem>>, vector<1x25xf32>
    tpu.vector_store %arg13[%c1_77, %c75_78], %103 {strides = array<i32>} : memref<2x400xf32, #tpu.memory_space<vmem>>, vector<1x25xf32>,
    %c4_79 = arith.constant 4 : index
    %c25_80 = arith.constant 25 : index
    %105 = vector.load %arg12[%c4_79, %c25_80] : memref<16x50xf32, #tpu.memory_space<vmem>>, vector<1x25xf32>
    %c1_81 = arith.constant 1 : index
    %c100_82 = arith.constant 100 : index
    %106 = vector.load %arg13[%c1_81, %c100_82] : memref<2x400xf32, #tpu.memory_space<vmem>>, vector<1x25xf32>
    tpu.vector_store %arg13[%c1_81, %c100_82], %105 {strides = array<i32>} : memref<2x400xf32, #tpu.memory_space<vmem>>, vector<1x25xf32>,
    %c5_83 = arith.constant 5 : index
    %c25_84 = arith.constant 25 : index
    %107 = vector.load %arg12[%c5_83, %c25_84] : memref<16x50xf32, #tpu.memory_space<vmem>>, vector<1x25xf32>
    %c1_85 = arith.constant 1 : index
    %c125_86 = arith.constant 125 : index
    %108 = vector.load %arg13[%c1_85, %c125_86] : memref<2x400xf32, #tpu.memory_space<vmem>>, vector<1x25xf32>
    tpu.vector_store %arg13[%c1_85, %c125_86], %107 {strides = array<i32>} : memref<2x400xf32, #tpu.memory_space<vmem>>, vector<1x25xf32>,
    %c6_87 = arith.constant 6 : index
    %c25_88 = arith.constant 25 : index
    %109 = vector.load %arg12[%c6_87, %c25_88] : memref<16x50xf32, #tpu.memory_space<vmem>>, vector<1x25xf32>
    %c1_89 = arith.constant 1 : index
    %c150_90 = arith.constant 150 : index
    %110 = vector.load %arg13[%c1_89, %c150_90] : memref<2x400xf32, #tpu.memory_space<vmem>>, vector<1x25xf32>
    tpu.vector_store %arg13[%c1_89, %c150_90], %109 {strides = array<i32>} : memref<2x400xf32, #tpu.memory_space<vmem>>, vector<1x25xf32>,
    %c7_91 = arith.constant 7 : index
    %c25_92 = arith.constant 25 : index
    %111 = vector.load %arg12[%c7_91, %c25_92] : memref<16x50xf32, #tpu.memory_space<vmem>>, vector<1x25xf32>
    %c1_93 = arith.constant 1 : index
    %c175_94 = arith.constant 175 : index
    %112 = vector.load %arg13[%c1_93, %c175_94] : memref<2x400xf32, #tpu.memory_space<vmem>>, vector<1x25xf32>
    tpu.vector_store %arg13[%c1_93, %c175_94], %111 {strides = array<i32>} : memref<2x400xf32, #tpu.memory_space<vmem>>, vector<1x25xf32>,
    %c8_95 = arith.constant 8 : index
    %c25_96 = arith.constant 25 : index
    %113 = vector.load %arg12[%c8_95, %c25_96] : memref<16x50xf32, #tpu.memory_space<vmem>>, vector<1x25xf32>
    %c1_97 = arith.constant 1 : index
    %c200_98 = arith.constant 200 : index
    %114 = vector.load %arg13[%c1_97, %c200_98] : memref<2x400xf32, #tpu.memory_space<vmem>>, vector<1x25xf32>
    tpu.vector_store %arg13[%c1_97, %c200_98], %113 {strides = array<i32>} : memref<2x400xf32, #tpu.memory_space<vmem>>, vector<1x25xf32>,
    %c9_99 = arith.constant 9 : index
    %c25_100 = arith.constant 25 : index
    %115 = vector.load %arg12[%c9_99, %c25_100] : memref<16x50xf32, #tpu.memory_space<vmem>>, vector<1x25xf32>
    %c1_101 = arith.constant 1 : index
    %c225_102 = arith.constant 225 : index
    %116 = vector.load %arg13[%c1_101, %c225_102] : memref<2x400xf32, #tpu.memory_space<vmem>>, vector<1x25xf32>
    tpu.vector_store %arg13[%c1_101, %c225_102], %115 {strides = array<i32>} : memref<2x400xf32, #tpu.memory_space<vmem>>, vector<1x25xf32>,
    %c10_103 = arith.constant 10 : index
    %c25_104 = arith.constant 25 : index
    %117 = vector.load %arg12[%c10_103, %c25_104] : memref<16x50xf32, #tpu.memory_space<vmem>>, vector<1x25xf32>
    %c1_105 = arith.constant 1 : index
    %c250_106 = arith.constant 250 : index
    %118 = vector.load %arg13[%c1_105, %c250_106] : memref<2x400xf32, #tpu.memory_space<vmem>>, vector<1x25xf32>
    tpu.vector_store %arg13[%c1_105, %c250_106], %117 {strides = array<i32>} : memref<2x400xf32, #tpu.memory_space<vmem>>, vector<1x25xf32>,
    %c11_107 = arith.constant 11 : index
    %c25_108 = arith.constant 25 : index
    %119 = vector.load %arg12[%c11_107, %c25_108] : memref<16x50xf32, #tpu.memory_space<vmem>>, vector<1x25xf32>
    %c1_109 = arith.constant 1 : index
    %c275_110 = arith.constant 275 : index
    %120 = vector.load %arg13[%c1_109, %c275_110] : memref<2x400xf32, #tpu.memory_space<vmem>>, vector<1x25xf32>
    tpu.vector_store %arg13[%c1_109, %c275_110], %119 {strides = array<i32>} : memref<2x400xf32, #tpu.memory_space<vmem>>, vector<1x25xf32>,
    %c12_111 = arith.constant 12 : index
    %c25_112 = arith.constant 25 : index
    %121 = vector.load %arg12[%c12_111, %c25_112] : memref<16x50xf32, #tpu.memory_space<vmem>>, vector<1x25xf32>
    %c1_113 = arith.constant 1 : index
    %c300_114 = arith.constant 300 : index
    %122 = vector.load %arg13[%c1_113, %c300_114] : memref<2x400xf32, #tpu.memory_space<vmem>>, vector<1x25xf32>
    tpu.vector_store %arg13[%c1_113, %c300_114], %121 {strides = array<i32>} : memref<2x400xf32, #tpu.memory_space<vmem>>, vector<1x25xf32>,
    %c13_115 = arith.constant 13 : index
    %c25_116 = arith.constant 25 : index
    %123 = vector.load %arg12[%c13_115, %c25_116] : memref<16x50xf32, #tpu.memory_space<vmem>>, vector<1x25xf32>
    %c1_117 = arith.constant 1 : index
    %c325_118 = arith.constant 325 : index
    %124 = vector.load %arg13[%c1_117, %c325_118] : memref<2x400xf32, #tpu.memory_space<vmem>>, vector<1x25xf32>
    tpu.vector_store %arg13[%c1_117, %c325_118], %123 {strides = array<i32>} : memref<2x400xf32, #tpu.memory_space<vmem>>, vector<1x25xf32>,
    %c14_119 = arith.constant 14 : index
    %c25_120 = arith.constant 25 : index
    %125 = vector.load %arg12[%c14_119, %c25_120] : memref<16x50xf32, #tpu.memory_space<vmem>>, vector<1x25xf32>
    %c1_121 = arith.constant 1 : index
    %c350_122 = arith.constant 350 : index
    %126 = vector.load %arg13[%c1_121, %c350_122] : memref<2x400xf32, #tpu.memory_space<vmem>>, vector<1x25xf32>
    tpu.vector_store %arg13[%c1_121, %c350_122], %125 {strides = array<i32>} : memref<2x400xf32, #tpu.memory_space<vmem>>, vector<1x25xf32>,
    %c15_123 = arith.constant 15 : index
    %c25_124 = arith.constant 25 : index
    %127 = vector.load %arg12[%c15_123, %c25_124] : memref<16x50xf32, #tpu.memory_space<vmem>>, vector<1x25xf32>
    %c1_125 = arith.constant 1 : index
    %c375_126 = arith.constant 375 : index
    %128 = vector.load %arg13[%c1_125, %c375_126] : memref<2x400xf32, #tpu.memory_space<vmem>>, vector<1x25xf32>
    tpu.vector_store %arg13[%c1_125, %c375_126], %127 {strides = array<i32>} : memref<2x400xf32, #tpu.memory_space<vmem>>, vector<1x25xf32>,
    %c0_127 = arith.constant 0 : index
    %c0_128 = arith.constant 0 : index
    %129 = vector.load %arg13[%c0_127, %c0_128] : memref<2x400xf32, #tpu.memory_space<vmem>>, vector<2x400xf32>
    %c0_129 = arith.constant 0 : index
    %c0_130 = arith.constant 0 : index
    %130 = vector.load %arg5[%c0_129, %c0_130] : memref<400x120xf32, #tpu.memory_space<vmem>>, vector<400x120xf32>
    %cst_131 = arith.constant dense<0.000000e+00> : vector<2x120xf32>
    %131 = tpu.matmul %129, %130, %cst_131 {dimension_numbers = #tpu.dot_dimension_numbers<[1], [0], [0], [1], [0, 0, 1, 1], [], []>} : vector<2x400xf32>, vector<400x120xf32>, vector<2x120xf32> -> vector<2x120xf32>
    %c0_132 = arith.constant 0 : index
    %c0_133 = arith.constant 0 : index
    %132 = vector.load %arg6[%c0_132, %c0_133] : memref<1x120xf32, #tpu.memory_space<vmem>>, vector<1x120xf32>
    %133 = vector.broadcast %132 : vector<1x120xf32> to vector<2x120xf32>
    %134 = arith.addf %131, %133 : vector<2x120xf32>
    %cst_134 = arith.constant 0.000000e+00 : f32
    %135 = vector.broadcast %cst_134 : f32 to vector<2x120xf32>
    %136 = arith.maximumf %134, %135 : vector<2x120xf32>
    %c0_135 = arith.constant 0 : index
    %c0_136 = arith.constant 0 : index
    %137 = vector.load %arg7[%c0_135, %c0_136] : memref<120x84xf32, #tpu.memory_space<vmem>>, vector<120x84xf32>
    %cst_137 = arith.constant dense<0.000000e+00> : vector<2x84xf32>
    %138 = tpu.matmul %136, %137, %cst_137 {dimension_numbers = #tpu.dot_dimension_numbers<[1], [0], [0], [1], [0, 0, 1, 1], [], []>} : vector<2x120xf32>, vector<120x84xf32>, vector<2x84xf32> -> vector<2x84xf32>
    %c0_138 = arith.constant 0 : index
    %c0_139 = arith.constant 0 : index
    %139 = vector.load %arg8[%c0_138, %c0_139] : memref<1x84xf32, #tpu.memory_space<vmem>>, vector<1x84xf32>
    %140 = vector.broadcast %139 : vector<1x84xf32> to vector<2x84xf32>
    %141 = arith.addf %138, %140 : vector<2x84xf32>
    %cst_140 = arith.constant 0.000000e+00 : f32
    %142 = vector.broadcast %cst_140 : f32 to vector<2x84xf32>
    %143 = arith.maximumf %141, %142 : vector<2x84xf32>
    %c0_141 = arith.constant 0 : index
    %c0_142 = arith.constant 0 : index
    %144 = vector.load %arg9[%c0_141, %c0_142] : memref<84x10xf32, #tpu.memory_space<vmem>>, vector<84x10xf32>
    %cst_143 = arith.constant dense<0.000000e+00> : vector<2x10xf32>
    %145 = tpu.matmul %143, %144, %cst_143 {dimension_numbers = #tpu.dot_dimension_numbers<[1], [0], [0], [1], [0, 0, 1, 1], [], []>} : vector<2x84xf32>, vector<84x10xf32>, vector<2x10xf32> -> vector<2x10xf32>
    %c0_144 = arith.constant 0 : index
    %c0_145 = arith.constant 0 : index
    %146 = vector.load %arg10[%c0_144, %c0_145] : memref<1x10xf32, #tpu.memory_space<vmem>>, vector<1x10xf32>
    %147 = vector.broadcast %146 : vector<1x10xf32> to vector<2x10xf32>
    %148 = arith.addf %145, %147 : vector<2x10xf32>
    %c0_146 = arith.constant 0 : index
    %c0_147 = arith.constant 0 : index
    %149 = vector.load %arg11[%c0_146, %c0_147] : memref<2x10xf32, #tpu.memory_space<vmem>>, vector<2x10xf32>
    tpu.vector_store %arg11[%c0_146, %c0_147], %148 {strides = array<i32>} : memref<2x10xf32, #tpu.memory_space<vmem>>, vector<2x10xf32>,
    return
  }
  func.func @transform_0(%arg0: i32) -> (i32, i32, i32) {
    %c0_i32 = arith.constant 0 : i32
    %c0_i32_0 = arith.constant 0 : i32
    %c0_i32_1 = arith.constant 0 : i32
    %c0_i32_2 = arith.constant 0 : i32
    return %c0_i32, %c0_i32_0, %c0_i32_1 : i32, i32, i32
  }
  func.func @transform_1(%arg0: i32) -> (i32, i32) {
    %c0_i32 = arith.constant 0 : i32
    %c0_i32_0 = arith.constant 0 : i32
    %c0_i32_1 = arith.constant 0 : i32
    return %c0_i32, %c0_i32_0 : i32, i32
  }
  func.func @transform_2(%arg0: i32) -> (i32, i32) {
    %c0_i32 = arith.constant 0 : i32
    %c0_i32_0 = arith.constant 0 : i32
    %c0_i32_1 = arith.constant 0 : i32
    return %c0_i32, %c0_i32_0 : i32, i32
  }
  func.func @transform_3(%arg0: i32) -> (i32, i32) {
    %c0_i32 = arith.constant 0 : i32
    %c0_i32_0 = arith.constant 0 : i32
    %c0_i32_1 = arith.constant 0 : i32
    return %c0_i32, %c0_i32_0 : i32, i32
  }
  func.func @transform_4(%arg0: i32) -> (i32, i32) {
    %c0_i32 = arith.constant 0 : i32
    %c0_i32_0 = arith.constant 0 : i32
    %c0_i32_1 = arith.constant 0 : i32
    return %c0_i32, %c0_i32_0 : i32, i32
  }
  func.func @transform_5(%arg0: i32) -> (i32, i32) {
    %c0_i32 = arith.constant 0 : i32
    %c0_i32_0 = arith.constant 0 : i32
    %c0_i32_1 = arith.constant 0 : i32
    return %c0_i32, %c0_i32_0 : i32, i32
  }
  func.func @transform_6(%arg0: i32) -> (i32, i32) {
    %c0_i32 = arith.constant 0 : i32
    %c0_i32_0 = arith.constant 0 : i32
    %c0_i32_1 = arith.constant 0 : i32
    return %c0_i32, %c0_i32_0 : i32, i32
  }
  func.func @transform_7(%arg0: i32) -> (i32, i32) {
    %c0_i32 = arith.constant 0 : i32
    %c0_i32_0 = arith.constant 0 : i32
    %c0_i32_1 = arith.constant 0 : i32
    return %c0_i32, %c0_i32_0 : i32, i32
  }
  func.func @transform_8(%arg0: i32) -> (i32, i32) {
    %c0_i32 = arith.constant 0 : i32
    %c0_i32_0 = arith.constant 0 : i32
    %c0_i32_1 = arith.constant 0 : i32
    return %c0_i32, %c0_i32_0 : i32, i32
  }
  func.func @transform_9(%arg0: i32) -> (i32, i32) {
    %c0_i32 = arith.constant 0 : i32
    %c0_i32_0 = arith.constant 0 : i32
    %c0_i32_1 = arith.constant 0 : i32
    return %c0_i32, %c0_i32_0 : i32, i32
  }
  func.func @transform_10(%arg0: i32) -> (i32, i32) {
    %c0_i32 = arith.constant 0 : i32
    %c0_i32_0 = arith.constant 0 : i32
    %c0_i32_1 = arith.constant 0 : i32
    return %c0_i32, %c0_i32_0 : i32, i32
  }
}

</mosaic_0001>

<llo_original>
// kernel: lenet_forward.2
$region0: #{lenet_forward.2}
  #allocation0 [shape = 'u32[]', space=smem, size = 0x4, offset = 0x4, fixed_abs, tag = 'smem constant byte address 0x4 - core index']
  #allocation1 [shape = 'u32[144,128]{1,0:T(1,128)}', space=vmem, size = 0x12000, scoped, tag = 'internal scratch']
  %s0 = inlined_call_operand.vmem [shape: f32[3,2048], index: 0, kind: input, shape index: {}]
  %s1 = inlined_call_operand.vmem [shape: f32[4,128,392], index: 1, kind: input, shape index: {}]
  %s2 = inlined_call_operand.vmem [shape: f32[6,128], index: 2, kind: input, shape index: {}]
  %s3 = inlined_call_operand.vmem [shape: f32[3,128], index: 3, kind: input, shape index: {}]
  %s4 = inlined_call_operand.vmem [shape: f32[3,1], index: 4, kind: input, shape index: {}]
  %s5 = inlined_call_operand.vmem [shape: f32[3,1], index: 5, kind: input, shape index: {}]
  %s6 = inlined_call_operand.vmem [shape: f32[6,1], index: 6, kind: input, shape index: {}]
  %s7 = inlined_call_operand.vmem [shape: f32[6,1], index: 7, kind: input, shape index: {}]
  %s8 = inlined_call_operand.vmem [shape: f32[6,392], index: 8, kind: output, shape index: {}]
  %s9 = sld [smem:[#allocation0]]
  $region42: #{lenet_forward.2} parent=0
    _
  %s11 = ssub.s32 1, %s9
  %s12 = scalar_select 0, %s11, %s9
  // Predicated region
  $region2: #{lenet_forward.2} parent=0 // pred_check
    _
  $region3: #{lenet_forward.2} parent=0 // pred_check_branch
    %14 = sbr.rel (0) target = $region5
  $region4: #{lenet_forward.2} parent=0 // pred_region
    _
  $region5: #{lenet_forward.2} parent=0 // pred_fallthru
    _
  // Predicated region
  $region6: #{lenet_forward.2} parent=0 // pred_check
    _
  $region7: #{lenet_forward.2} parent=0 // pred_check_branch
    %16 = sbr.rel (0) target = $region9
  $region8: #{lenet_forward.2} parent=0 // pred_region
    _
  $region9: #{lenet_forward.2} parent=0 // pred_fallthru
    _
  // Predicated region
  $region10: #{lenet_forward.2} parent=0 // pred_check
    _
  $region11: #{lenet_forward.2} parent=0 // pred_check_branch
    %18 = sbr.rel (0) target = $region13
  $region12: #{lenet_forward.2} parent=0 // pred_region
    _
  $region13: #{lenet_forward.2} parent=0 // pred_fallthru
    _
  // Predicated region
  $region14: #{lenet_forward.2} parent=0 // pred_check
    _
  $region15: #{lenet_forward.2} parent=0 // pred_check_branch
    %20 = sbr.rel (0) target = $region17
  $region16: #{lenet_forward.2} parent=0 // pred_region
    _
  $region17: #{lenet_forward.2} parent=0 // pred_fallthru
    _
  // Predicated region
  $region18: #{lenet_forward.2} parent=0 // pred_check
    _
  $region19: #{lenet_forward.2} parent=0 // pred_check_branch
    %22 = sbr.rel (0) target = $region21
  $region20: #{lenet_forward.2} parent=0 // pred_region
    _
  $region21: #{lenet_forward.2} parent=0 // pred_fallthru
    _
  // Predicated region
  $region22: #{lenet_forward.2} parent=0 // pred_check
    _
  $region23: #{lenet_forward.2} parent=0 // pred_check_branch
    %24 = sbr.rel (0) target = $region25
  $region24: #{lenet_forward.2} parent=0 // pred_region
    _
  $region25: #{lenet_forward.2} parent=0 // pred_fallthru
    _
  // Predicated region
  $region26: #{lenet_forward.2} parent=0 // pred_check
    _
  $region27: #{lenet_forward.2} parent=0 // pred_check_branch
    %26 = sbr.rel (0) target = $region29
  $region28: #{lenet_forward.2} parent=0 // pred_region
    _
  $region29: #{lenet_forward.2} parent=0 // pred_fallthru
    _
  // Predicated region
  $region30: #{lenet_forward.2} parent=0 // pred_check
    _
  $region31: #{lenet_forward.2} parent=0 // pred_check_branch
    %28 = sbr.rel (0) target = $region33
  $region32: #{lenet_forward.2} parent=0 // pred_region
    _
  $region33: #{lenet_forward.2} parent=0 // pred_fallthru
    _
  %v29 = vld [vmem:[%s0] sm:$0x77]
  %v30 = vld [vmem:[%s0 + $0x8] sm:$0x77]
  %v31 = vld [vmem:[%s0 + $0x10] sm:$0x77]
  %v32 = vld [vmem:[%s0 + $0x18] sm:$0x77]
  %v33 = vld [vmem:[%s0 + $0x20] sm:$0x77]
  %v34 = vld [vmem:[%s0 + $0x28] sm:$0x77]
  %v35 = vld [vmem:[%s0 + $0x30] sm:$0x77]
  %v36 = vld [vmem:[%s0 + $0x38] sm:$0x77]
  %v45 = vcombine.high %v29, %v29
  %v46 = vcombine.high %v30, %v30
  %v47 = vcombine.high %v31, %v31
  %v48 = vcombine.high %v32, %v32
  %v49 = vcombine.high %v33, %v33
  %v50 = vcombine.high %v34, %v34
  %v51 = vcombine.high %v35, %v35
  %v52 = vcombine.high %v36, %v36
  %vm61 = vcmask 1042432
  %v62 = vsel %vm61, %v29, 0.0
  %v63 = vsel %vm61, %v45, 0.0
  %v64 = vadd.f32 %v62, %v63
  %v65 = vsel %vm61, %v30, 0.0
  %v66 = vadd.f32 %v64, %v65
  %v67 = vsel %vm61, %v46, 0.0
  %v68 = vadd.f32 %v66, %v67
  %v69 = vsel %vm61, %v31, 0.0
  %v70 = vadd.f32 %v68, %v69
  %v71 = vsel %vm61, %v47, 0.0
  %v72 = vadd.f32 %v70, %v71
  %v73 = vsel %vm61, %v32, 0.0
  %v74 = vadd.f32 %v72, %v73
  %v75 = vsel %vm61, %v48, 0.0
  %v76 = vadd.f32 %v74, %v75
  %v77 = vsel %vm61, %v33, 0.0
  %v78 = vadd.f32 %v76, %v77
  %v79 = vsel %vm61, %v49, 0.0
  %v80 = vadd.f32 %v78, %v79
  %v81 = vsel %vm61, %v34, 0.0
  %v82 = vadd.f32 %v80, %v81
  %v83 = vsel %vm61, %v50, 0.0
  %v84 = vadd.f32 %v82, %v83
  %v85 = vsel %vm61, %v35, 0.0
  %v86 = vadd.f32 %v84, %v85
  %v87 = vsel %vm61, %v51, 0.0
  %v88 = vadd.f32 %v86, %v87
  %v89 = vsel %vm61, %v36, 0.0
  %v90 = vadd.f32 %v88, %v89
  %v91 = vsel %vm61, %v52, 0.0
  %v92 = vadd.f32 %v90, %v91
  %93 = vadd.xlane.f32.xlu0 %v92
  %v94 = vpop.xlane.xlu0 %93
  %v95 = vmul.f32 %v94, 0.00048828125
  %v96 = vmul.f32 %v29, %v29
  %v97 = vmul.f32 %v30, %v30
  %v98 = vmul.f32 %v31, %v31
  %v99 = vmul.f32 %v32, %v32
  %v100 = vmul.f32 %v33, %v33
  %v101 = vmul.f32 %v34, %v34
  %v102 = vmul.f32 %v35, %v35
  %v103 = vmul.f32 %v36, %v36
  %v112 = vcombine.high %v96, %v96
  %v113 = vcombine.high %v97, %v97
  %v114 = vcombine.high %v98, %v98
  %v115 = vcombine.high %v99, %v99
  %v116 = vcombine.high %v100, %v100
  %v117 = vcombine.high %v101, %v101
  %v118 = vcombine.high %v102, %v102
  %v119 = vcombine.high %v103, %v103
  %v128 = vsel %vm61, %v96, 0.0
  %v129 = vsel %vm61, %v112, 0.0
  %v130 = vadd.f32 %v128, %v129
  %v131 = vsel %vm61, %v97, 0.0
  %v132 = vadd.f32 %v130, %v131
  %v133 = vsel %vm61, %v113, 0.0
  %v134 = vadd.f32 %v132, %v133
  %v135 = vsel %vm61, %v98, 0.0
  %v136 = vadd.f32 %v134, %v135
  %v137 = vsel %vm61, %v114, 0.0
  %v138 = vadd.f32 %v136, %v137
  %v139 = vsel %vm61, %v99, 0.0
  %v140 = vadd.f32 %v138, %v139
  %v141 = vsel %vm61, %v115, 0.0
  %v142 = vadd.f32 %v140, %v141
  %v143 = vsel %vm61, %v100, 0.0
  %v144 = vadd.f32 %v142, %v143
  %v145 = vsel %vm61, %v116, 0.0
  %v146 = vadd.f32 %v144, %v145
  %v147 = vsel %vm61, %v101, 0.0
  %v148 = vadd.f32 %v146, %v147
  %v149 = vsel %vm61, %v117, 0.0
  %v150 = vadd.f32 %v148, %v149
  %v151 = vsel %vm61, %v102, 0.0
  %v152 = vadd.f32 %v150, %v151
  %v153 = vsel %vm61, %v118, 0.0
  %v154 = vadd.f32 %v152, %v153
  %v155 = vsel %vm61, %v103, 0.0
  %v156 = vadd.f32 %v154, %v155
  %v157 = vsel %vm61, %v119, 0.0
  %v158 = vadd.f32 %v156, %v157
  %159 = vadd.xlane.f32.xlu0 %v158
  %v160 = vpop.xlane.xlu0 %159
  %v161 = vmul.f32 %v160, 0.00048828125
  %v162 = vmul.f32 %v95, %v95
  %v163 = vsub.f32 %v161, %v162
  %v164 = vmax.f32 %v163, 0.0
  %v165 = vld [vmem:[%s4] sm:$0x7]
  %v166 = vadd.f32 %v164, 1e-05
  %v167 = vrsqrt.pop %v166
  %v168 = vmul.f32 %v165, %v167
  %v169 = vld [vmem:[%s5] sm:$0x7]
  %v170 = vmul.f32 %v95, %v168
  %v171 = vsub.f32 %v169, %v170
  %v172 = vld [vmem:[%s3] sm:$0x7]
  %174 = vset.pattern.permute.xlu0 0
  %175 = vperm.xlu0 %174, %v168
  %v176 = vpop.permute.xlu0 %175
  %v178 = vmul.f32 %v176, %v172
  %v179 = vsel %vm61, %v178, 0.0
  %v180 = vrot.slane %v179, 4
  %v181 = vadd.f32 %v179, %v180
  %v182 = vrot.slane %v181, 2
  %v183 = vadd.f32 %v181, %v182
  %v184 = vrot.slane %v183, 1
  %v185 = vadd.f32 %v183, %v184
  %187 = vset.pattern.permute.xlu0 0
  %188 = vperm.xlu0 %187, %v171
  %v189 = vpop.permute.xlu0 %188
  %v191 = vmul.f32 %v189, %v172
  %v192 = vsel %vm61, %v191, 0.0
  %v193 = vrot.slane %v192, 4
  %v194 = vadd.f32 %v192, %v193
  %v195 = vrot.slane %v194, 2
  %v196 = vadd.f32 %v194, %v195
  %v197 = vrot.slane %v196, 1
  %v198 = vadd.f32 %v196, %v197
  %v199 = vld [vmem:[%s2] sm:$0x3f]
  %v200 = vmul.f32 %v199, %v185
  %v201 = vmul.f32 %v199, %v198
  %vm202 = vcmask 1045504
  %v203 = vsel %vm202, %v201, 0.0
  %204 = vadd.xlane.f32.xlu0 %v203
  %v205 = vpop.xlane.xlu0 %204
  %v206 = vld [vmem:[%s1] sm:$0xff]
  %v207 = vld [vmem:[%s1 + $0x8] sm:$0xff]
  %v208 = vld [vmem:[%s1 + $0x10] sm:$0xff]
  %v209 = vld [vmem:[%s1 + $0x18] sm:$0xff]
  %v210 = vld [vmem:[%s1 + $0x20] sm:$0xff]
  %v211 = vld [vmem:[%s1 + $0x28] sm:$0xff]
  %v212 = vld [vmem:[%s1 + $0x30] sm:$0xff]
  %v213 = vld [vmem:[%s1 + $0x38] sm:$0xff]
  %v214 = vld [vmem:[%s1 + $0x40] sm:$0xff]
  %v215 = vld [vmem:[%s1 + $0x48] sm:$0xff]
  %v216 = vld [vmem:[%s1 + $0x50] sm:$0xff]
  %v217 = vld [vmem:[%s1 + $0x58] sm:$0xff]
  %v218 = vld [vmem:[%s1 + $0x60] sm:$0xff]
  %v219 = vld [vmem:[%s1 + $0x68] sm:$0xff]
  %v220 = vld [vmem:[%s1 + $0x70] sm:$0xff]
  %v221 = vld [vmem:[%s1 + $0x78] sm:$0xff]
  %v222 = vld [vmem:[%s1 + $0x80] sm:$0xff]
  %v223 = vld [vmem:[%s1 + $0x88] sm:$0xff]
  %v224 = vld [vmem:[%s1 + $0x90] sm:$0xff]
  %v225 = vld [vmem:[%s1 + $0x98] sm:$0xff]
  %v226 = vld [vmem:[%s1 + $0xa0] sm:$0xff]
  %v227 = vld [vmem:[%s1 + $0xa8] sm:$0xff]
  %v228 = vld [vmem:[%s1 + $0xb0] sm:$0xff]
  %v229 = vld [vmem:[%s1 + $0xb8] sm:$0xff]
  %v230 = vld [vmem:[%s1 + $0xc0] sm:$0xff]
  %v231 = vld [vmem:[%s1 + $0xc8] sm:$0xff]
  %v232 = vld [vmem:[%s1 + $0xd0] sm:$0xff]
  %v233 = vld [vmem:[%s1 + $0xd8] sm:$0xff]
  %v234 = vld [vmem:[%s1 + $0xe0] sm:$0xff]
  %v235 = vld [vmem:[%s1 + $0xe8] sm:$0xff]
  %v236 = vld [vmem:[%s1 + $0xf0] sm:$0xff]
  %v237 = vld [vmem:[%s1 + $0xf8] sm:$0xff]
  %v238 = vld [vmem:[%s1 + $0x100] sm:$0xff]
  %v239 = vld [vmem:[%s1 + $0x108] sm:$0xff]
  %v240 = vld [vmem:[%s1 + $0x110] sm:$0xff]
  %v241 = vld [vmem:[%s1 + $0x118] sm:$0xff]
  %v242 = vld [vmem:[%s1 + $0x120] sm:$0xff]
  %v243 = vld [vmem:[%s1 + $0x128] sm:$0xff]
  %v244 = vld [vmem:[%s1 + $0x130] sm:$0xff]
  %v245 = vld [vmem:[%s1 + $0x138] sm:$0xff]
  %v246 = vld [vmem:[%s1 + $0x140] sm:$0xff]
  %v247 = vld [vmem:[%s1 + $0x148] sm:$0xff]
  %v248 = vld [vmem:[%s1 + $0x150] sm:$0xff]
  %v249 = vld [vmem:[%s1 + $0x158] sm:$0xff]
  %v250 = vld [vmem:[%s1 + $0x160] sm:$0xff]
  %v251 = vld [vmem:[%s1 + $0x168] sm:$0xff]
  %v252 = vld [vmem:[%s1 + $0x170] sm:$0xff]
  %v253 = vld [vmem:[%s1 + $0x178] sm:$0xff]
  %v254 = vld [vmem:[%s1 + $0x180] sm:$0xff]
  %v255 = vld [vmem:[%s1 + $0x188] sm:$0xff]
  %v256 = vld [vmem:[%s1 + $0x190] sm:$0xff]
  %v257 = vld [vmem:[%s1 + $0x198] sm:$0xff]
  %v258 = vld [vmem:[%s1 + $0x1a0] sm:$0xff]
  %v259 = vld [vmem:[%s1 + $0x1a8] sm:$0xff]
  %v260 = vld [vmem:[%s1 + $0x1b0] sm:$0xff]
  %v261 = vld [vmem:[%s1 + $0x1b8] sm:$0xff]
  %v262 = vld [vmem:[%s1 + $0x1c0] sm:$0xff]
  %v263 = vld [vmem:[%s1 + $0x1c8] sm:$0xff]
  %v264 = vld [vmem:[%s1 + $0x1d0] sm:$0xff]
  %v265 = vld [vmem:[%s1 + $0x1d8] sm:$0xff]
  %v266 = vld [vmem:[%s1 + $0x1e0] sm:$0xff]
  %v267 = vld [vmem:[%s1 + $0x1e8] sm:$0xff]
  %v268 = vld [vmem:[%s1 + $0x1f0] sm:$0xff]
  %v269 = vld [vmem:[%s1 + $0x1f8] sm:$0xff]
  %270 = vmatprep.subr.mxu0 %v207
  %271 = vmatpush1.msra.mxu0 %v206
  %272 = vmatprep.subr.mxu0 %v211
  %273 = vmatpush1.msra.mxu0 %v210
  %274 = vmatprep.subr.mxu0 %v215
  %275 = vmatpush1.msra.mxu0 %v214
  %276 = vmatprep.subr.mxu0 %v219
  %277 = vmatpush1.msra.mxu0 %v218
  %278 = vmatprep.subr.mxu0 %v223
  %279 = vmatpush1.msra.mxu0 %v222
  %280 = vmatprep.subr.mxu0 %v227
  %281 = vmatpush1.msra.mxu0 %v226
  %282 = vmatprep.subr.mxu0 %v231
  %283 = vmatpush1.msra.mxu0 %v230
  %284 = vmatprep.subr.mxu0 %v235
  %285 = vmatpush1.msra.mxu0 %v234
  %286 = vmatprep.subr.mxu0 %v239
  %287 = vmatpush1.msra.mxu0 %v238
  %288 = vmatprep.subr.mxu0 %v243
  %289 = vmatpush1.msra.mxu0 %v242
  %290 = vmatprep.subr.mxu0 %v247
  %291 = vmatpush1.msra.mxu0 %v246
  %292 = vmatprep.subr.mxu0 %v251
  %293 = vmatpush1.msra.mxu0 %v250
  %294 = vmatprep.subr.mxu0 %v255
  %295 = vmatpush1.msra.mxu0 %v254
  %296 = vmatprep.subr.mxu0 %v259
  %297 = vmatpush1.msra.mxu0 %v258
  %298 = vmatprep.subr.mxu0 %v263
  %299 = vmatpush1.msra.mxu0 %v262
  %300 = vmatprep.subr.mxu0 %v267
  %301 = vmatpush1.msra.mxu0 %v266
  %302 = vmatprep.subr.mxu0 0.0
  %303 = vmatpush1.msra.mxu0 0.0
  %304 = vmatprep.subr.mxu0 0.0
  %305 = vmatpush1.msra.mxu0 0.0
  %306 = vmatprep.subr.mxu0 0.0
  %307 = vmatpush1.msra.mxu0 0.0
  %308 = vmatprep.subr.mxu0 0.0
  %309 = vmatpush1.msra.mxu0 0.0
  %310 = vmatprep.subr.mxu0 0.0
  %311 = vmatpush1.msra.mxu0 0.0
  %312 = vmatprep.subr.mxu0 0.0
  %313 = vmatpush1.msra.mxu0 0.0
  %314 = vmatprep.subr.mxu0 0.0
  %315 = vmatpush1.msra.mxu0 0.0
  %316 = vmatprep.subr.mxu0 0.0
  %317 = vmatpush1.msra.mxu0 0.0
  %318 = vmatprep.subr.mxu0 0.0
  %319 = vmatpush1.msra.mxu0 0.0
  %320 = vmatprep.subr.mxu0 0.0
  %321 = vmatpush1.msra.mxu0 0.0
  %322 = vmatprep.subr.mxu0 0.0
  %323 = vmatpush1.msra.mxu0 0.0
  %324 = vmatprep.subr.mxu0 0.0
  %325 = vmatpush1.msra.mxu0 0.0
  %326 = vmatprep.subr.mxu0 0.0
  %327 = vmatpush1.msra.mxu0 0.0
  %328 = vmatprep.subr.mxu0 0.0
  %329 = vmatpush1.msra.mxu0 0.0
  %330 = vmatprep.subr.mxu0 0.0
  %331 = vmatpush1.msra.mxu0 0.0
  %332 = vmatprep.subr.mxu0 0.0
  %333 = vmatpush1.msra.mxu0 0.0
  %334 = vmatprep.mubr.f32.mxu0 0.0
  %335 = vmatmul.mubr.f32.gmra.mrb[0].mxu0 %v200
  %v336 = vpop.f32.mrb[0].mxu0
  %v337 = vadd.f32 %v205, %v336
  %v338 = vpop.f32.mrb[0].mxu0
  %v339 = vadd.f32 %v205, %v338
  %340 = vdwg.mxu0
  %341 = vmatprep.subr.mxu0 %v209
  %342 = vmatpush1.msra.mxu0 %v208
  %343 = vmatprep.subr.mxu0 %v213
  %344 = vmatpush1.msra.mxu0 %v212
  %345 = vmatprep.subr.mxu0 %v217
  %346 = vmatpush1.msra.mxu0 %v216
  %347 = vmatprep.subr.mxu0 %v221
  %348 = vmatpush1.msra.mxu0 %v220
  %349 = vmatprep.subr.mxu0 %v225
  %350 = vmatpush1.msra.mxu0 %v224
  %351 = vmatprep.subr.mxu0 %v229
  %352 = vmatpush1.msra.mxu0 %v228
  %353 = vmatprep.subr.mxu0 %v233
  %354 = vmatpush1.msra.mxu0 %v232
  %355 = vmatprep.subr.mxu0 %v237
  %356 = vmatpush1.msra.mxu0 %v236
  %357 = vmatprep.subr.mxu0 %v241
  %358 = vmatpush1.msra.mxu0 %v240
  %359 = vmatprep.subr.mxu0 %v245
  %360 = vmatpush1.msra.mxu0 %v244
  %361 = vmatprep.subr.mxu0 %v249
  %362 = vmatpush1.msra.mxu0 %v248
  %363 = vmatprep.subr.mxu0 %v253
  %364 = vmatpush1.msra.mxu0 %v252
  %365 = vmatprep.subr.mxu0 %v257
  %366 = vmatpush1.msra.mxu0 %v256
  %367 = vmatprep.subr.mxu0 %v261
  %368 = vmatpush1.msra.mxu0 %v260
  %369 = vmatprep.subr.mxu0 %v265
  %370 = vmatpush1.msra.mxu0 %v264
  %371 = vmatprep.subr.mxu0 %v269
  %372 = vmatpush1.msra.mxu0 %v268
  %373 = vmatprep.subr.mxu0 0.0
  %374 = vmatpush1.msra.mxu0 0.0
  %375 = vmatprep.subr.mxu0 0.0
  %376 = vmatpush1.msra.mxu0 0.0
  %377 = vmatprep.subr.mxu0 0.0
  %378 = vmatpush1.msra.mxu0 0.0
  %379 = vmatprep.subr.mxu0 0.0
  %380 = vmatpush1.msra.mxu0 0.0
  %381 = vmatprep.subr.mxu0 0.0
  %382 = vmatpush1.msra.mxu0 0.0
  %383 = vmatprep.subr.mxu0 0.0
  %384 = vmatpush1.msra.mxu0 0.0
  %385 = vmatprep.subr.mxu0 0.0
  %386 = vmatpush1.msra.mxu0 0.0
  %387 = vmatprep.subr.mxu0 0.0
  %388 = vmatpush1.msra.mxu0 0.0
  %389 = vmatprep.subr.mxu0 0.0
  %390 = vmatpush1.msra.mxu0 0.0
  %391 = vmatprep.subr.mxu0 0.0
  %392 = vmatpush1.msra.mxu0 0.0
  %393 = vmatprep.subr.mxu0 0.0
  %394 = vmatpush1.msra.mxu0 0.0
  %395 = vmatprep.subr.mxu0 0.0
  %396 = vmatpush1.msra.mxu0 0.0
  %397 = vmatprep.subr.mxu0 0.0
  %398 = vmatpush1.msra.mxu0 0.0
  %399 = vmatprep.subr.mxu0 0.0
  %400 = vmatpush1.msra.mxu0 0.0
  %401 = vmatprep.subr.mxu0 0.0
  %402 = vmatpush1.msra.mxu0 0.0
  %403 = vmatprep.subr.mxu0 0.0
  %404 = vmatpush1.msra.mxu0 0.0
  %405 = vmatprep.mubr.f32.mxu0 0.0
  %406 = vmatmul.mubr.f32.gmra.mrb[0].mxu0 %v200
  %v407 = vpop.f32.mrb[0].mxu0
  %v408 = vadd.f32 %v205, %v407
  %v409 = vpop.f32.mrb[0].mxu0
  %v410 = vadd.f32 %v205, %v409
  %411 = vdwg.mxu0
  %s412 = scalar_lea.vmem %s1, 512
  %v413 = vld [vmem:[%s412] sm:$0xff]
  %v414 = vld [vmem:[%s412 + $0x8] sm:$0xff]
  %v415 = vld [vmem:[%s412 + $0x10] sm:$0xff]
  %v416 = vld [vmem:[%s412 + $0x18] sm:$0xff]
  %v417 = vld [vmem:[%s412 + $0x20] sm:$0xff]
  %v418 = vld [vmem:[%s412 + $0x28] sm:$0xff]
  %v419 = vld [vmem:[%s412 + $0x30] sm:$0xff]
  %v420 = vld [vmem:[%s412 + $0x38] sm:$0xff]
  %v421 = vld [vmem:[%s412 + $0x40] sm:$0xff]
  %v422 = vld [vmem:[%s412 + $0x48] sm:$0xff]
  %v423 = vld [vmem:[%s412 + $0x50] sm:$0xff]
  %v424 = vld [vmem:[%s412 + $0x58] sm:$0xff]
  %v425 = vld [vmem:[%s412 + $0x60] sm:$0xff]
  %v426 = vld [vmem:[%s412 + $0x68] sm:$0xff]
  %v427 = vld [vmem:[%s412 + $0x70] sm:$0xff]
  %v428 = vld [vmem:[%s412 + $0x78] sm:$0xff]
  %v429 = vld [vmem:[%s412 + $0x80] sm:$0xff]
  %v430 = vld [vmem:[%s412 + $0x88] sm:$0xff]
  %v431 = vld [vmem:[%s412 + $0x90] sm:$0xff]
  %v432 = vld [vmem:[%s412 + $0x98] sm:$0xff]
  %v433 = vld [vmem:[%s412 + $0xa0] sm:$0xff]
  %v434 = vld [vmem:[%s412 + $0xa8] sm:$0xff]
  %v435 = vld [vmem:[%s412 + $0xb0] sm:$0xff]
  %v436 = vld [vmem:[%s412 + $0xb8] sm:$0xff]
  %v437 = vld [vmem:[%s412 + $0xc0] sm:$0xff]
  %v438 = vld [vmem:[%s412 + $0xc8] sm:$0xff]
  %v439 = vld [vmem:[%s412 + $0xd0] sm:$0xff]
  %v440 = vld [vmem:[%s412 + $0xd8] sm:$0xff]
  %v441 = vld [vmem:[%s412 + $0xe0] sm:$0xff]
  %v442 = vld [vmem:[%s412 + $0xe8] sm:$0xff]
  %v443 = vld [vmem:[%s412 + $0xf0] sm:$0xff]
  %v444 = vld [vmem:[%s412 + $0xf8] sm:$0xff]
  %v445 = vld [vmem:[%s412 + $0x100] sm:$0xff]
  %v446 = vld [vmem:[%s412 + $0x108] sm:$0xff]
  %v447 = vld [vmem:[%s412 + $0x110] sm:$0xff]
  %v448 = vld [vmem:[%s412 + $0x118] sm:$0xff]
  %v449 = vld [vmem:[%s412 + $0x120] sm:$0xff]
  %v450 = vld [vmem:[%s412 + $0x128] sm:$0xff]
  %v451 = vld [vmem:[%s412 + $0x130] sm:$0xff]
  %v452 = vld [vmem:[%s412 + $0x138] sm:$0xff]
  %v453 = vld [vmem:[%s412 + $0x140] sm:$0xff]
  %v454 = vld [vmem:[%s412 + $0x148] sm:$0xff]
  %v455 = vld [vmem:[%s412 + $0x150] sm:$0xff]
  %v456 = vld [vmem:[%s412 + $0x158] sm:$0xff]
  %v457 = vld [vmem:[%s412 + $0x160] sm:$0xff]
  %v458 = vld [vmem:[%s412 + $0x168] sm:$0xff]
  %v459 = vld [vmem:[%s412 + $0x170] sm:$0xff]
  %v460 = vld [vmem:[%s412 + $0x178] sm:$0xff]
  %v461 = vld [vmem:[%s412 + $0x180] sm:$0xff]
  %v462 = vld [vmem:[%s412 + $0x188] sm:$0xff]
  %v463 = vld [vmem:[%s412 + $0x190] sm:$0xff]
  %v464 = vld [vmem:[%s412 + $0x198] sm:$0xff]
  %v465 = vld [vmem:[%s412 + $0x1a0] sm:$0xff]
  %v466 = vld [vmem:[%s412 + $0x1a8] sm:$0xff]
  %v467 = vld [vmem:[%s412 + $0x1b0] sm:$0xff]
  %v468 = vld [vmem:[%s412 + $0x1b8] sm:$0xff]
  %v469 = vld [vmem:[%s412 + $0x1c0] sm:$0xff]
  %v470 = vld [vmem:[%s412 + $0x1c8] sm:$0xff]
  %v471 = vld [vmem:[%s412 + $0x1d0] sm:$0xff]
  %v472 = vld [vmem:[%s412 + $0x1d8] sm:$0xff]
  %v473 = vld [vmem:[%s412 + $0x1e0] sm:$0xff]
  %v474 = vld [vmem:[%s412 + $0x1e8] sm:$0xff]
  %v475 = vld [vmem:[%s412 + $0x1f0] sm:$0xff]
  %v476 = vld [vmem:[%s412 + $0x1f8] sm:$0xff]
  %477 = vmatprep.subr.mxu0 %v414
  %478 = vmatpush1.msra.mxu0 %v413
  %479 = vmatprep.subr.mxu0 %v418
  %480 = vmatpush1.msra.mxu0 %v417
  %481 = vmatprep.subr.mxu0 %v422
  %482 = vmatpush1.msra.mxu0 %v421
  %483 = vmatprep.subr.mxu0 %v426
  %484 = vmatpush1.msra.mxu0 %v425
  %485 = vmatprep.subr.mxu0 %v430
  %486 = vmatpush1.msra.mxu0 %v429
  %487 = vmatprep.subr.mxu0 %v434
  %488 = vmatpush1.msra.mxu0 %v433
  %489 = vmatprep.subr.mxu0 %v438
  %490 = vmatpush1.msra.mxu0 %v437
  %491 = vmatprep.subr.mxu0 %v442
  %492 = vmatpush1.msra.mxu0 %v441
  %493 = vmatprep.subr.mxu0 %v446
  %494 = vmatpush1.msra.mxu0 %v445
  %495 = vmatprep.subr.mxu0 %v450
  %496 = vmatpush1.msra.mxu0 %v449
  %497 = vmatprep.subr.mxu0 %v454
  %498 = vmatpush1.msra.mxu0 %v453
  %499 = vmatprep.subr.mxu0 %v458
  %500 = vmatpush1.msra.mxu0 %v457
  %501 = vmatprep.subr.mxu0 %v462
  %502 = vmatpush1.msra.mxu0 %v461
  %503 = vmatprep.subr.mxu0 %v466
  %504 = vmatpush1.msra.mxu0 %v465
  %505 = vmatprep.subr.mxu0 %v470
  %506 = vmatpush1.msra.mxu0 %v469
  %507 = vmatprep.subr.mxu0 %v474
  %508 = vmatpush1.msra.mxu0 %v473
  %509 = vmatprep.subr.mxu0 0.0
  %510 = vmatpush1.msra.mxu0 0.0
  %511 = vmatprep.subr.mxu0 0.0
  %512 = vmatpush1.msra.mxu0 0.0
  %513 = vmatprep.subr.mxu0 0.0
  %514 = vmatpush1.msra.mxu0 0.0
  %515 = vmatprep.subr.mxu0 0.0
  %516 = vmatpush1.msra.mxu0 0.0
  %517 = vmatprep.subr.mxu0 0.0
  %518 = vmatpush1.msra.mxu0 0.0
  %519 = vmatprep.subr.mxu0 0.0
  %520 = vmatpush1.msra.mxu0 0.0
  %521 = vmatprep.subr.mxu0 0.0
  %522 = vmatpush1.msra.mxu0 0.0
  %523 = vmatprep.subr.mxu0 0.0
  %524 = vmatpush1.msra.mxu0 0.0
  %525 = vmatprep.subr.mxu0 0.0
  %526 = vmatpush1.msra.mxu0 0.0
  %527 = vmatprep.subr.mxu0 0.0
  %528 = vmatpush1.msra.mxu0 0.0
  %529 = vmatprep.subr.mxu0 0.0
  %530 = vmatpush1.msra.mxu0 0.0
  %531 = vmatprep.subr.mxu0 0.0
  %532 = vmatpush1.msra.mxu0 0.0
  %533 = vmatprep.subr.mxu0 0.0
  %534 = vmatpush1.msra.mxu0 0.0
  %535 = vmatprep.subr.mxu0 0.0
  %536 = vmatpush1.msra.mxu0 0.0
  %537 = vmatprep.subr.mxu0 0.0
  %538 = vmatpush1.msra.mxu0 0.0
  %539 = vmatprep.subr.mxu0 0.0
  %540 = vmatpush1.msra.mxu0 0.0
  %541 = vmatprep.mubr.f32.mxu0 0.0
  %542 = vmatmul.mubr.f32.gmra.mrb[0].mxu0 %v200
  %v543 = vpop.f32.mrb[0].mxu0
  %v544 = vadd.f32 %v205, %v543
  %v545 = vpop.f32.mrb[0].mxu0
  %v546 = vadd.f32 %v205, %v545
  %547 = vdwg.mxu0
  %548 = vmatprep.subr.mxu0 %v416
  %549 = vmatpush1.msra.mxu0 %v415
  %550 = vmatprep.subr.mxu0 %v420
  %551 = vmatpush1.msra.mxu0 %v419
  %552 = vmatprep.subr.mxu0 %v424
  %553 = vmatpush1.msra.mxu0 %v423
  %554 = vmatprep.subr.mxu0 %v428
  %555 = vmatpush1.msra.mxu0 %v427
  %556 = vmatprep.subr.mxu0 %v432
  %557 = vmatpush1.msra.mxu0 %v431
  %558 = vmatprep.subr.mxu0 %v436
  %559 = vmatpush1.msra.mxu0 %v435
  %560 = vmatprep.subr.mxu0 %v440
  %561 = vmatpush1.msra.mxu0 %v439
  %562 = vmatprep.subr.mxu0 %v444
  %563 = vmatpush1.msra.mxu0 %v443
  %564 = vmatprep.subr.mxu0 %v448
  %565 = vmatpush1.msra.mxu0 %v447
  %566 = vmatprep.subr.mxu0 %v452
  %567 = vmatpush1.msra.mxu0 %v451
  %568 = vmatprep.subr.mxu0 %v456
  %569 = vmatpush1.msra.mxu0 %v455
  %570 = vmatprep.subr.mxu0 %v460
  %571 = vmatpush1.msra.mxu0 %v459
  %572 = vmatprep.subr.mxu0 %v464
  %573 = vmatpush1.msra.mxu0 %v463
  %574 = vmatprep.subr.mxu0 %v468
  %575 = vmatpush1.msra.mxu0 %v467
  %576 = vmatprep.subr.mxu0 %v472
  %577 = vmatpush1.msra.mxu0 %v471
  %578 = vmatprep.subr.mxu0 %v476
  %579 = vmatpush1.msra.mxu0 %v475
  %580 = vmatprep.subr.mxu0 0.0
  %581 = vmatpush1.msra.mxu0 0.0
  %582 = vmatprep.subr.mxu0 0.0
  %583 = vmatpush1.msra.mxu0 0.0
  %584 = vmatprep.subr.mxu0 0.0
  %585 = vmatpush1.msra.mxu0 0.0
  %586 = vmatprep.subr.mxu0 0.0
  %587 = vmatpush1.msra.mxu0 0.0
  %588 = vmatprep.subr.mxu0 0.0
  %589 = vmatpush1.msra.mxu0 0.0
  %590 = vmatprep.subr.mxu0 0.0
  %591 = vmatpush1.msra.mxu0 0.0
  %592 = vmatprep.subr.mxu0 0.0
  %593 = vmatpush1.msra.mxu0 0.0
  %594 = vmatprep.subr.mxu0 0.0
  %595 = vmatpush1.msra.mxu0 0.0
  %596 = vmatprep.subr.mxu0 0.0
  %597 = vmatpush1.msra.mxu0 0.0
  %598 = vmatprep.subr.mxu0 0.0
  %599 = vmatpush1.msra.mxu0 0.0
  %600 = vmatprep.subr.mxu0 0.0
  %601 = vmatpush1.msra.mxu0 0.0
  %602 = vmatprep.subr.mxu0 0.0
  %603 = vmatpush1.msra.mxu0 0.0
  %604 = vmatprep.subr.mxu0 0.0
  %605 = vmatpush1.msra.mxu0 0.0
  %606 = vmatprep.subr.mxu0 0.0
  %607 = vmatpush1.msra.mxu0 0.0
  %608 = vmatprep.subr.mxu0 0.0
  %609 = vmatpush1.msra.mxu0 0.0
  %610 = vmatprep.subr.mxu0 0.0
  %611 = vmatpush1.msra.mxu0 0.0
  %612 = vmatprep.mubr.f32.mxu0 0.0
  %613 = vmatmul.mubr.f32.gmra.mrb[0].mxu0 %v200
  %v614 = vpop.f32.mrb[0].mxu0
  %v615 = vadd.f32 %v205, %v614
  %v616 = vpop.f32.mrb[0].mxu0
  %v617 = vadd.f32 %v205, %v616
  %618 = vdwg.mxu0
  %s619 = scalar_lea.vmem %s1, 1024
  %v620 = vld [vmem:[%s619] sm:$0xff]
  %v621 = vld [vmem:[%s619 + $0x8] sm:$0xff]
  %v622 = vld [vmem:[%s619 + $0x10] sm:$0xff]
  %v623 = vld [vmem:[%s619 + $0x18] sm:$0xff]
  %v624 = vld [vmem:[%s619 + $0x20] sm:$0xff]
  %v625 = vld [vmem:[%s619 + $0x28] sm:$0xff]
  %v626 = vld [vmem:[%s619 + $0x30] sm:$0xff]
  %v627 = vld [vmem:[%s619 + $0x38] sm:$0xff]
  %v628 = vld [vmem:[%s619 + $0x40] sm:$0xff]
  %v629 = vld [vmem:[%s619 + $0x48] sm:$0xff]
  %v630 = vld [vmem:[%s619 + $0x50] sm:$0xff]
  %v631 = vld [vmem:[%s619 + $0x58] sm:$0xff]
  %v632 = vld [vmem:[%s619 + $0x60] sm:$0xff]
  %v633 = vld [vmem:[%s619 + $0x68] sm:$0xff]
  %v634 = vld [vmem:[%s619 + $0x70] sm:$0xff]
  %v635 = vld [vmem:[%s619 + $0x78] sm:$0xff]
  %v636 = vld [vmem:[%s619 + $0x80] sm:$0xff]
  %v637 = vld [vmem:[%s619 + $0x88] sm:$0xff]
  %v638 = vld [vmem:[%s619 + $0x90] sm:$0xff]
  %v639 = vld [vmem:[%s619 + $0x98] sm:$0xff]
  %v640 = vld [vmem:[%s619 + $0xa0] sm:$0xff]
  %v641 = vld [vmem:[%s619 + $0xa8] sm:$0xff]
  %v642 = vld [vmem:[%s619 + $0xb0] sm:$0xff]
  %v643 = vld [vmem:[%s619 + $0xb8] sm:$0xff]
  %v644 = vld [vmem:[%s619 + $0xc0] sm:$0xff]
  %v645 = vld [vmem:[%s619 + $0xc8] sm:$0xff]
  %v646 = vld [vmem:[%s619 + $0xd0] sm:$0xff]
  %v647 = vld [vmem:[%s619 + $0xd8] sm:$0xff]
  %v648 = vld [vmem:[%s619 + $0xe0] sm:$0xff]
  %v649 = vld [vmem:[%s619 + $0xe8] sm:$0xff]
  %v650 = vld [vmem:[%s619 + $0xf0] sm:$0xff]
  %v651 = vld [vmem:[%s619 + $0xf8] sm:$0xff]
  %v652 = vld [vmem:[%s619 + $0x100] sm:$0xff]
  %v653 = vld [vmem:[%s619 + $0x108] sm:$0xff]
  %v654 = vld [vmem:[%s619 + $0x110] sm:$0xff]
  %v655 = vld [vmem:[%s619 + $0x118] sm:$0xff]
  %v656 = vld [vmem:[%s619 + $0x120] sm:$0xff]
  %v657 = vld [vmem:[%s619 + $0x128] sm:$0xff]
  %v658 = vld [vmem:[%s619 + $0x130] sm:$0xff]
  %v659 = vld [vmem:[%s619 + $0x138] sm:$0xff]
  %v660 = vld [vmem:[%s619 + $0x140] sm:$0xff]
  %v661 = vld [vmem:[%s619 + $0x148] sm:$0xff]
  %v662 = vld [vmem:[%s619 + $0x150] sm:$0xff]
  %v663 = vld [vmem:[%s619 + $0x158] sm:$0xff]
  %v664 = vld [vmem:[%s619 + $0x160] sm:$0xff]
  %v665 = vld [vmem:[%s619 + $0x168] sm:$0xff]
  %v666 = vld [vmem:[%s619 + $0x170] sm:$0xff]
  %v667 = vld [vmem:[%s619 + $0x178] sm:$0xff]
  %v668 = vld [vmem:[%s619 + $0x180] sm:$0xff]
  %v669 = vld [vmem:[%s619 + $0x188] sm:$0xff]
  %v670 = vld [vmem:[%s619 + $0x190] sm:$0xff]
  %v671 = vld [vmem:[%s619 + $0x198] sm:$0xff]
  %v672 = vld [vmem:[%s619 + $0x1a0] sm:$0xff]
  %v673 = vld [vmem:[%s619 + $0x1a8] sm:$0xff]
  %v674 = vld [vmem:[%s619 + $0x1b0] sm:$0xff]
  %v675 = vld [vmem:[%s619 + $0x1b8] sm:$0xff]
  %v676 = vld [vmem:[%s619 + $0x1c0] sm:$0xff]
  %v677 = vld [vmem:[%s619 + $0x1c8] sm:$0xff]
  %v678 = vld [vmem:[%s619 + $0x1d0] sm:$0xff]
  %v679 = vld [vmem:[%s619 + $0x1d8] sm:$0xff]
  %v680 = vld [vmem:[%s619 + $0x1e0] sm:$0xff]
  %v681 = vld [vmem:[%s619 + $0x1e8] sm:$0xff]
  %v682 = vld [vmem:[%s619 + $0x1f0] sm:$0xff]
  %v683 = vld [vmem:[%s619 + $0x1f8] sm:$0xff]
  %684 = vmatprep.subr.mxu0 %v621
  %685 = vmatpush1.msra.mxu0 %v620
  %686 = vmatprep.subr.mxu0 %v625
  %687 = vmatpush1.msra.mxu0 %v624
  %688 = vmatprep.subr.mxu0 %v629
  %689 = vmatpush1.msra.mxu0 %v628
  %690 = vmatprep.subr.mxu0 %v633
  %691 = vmatpush1.msra.mxu0 %v632
  %692 = vmatprep.subr.mxu0 %v637
  %693 = vmatpush1.msra.mxu0 %v636
  %694 = vmatprep.subr.mxu0 %v641
  %695 = vmatpush1.msra.mxu0 %v640
  %696 = vmatprep.subr.mxu0 %v645
  %697 = vmatpush1.msra.mxu0 %v644
  %698 = vmatprep.subr.mxu0 %v649
  %699 = vmatpush1.msra.mxu0 %v648
  %700 = vmatprep.subr.mxu0 %v653
  %701 = vmatpush1.msra.mxu0 %v652
  %702 = vmatprep.subr.mxu0 %v657
  %703 = vmatpush1.msra.mxu0 %v656
  %704 = vmatprep.subr.mxu0 %v661
  %705 = vmatpush1.msra.mxu0 %v660
  %706 = vmatprep.subr.mxu0 %v665
  %707 = vmatpush1.msra.mxu0 %v664
  %708 = vmatprep.subr.mxu0 %v669
  %709 = vmatpush1.msra.mxu0 %v668
  %710 = vmatprep.subr.mxu0 %v673
  %711 = vmatpush1.msra.mxu0 %v672
  %712 = vmatprep.subr.mxu0 %v677
  %713 = vmatpush1.msra.mxu0 %v676
  %714 = vmatprep.subr.mxu0 %v681
  %715 = vmatpush1.msra.mxu0 %v680
  %716 = vmatprep.subr.mxu0 0.0
  %717 = vmatpush1.msra.mxu0 0.0
  %718 = vmatprep.subr.mxu0 0.0
  %719 = vmatpush1.msra.mxu0 0.0
  %720 = vmatprep.subr.mxu0 0.0
  %721 = vmatpush1.msra.mxu0 0.0
  %722 = vmatprep.subr.mxu0 0.0
  %723 = vmatpush1.msra.mxu0 0.0
  %724 = vmatprep.subr.mxu0 0.0
  %725 = vmatpush1.msra.mxu0 0.0
  %726 = vmatprep.subr.mxu0 0.0
  %727 = vmatpush1.msra.mxu0 0.0
  %728 = vmatprep.subr.mxu0 0.0
  %729 = vmatpush1.msra.mxu0 0.0
  %730 = vmatprep.subr.mxu0 0.0
  %731 = vmatpush1.msra.mxu0 0.0
  %732 = vmatprep.subr.mxu0 0.0
  %733 = vmatpush1.msra.mxu0 0.0
  %734 = vmatprep.subr.mxu0 0.0
  %735 = vmatpush1.msra.mxu0 0.0
  %736 = vmatprep.subr.mxu0 0.0
  %737 = vmatpush1.msra.mxu0 0.0
  %738 = vmatprep.subr.mxu0 0.0
  %739 = vmatpush1.msra.mxu0 0.0
  %740 = vmatprep.subr.mxu0 0.0
  %741 = vmatpush1.msra.mxu0 0.0
  %742 = vmatprep.subr.mxu0 0.0
  %743 = vmatpush1.msra.mxu0 0.0
  %744 = vmatprep.subr.mxu0 0.0
  %745 = vmatpush1.msra.mxu0 0.0
  %746 = vmatprep.subr.mxu0 0.0
  %747 = vmatpush1.msra.mxu0 0.0
  %748 = vmatprep.mubr.f32.mxu0 0.0
  %749 = vmatmul.mubr.f32.gmra.mrb[0].mxu0 %v200
  %v750 = vpop.f32.mrb[0].mxu0
  %v751 = vadd.f32 %v205, %v750
  %v752 = vpop.f32.mrb[0].mxu0
  %v753 = vadd.f32 %v205, %v752
  %754 = vdwg.mxu0
  %755 = vmatprep.subr.mxu0 %v623
  %756 = vmatpush1.msra.mxu0 %v622
  %757 = vmatprep.subr.mxu0 %v627
  %758 = vmatpush1.msra.mxu0 %v626
  %759 = vmatprep.subr.mxu0 %v631
  %760 = vmatpush1.msra.mxu0 %v630
  %761 = vmatprep.subr.mxu0 %v635
  %762 = vmatpush1.msra.mxu0 %v634
  %763 = vmatprep.subr.mxu0 %v639
  %764 = vmatpush1.msra.mxu0 %v638
  %765 = vmatprep.subr.mxu0 %v643
  %766 = vmatpush1.msra.mxu0 %v642
  %767 = vmatprep.subr.mxu0 %v647
  %768 = vmatpush1.msra.mxu0 %v646
  %769 = vmatprep.subr.mxu0 %v651
  %770 = vmatpush1.msra.mxu0 %v650
  %771 = vmatprep.subr.mxu0 %v655
  %772 = vmatpush1.msra.mxu0 %v654
  %773 = vmatprep.subr.mxu0 %v659
  %774 = vmatpush1.msra.mxu0 %v658
  %775 = vmatprep.subr.mxu0 %v663
  %776 = vmatpush1.msra.mxu0 %v662
  %777 = vmatprep.subr.mxu0 %v667
  %778 = vmatpush1.msra.mxu0 %v666
  %779 = vmatprep.subr.mxu0 %v671
  %780 = vmatpush1.msra.mxu0 %v670
  %781 = vmatprep.subr.mxu0 %v675
  %782 = vmatpush1.msra.mxu0 %v674
  %783 = vmatprep.subr.mxu0 %v679
  %784 = vmatpush1.msra.mxu0 %v678
  %785 = vmatprep.subr.mxu0 %v683
  %786 = vmatpush1.msra.mxu0 %v682
  %787 = vmatprep.subr.mxu0 0.0
  %788 = vmatpush1.msra.mxu0 0.0
  %789 = vmatprep.subr.mxu0 0.0
  %790 = vmatpush1.msra.mxu0 0.0
  %791 = vmatprep.subr.mxu0 0.0
  %792 = vmatpush1.msra.mxu0 0.0
  %793 = vmatprep.subr.mxu0 0.0
  %794 = vmatpush1.msra.mxu0 0.0
  %795 = vmatprep.subr.mxu0 0.0
  %796 = vmatpush1.msra.mxu0 0.0
  %797 = vmatprep.subr.mxu0 0.0
  %798 = vmatpush1.msra.mxu0 0.0
  %799 = vmatprep.subr.mxu0 0.0
  %800 = vmatpush1.msra.mxu0 0.0
  %801 = vmatprep.subr.mxu0 0.0
  %802 = vmatpush1.msra.mxu0 0.0
  %803 = vmatprep.subr.mxu0 0.0
  %804 = vmatpush1.msra.mxu0 0.0
  %805 = vmatprep.subr.mxu0 0.0
  %806 = vmatpush1.msra.mxu0 0.0
  %807 = vmatprep.subr.mxu0 0.0
  %808 = vmatpush1.msra.mxu0 0.0
  %809 = vmatprep.subr.mxu0 0.0
  %810 = vmatpush1.msra.mxu0 0.0
  %811 = vmatprep.subr.mxu0 0.0
  %812 = vmatpush1.msra.mxu0 0.0
  %813 = vmatprep.subr.mxu0 0.0
  %814 = vmatpush1.msra.mxu0 0.0
  %815 = vmatprep.subr.mxu0 0.0
  %816 = vmatpush1.msra.mxu0 0.0
  %817 = vmatprep.subr.mxu0 0.0
  %818 = vmatpush1.msra.mxu0 0.0
  %819 = vmatprep.mubr.f32.mxu0 0.0
  %820 = vmatmul.mubr.f32.gmra.mrb[0].mxu0 %v200
  %v821 = vpop.f32.mrb[0].mxu0
  %v822 = vadd.f32 %v205, %v821
  %v823 = vpop.f32.mrb[0].mxu0
  %v824 = vadd.f32 %v205, %v823
  %825 = vdwg.mxu0
  %s826 = scalar_lea.vmem %s1, 1536
  %v827 = vld [vmem:[%s826] sm:$0xff]
  %v828 = vld [vmem:[%s826 + $0x8] sm:$0xff]
  %v829 = vld [vmem:[%s826 + $0x10] sm:$0xff]
  %v830 = vld [vmem:[%s826 + $0x18] sm:$0xff]
  %v831 = vld [vmem:[%s826 + $0x20] sm:$0xff]
  %v832 = vld [vmem:[%s826 + $0x28] sm:$0xff]
  %v833 = vld [vmem:[%s826 + $0x30] sm:$0xff]
  %v834 = vld [vmem:[%s826 + $0x38] sm:$0xff]
  %v835 = vld [vmem:[%s826 + $0x40] sm:$0xff]
  %v836 = vld [vmem:[%s826 + $0x48] sm:$0xff]
  %v837 = vld [vmem:[%s826 + $0x50] sm:$0xff]
  %v838 = vld [vmem:[%s826 + $0x58] sm:$0xff]
  %v839 = vld [vmem:[%s826 + $0x60] sm:$0xff]
  %v840 = vld [vmem:[%s826 + $0x68] sm:$0xff]
  %v841 = vld [vmem:[%s826 + $0x70] sm:$0xff]
  %v842 = vld [vmem:[%s826 + $0x78] sm:$0xff]
  %v843 = vld [vmem:[%s826 + $0x80] sm:$0xff]
  %v844 = vld [vmem:[%s826 + $0x88] sm:$0xff]
  %v845 = vld [vmem:[%s826 + $0x90] sm:$0xff]
  %v846 = vld [vmem:[%s826 + $0x98] sm:$0xff]
  %v847 = vld [vmem:[%s826 + $0xa0] sm:$0xff]
  %v848 = vld [vmem:[%s826 + $0xa8] sm:$0xff]
  %v849 = vld [vmem:[%s826 + $0xb0] sm:$0xff]
  %v850 = vld [vmem:[%s826 + $0xb8] sm:$0xff]
  %v851 = vld [vmem:[%s826 + $0xc0] sm:$0xff]
  %v852 = vld [vmem:[%s826 + $0xc8] sm:$0xff]
  %v853 = vld [vmem:[%s826 + $0xd0] sm:$0xff]
  %v854 = vld [vmem:[%s826 + $0xd8] sm:$0xff]
  %v855 = vld [vmem:[%s826 + $0xe0] sm:$0xff]
  %v856 = vld [vmem:[%s826 + $0xe8] sm:$0xff]
  %v857 = vld [vmem:[%s826 + $0xf0] sm:$0xff]
  %v858 = vld [vmem:[%s826 + $0xf8] sm:$0xff]
  %v859 = vld [vmem:[%s826 + $0x100] sm:$0xff]
  %v860 = vld [vmem:[%s826 + $0x108] sm:$0xff]
  %v861 = vld [vmem:[%s826 + $0x110] sm:$0xff]
  %v862 = vld [vmem:[%s826 + $0x118] sm:$0xff]
  %v863 = vld [vmem:[%s826 + $0x120] sm:$0xff]
  %v864 = vld [vmem:[%s826 + $0x128] sm:$0xff]
  %v865 = vld [vmem:[%s826 + $0x130] sm:$0xff]
  %v866 = vld [vmem:[%s826 + $0x138] sm:$0xff]
  %v867 = vld [vmem:[%s826 + $0x140] sm:$0xff]
  %v868 = vld [vmem:[%s826 + $0x148] sm:$0xff]
  %v869 = vld [vmem:[%s826 + $0x150] sm:$0xff]
  %v870 = vld [vmem:[%s826 + $0x158] sm:$0xff]
  %v871 = vld [vmem:[%s826 + $0x160] sm:$0xff]
  %v872 = vld [vmem:[%s826 + $0x168] sm:$0xff]
  %v873 = vld [vmem:[%s826 + $0x170] sm:$0xff]
  %v874 = vld [vmem:[%s826 + $0x178] sm:$0xff]
  %v875 = vld [vmem:[%s826 + $0x180] sm:$0xff]
  %v876 = vld [vmem:[%s826 + $0x188] sm:$0xff]
  %v877 = vld [vmem:[%s826 + $0x190] sm:$0xff]
  %v878 = vld [vmem:[%s826 + $0x198] sm:$0xff]
  %v879 = vld [vmem:[%s826 + $0x1a0] sm:$0xff]
  %v880 = vld [vmem:[%s826 + $0x1a8] sm:$0xff]
  %v881 = vld [vmem:[%s826 + $0x1b0] sm:$0xff]
  %v882 = vld [vmem:[%s826 + $0x1b8] sm:$0xff]
  %v883 = vld [vmem:[%s826 + $0x1c0] sm:$0xff]
  %v884 = vld [vmem:[%s826 + $0x1c8] sm:$0xff]
  %v885 = vld [vmem:[%s826 + $0x1d0] sm:$0xff]
  %v886 = vld [vmem:[%s826 + $0x1d8] sm:$0xff]
  %v887 = vld [vmem:[%s826 + $0x1e0] sm:$0xff]
  %v888 = vld [vmem:[%s826 + $0x1e8] sm:$0xff]
  %v889 = vld [vmem:[%s826 + $0x1f0] sm:$0xff]
  %v890 = vld [vmem:[%s826 + $0x1f8] sm:$0xff]
  %891 = vmatprep.subr.mxu0 %v828
  %892 = vmatpush1.msra.mxu0 %v827
  %893 = vmatprep.subr.mxu0 %v832
  %894 = vmatpush1.msra.mxu0 %v831
  %895 = vmatprep.subr.mxu0 %v836
  %896 = vmatpush1.msra.mxu0 %v835
  %897 = vmatprep.subr.mxu0 %v840
  %898 = vmatpush1.msra.mxu0 %v839
  %899 = vmatprep.subr.mxu0 %v844
  %900 = vmatpush1.msra.mxu0 %v843
  %901 = vmatprep.subr.mxu0 %v848
  %902 = vmatpush1.msra.mxu0 %v847
  %903 = vmatprep.subr.mxu0 %v852
  %904 = vmatpush1.msra.mxu0 %v851
  %905 = vmatprep.subr.mxu0 %v856
  %906 = vmatpush1.msra.mxu0 %v855
  %907 = vmatprep.subr.mxu0 %v860
  %908 = vmatpush1.msra.mxu0 %v859
  %909 = vmatprep.subr.mxu0 %v864
  %910 = vmatpush1.msra.mxu0 %v863
  %911 = vmatprep.subr.mxu0 %v868
  %912 = vmatpush1.msra.mxu0 %v867
  %913 = vmatprep.subr.mxu0 %v872
  %914 = vmatpush1.msra.mxu0 %v871
  %915 = vmatprep.subr.mxu0 %v876
  %916 = vmatpush1.msra.mxu0 %v875
  %917 = vmatprep.subr.mxu0 %v880
  %918 = vmatpush1.msra.mxu0 %v879
  %919 = vmatprep.subr.mxu0 %v884
  %920 = vmatpush1.msra.mxu0 %v883
  %921 = vmatprep.subr.mxu0 %v888
  %922 = vmatpush1.msra.mxu0 %v887
  %923 = vmatprep.subr.mxu0 0.0
  %924 = vmatpush1.msra.mxu0 0.0
  %925 = vmatprep.subr.mxu0 0.0
  %926 = vmatpush1.msra.mxu0 0.0
  %927 = vmatprep.subr.mxu0 0.0
  %928 = vmatpush1.msra.mxu0 0.0
  %929 = vmatprep.subr.mxu0 0.0
  %930 = vmatpush1.msra.mxu0 0.0
  %931 = vmatprep.subr.mxu0 0.0
  %932 = vmatpush1.msra.mxu0 0.0
  %933 = vmatprep.subr.mxu0 0.0
  %934 = vmatpush1.msra.mxu0 0.0
  %935 = vmatprep.subr.mxu0 0.0
  %936 = vmatpush1.msra.mxu0 0.0
  %937 = vmatprep.subr.mxu0 0.0
  %938 = vmatpush1.msra.mxu0 0.0
  %939 = vmatprep.subr.mxu0 0.0
  %940 = vmatpush1.msra.mxu0 0.0
  %941 = vmatprep.subr.mxu0 0.0
  %942 = vmatpush1.msra.mxu0 0.0
  %943 = vmatprep.subr.mxu0 0.0
  %944 = vmatpush1.msra.mxu0 0.0
  %945 = vmatprep.subr.mxu0 0.0
  %946 = vmatpush1.msra.mxu0 0.0
  %947 = vmatprep.subr.mxu0 0.0
  %948 = vmatpush1.msra.mxu0 0.0
  %949 = vmatprep.subr.mxu0 0.0
  %950 = vmatpush1.msra.mxu0 0.0
  %951 = vmatprep.subr.mxu0 0.0
  %952 = vmatpush1.msra.mxu0 0.0
  %953 = vmatprep.subr.mxu0 0.0
  %954 = vmatpush1.msra.mxu0 0.0
  %955 = vmatprep.mubr.f32.mxu0 0.0
  %956 = vmatmul.mubr.f32.gmra.mrb[0].mxu0 %v200
  %v957 = vpop.f32.mrb[0].mxu0
  %v958 = vadd.f32 %v205, %v957
  %v959 = vpop.f32.mrb[0].mxu0
  %v960 = vadd.f32 %v205, %v959
  %961 = vdwg.mxu0
  %962 = vmatprep.subr.mxu0 %v830
  %963 = vmatpush1.msra.mxu0 %v829
  %964 = vmatprep.subr.mxu0 %v834
  %965 = vmatpush1.msra.mxu0 %v833
  %966 = vmatprep.subr.mxu0 %v838
  %967 = vmatpush1.msra.mxu0 %v837
  %968 = vmatprep.subr.mxu0 %v842
  %969 = vmatpush1.msra.mxu0 %v841
  %970 = vmatprep.subr.mxu0 %v846
  %971 = vmatpush1.msra.mxu0 %v845
  %972 = vmatprep.subr.mxu0 %v850
  %973 = vmatpush1.msra.mxu0 %v849
  %974 = vmatprep.subr.mxu0 %v854
  %975 = vmatpush1.msra.mxu0 %v853
  %976 = vmatprep.subr.mxu0 %v858
  %977 = vmatpush1.msra.mxu0 %v857
  %978 = vmatprep.subr.mxu0 %v862
  %979 = vmatpush1.msra.mxu0 %v861
  %980 = vmatprep.subr.mxu0 %v866
  %981 = vmatpush1.msra.mxu0 %v865
  %982 = vmatprep.subr.mxu0 %v870
  %983 = vmatpush1.msra.mxu0 %v869
  %984 = vmatprep.subr.mxu0 %v874
  %985 = vmatpush1.msra.mxu0 %v873
  %986 = vmatprep.subr.mxu0 %v878
  %987 = vmatpush1.msra.mxu0 %v877
  %988 = vmatprep.subr.mxu0 %v882
  %989 = vmatpush1.msra.mxu0 %v881
  %990 = vmatprep.subr.mxu0 %v886
  %991 = vmatpush1.msra.mxu0 %v885
  %992 = vmatprep.subr.mxu0 %v890
  %993 = vmatpush1.msra.mxu0 %v889
  %994 = vmatprep.subr.mxu0 0.0
  %995 = vmatpush1.msra.mxu0 0.0
  %996 = vmatprep.subr.mxu0 0.0
  %997 = vmatpush1.msra.mxu0 0.0
  %998 = vmatprep.subr.mxu0 0.0
  %999 = vmatpush1.msra.mxu0 0.0
  %1000 = vmatprep.subr.mxu0 0.0
  %1001 = vmatpush1.msra.mxu0 0.0
  %1002 = vmatprep.subr.mxu0 0.0
  %1003 = vmatpush1.msra.mxu0 0.0
  %1004 = vmatprep.subr.mxu0 0.0
  %1005 = vmatpush1.msra.mxu0 0.0
  %1006 = vmatprep.subr.mxu0 0.0
  %1007 = vmatpush1.msra.mxu0 0.0
  %1008 = vmatprep.subr.mxu0 0.0
  %1009 = vmatpush1.msra.mxu0 0.0
  %1010 = vmatprep.subr.mxu0 0.0
  %1011 = vmatpush1.msra.mxu0 0.0
  %1012 = vmatprep.subr.mxu0 0.0
  %1013 = vmatpush1.msra.mxu0 0.0
  %1014 = vmatprep.subr.mxu0 0.0
  %1015 = vmatpush1.msra.mxu0 0.0
  %1016 = vmatprep.subr.mxu0 0.0
  %1017 = vmatpush1.msra.mxu0 0.0
  %1018 = vmatprep.subr.mxu0 0.0
  %1019 = vmatpush1.msra.mxu0 0.0
  %1020 = vmatprep.subr.mxu0 0.0
  %1021 = vmatpush1.msra.mxu0 0.0
  %1022 = vmatprep.subr.mxu0 0.0
  %1023 = vmatpush1.msra.mxu0 0.0
  %1024 = vmatprep.subr.mxu0 0.0
  %1025 = vmatpush1.msra.mxu0 0.0
  %1026 = vmatprep.mubr.f32.mxu0 0.0
  %1027 = vmatmul.mubr.f32.gmra.mrb[0].mxu0 %v200
  %v1028 = vpop.f32.mrb[0].mxu0
  %v1029 = vadd.f32 %v205, %v1028
  %v1030 = vpop.f32.mrb[0].mxu0
  %v1031 = vadd.f32 %v205, %v1030
  %1032 = vdwg.mxu0
  %v1033 = vadd.f32 %v337, %v544
  %v1034 = vadd.f32 %v339, %v546
  %v1035 = vadd.f32 %v408, %v615
  %v1036 = vadd.f32 %v410, %v617
  %v1037 = vadd.f32 %v1033, %v751
  %v1038 = vadd.f32 %v1034, %v753
  %v1039 = vadd.f32 %v1035, %v822
  %v1040 = vadd.f32 %v1036, %v824
  %v1041 = vadd.f32 %v1037, %v958
  %v1042 = vadd.f32 %v1038, %v960
  %v1043 = vadd.f32 %v1039, %v1029
  %v1044 = vadd.f32 %v1040, %v1031
  %v1045 = vsel %vm202, %v1041, 0.0
  %v1046 = vsel %vm202, %v1042, 0.0
  %v1047 = vadd.f32 %v1045, %v1046
  %v1048 = vsel %vm202, %v1043, 0.0
  %v1049 = vadd.f32 %v1047, %v1048
  %vm1050 = vcmask 62464
  %v1051 = vsel %vm1050, %v1044, 0.0
  %v1052 = vadd.f32 %v1049, %v1051
  %1053 = vadd.xlane.f32.xlu0 %v1052
  %v1054 = vpop.xlane.xlu0 %1053
  %v1055 = vmul.f32 %v337, %v337
  %v1056 = vmul.f32 %v339, %v339
  %v1057 = vmul.f32 %v408, %v408
  %v1058 = vmul.f32 %v410, %v410
  %v1059 = vmul.f32 %v544, %v544
  %v1060 = vmul.f32 %v546, %v546
  %v1061 = vmul.f32 %v615, %v615
  %v1062 = vmul.f32 %v617, %v617
  %v1063 = vadd.f32 %v1055, %v1059
  %v1064 = vadd.f32 %v1056, %v1060
  %v1065 = vadd.f32 %v1057, %v1061
  %v1066 = vadd.f32 %v1058, %v1062
  %v1067 = vmul.f32 %v751, %v751
  %v1068 = vmul.f32 %v753, %v753
  %v1069 = vmul.f32 %v822, %v822
  %v1070 = vmul.f32 %v824, %v824
  %v1071 = vadd.f32 %v1063, %v1067
  %v1072 = vadd.f32 %v1064, %v1068
  %v1073 = vadd.f32 %v1065, %v1069
  %v1074 = vadd.f32 %v1066, %v1070
  %v1075 = vmul.f32 %v958, %v958
  %v1076 = vmul.f32 %v960, %v960
  %v1077 = vmul.f32 %v1029, %v1029
  %v1078 = vmul.f32 %v1031, %v1031
  %v1079 = vadd.f32 %v1071, %v1075
  %v1080 = vadd.f32 %v1072, %v1076
  %v1081 = vadd.f32 %v1073, %v1077
  %v1082 = vadd.f32 %v1074, %v1078
  %v1083 = vsel %vm202, %v1079, 0.0
  %v1084 = vsel %vm202, %v1080, 0.0
  %v1085 = vadd.f32 %v1083, %v1084
  %v1086 = vsel %vm202, %v1081, 0.0
  %v1087 = vadd.f32 %v1085, %v1086
  %v1088 = vsel %vm1050, %v1082, 0.0
  %v1089 = vadd.f32 %v1087, %v1088
  %1090 = vadd.xlane.f32.xlu0 %v1089
  %v1091 = vpop.xlane.xlu0 %1090
  %v1092 = vmul.f32 %v1054, 0.0006377551
  %v1093 = vmul.f32 %v1091, 0.0006377551
  %v1094 = vmul.f32 %v1092, %v1092
  %v1095 = vsub.f32 %v1093, %v1094
  %v1096 = vmax.f32 %v1095, 0.0
  %v1097 = vld [vmem:[%s6] sm:$0x3f]
  %v1098 = vadd.f32 %v1096, 1e-05
  %v1099 = vrsqrt.pop %v1098
  %v1100 = vmul.f32 %v1097, %v1099
  %v1101 = vld [vmem:[%s7] sm:$0x3f]
  %v1102 = vmul.f32 %v1092, %v1100
  %v1103 = vsub.f32 %v1101, %v1102
  %1105 = vset.pattern.permute.xlu0 0
  %1106 = vperm.xlu0 %1105, %v1100
  %v1107 = vpop.permute.xlu0 %1106
  %v1109 = vmul.f32 %v337, %v1107
  %v1110 = vmul.f32 %v339, %v1107
  %v1111 = vmul.f32 %v408, %v1107
  %v1112 = vmul.f32 %v410, %v1107
  %1114 = vset.pattern.permute.xlu0 0
  %1115 = vperm.xlu0 %1114, %v1103
  %v1116 = vpop.permute.xlu0 %1115
  %v1118 = vadd.f32 %v1109, %v1116
  %v1119 = vadd.f32 %v1110, %v1116
  %v1120 = vadd.f32 %v1111, %v1116
  %v1121 = vadd.f32 %v1112, %v1116
  %v1122 = vmul.f32 %v544, %v1107
  %v1123 = vmul.f32 %v546, %v1107
  %v1124 = vmul.f32 %v615, %v1107
  %v1125 = vmul.f32 %v617, %v1107
  %v1126 = vadd.f32 %v1122, %v1116
  %v1127 = vadd.f32 %v1123, %v1116
  %v1128 = vadd.f32 %v1124, %v1116
  %v1129 = vadd.f32 %v1125, %v1116
  %v1130 = vmax.f32 %v1118, %v1126
  %v1131 = vmax.f32 %v1119, %v1127
  %v1132 = vmax.f32 %v1120, %v1128
  %v1133 = vmax.f32 %v1121, %v1129
  %v1134 = vmul.f32 %v751, %v1107
  %v1135 = vmul.f32 %v753, %v1107
  %v1136 = vmul.f32 %v822, %v1107
  %v1137 = vmul.f32 %v824, %v1107
  %v1138 = vadd.f32 %v1134, %v1116
  %v1139 = vadd.f32 %v1135, %v1116
  %v1140 = vadd.f32 %v1136, %v1116
  %v1141 = vadd.f32 %v1137, %v1116
  %v1142 = vmul.f32 %v958, %v1107
  %v1143 = vmul.f32 %v960, %v1107
  %v1144 = vmul.f32 %v1029, %v1107
  %v1145 = vmul.f32 %v1031, %v1107
  %v1146 = vadd.f32 %v1142, %v1116
  %v1147 = vadd.f32 %v1143, %v1116
  %v1148 = vadd.f32 %v1144, %v1116
  %v1149 = vadd.f32 %v1145, %v1116
  %v1150 = vmax.f32 %v1138, %v1146
  %v1151 = vmax.f32 %v1139, %v1147
  %v1152 = vmax.f32 %v1140, %v1148
  %v1153 = vmax.f32 %v1141, %v1149
  %v1154 = vmax.f32 %v1130, %v1150
  %v1155 = vmax.f32 %v1131, %v1151
  %v1156 = vmax.f32 %v1132, %v1152
  %v1157 = vmax.f32 %v1133, %v1153
  %v1158 = vmax.f32 %v1154, 0.0
  %v1159 = vmax.f32 %v1155, 0.0
  %v1160 = vmax.f32 %v1156, 0.0
  %v1161 = vmax.f32 %v1157, 0.0
  %1162 = vst [vmem:[%s8] sm:$0x3f] %v1158
  %1163 = vst [vmem:[%s8 + $0x8] sm:$0x3f] %v1159
  %1164 = vst [vmem:[%s8 + $0x10] sm:$0x3f] %v1160
  %1165 = vst.msk [vmem:[%s8 + $0x18] sm:$0x3f] %vm1050, %v1161
  // Predicated region
  $region34: #{lenet_forward.2} parent=0 // pred_check
    _
  $region35: #{lenet_forward.2} parent=0 // pred_check_branch
    %1167 = sbr.rel (0) target = $region37
  $region36: #{lenet_forward.2} parent=0 // pred_region
    _
  $region37: #{lenet_forward.2} parent=0 // pred_fallthru
    _
  // Predicated region
  $region38: #{lenet_forward.2} parent=0 // pred_check
    _
  $region39: #{lenet_forward.2} parent=0 // pred_check_branch
    %1169 = sbr.rel (0) target = $region41
  $region40: #{lenet_forward.2} parent=0 // pred_region
    _
  $region41: #{lenet_forward.2} parent=0 // pred_fallthru
    _

// kernel: lenet_forward.3
$region0: #{lenet_forward.3}
  #allocation0 [shape = 'u32[]', space=smem, size = 0x4, offset = 0x4, fixed_abs, tag = 'smem constant byte address 0x4 - core index']
  #allocation1 [shape = 'u32[144,128]{1,0:T(1,128)}', space=vmem, size = 0x12000, scoped, tag = 'internal scratch']
  #allocation2 [shape = 'f32[16,50]{1,0:T(8,128)}', space=vmem, size = 0x2000, scoped, tag = 'scratch operand']
  #allocation3 [shape = 'f32[2,400]{1,0:T(2,128)}', space=vmem, size = 0x1000, scoped, tag = 'scratch operand']
  %s0 = inlined_call_operand.vmem [shape: f32[4,256,50], index: 0, kind: input, shape index: {}]
  %s1 = inlined_call_operand.vmem [shape: f32[16,256], index: 1, kind: input, shape index: {}]
  %s2 = inlined_call_operand.vmem [shape: f32[16,1], index: 2, kind: input, shape index: {}]
  %s3 = inlined_call_operand.vmem [shape: f32[16,1], index: 3, kind: input, shape index: {}]
  %s4 = inlined_call_operand.vmem [shape: f32[400,120], index: 4, kind: input, shape index: {}]
  %s5 = inlined_call_operand.vmem [shape: f32[1,120], index: 5, kind: input, shape index: {}]
  %s6 = inlined_call_operand.vmem [shape: f32[120,84], index: 6, kind: input, shape index: {}]
  %s7 = inlined_call_operand.vmem [shape: f32[1,84], index: 7, kind: input, shape index: {}]
  %s8 = inlined_call_operand.vmem [shape: f32[84,10], index: 8, kind: input, shape index: {}]
  %s9 = inlined_call_operand.vmem [shape: f32[1,10], index: 9, kind: input, shape index: {}]
  %s10 = inlined_call_operand.hbm [shape: f32[2,10], index: 10, kind: output, shape index: {}]
  %s11 = sld [smem:[#allocation0]]
  $region50: #{lenet_forward.3} parent=0
    _
  %s13 = ssub.s32 1, %s11
  %s14 = scalar_select 0, %s13, %s11
  $region1: #{lenet_forward.3} parent=0
    #allocation4 [shape = 'u8[1024]{0}', space=vmem, size = 0x400, scoped, tag = 'output window, operand 0, single buffered']
    #allocation5 [shape = 's32[1]{0}', space=sflag, size = 0x4, scoped, tag = 'scoped memory for lenet_forward.3']
    %15 = vsyncpa [#allocation5], 0
    // Predicated region
    $region2: #{lenet_forward.3} parent=1 // pred_check
      _
    $region3: #{lenet_forward.3} parent=1 // pred_check_branch
      %17 = sbr.rel (0) target = $region5
    $region4: #{lenet_forward.3} parent=1 // pred_region
      _
    $region5: #{lenet_forward.3} parent=1 // pred_fallthru
      _
    // Predicated region
    $region6: #{lenet_forward.3} parent=1 // pred_check
      _
    $region7: #{lenet_forward.3} parent=1 // pred_check_branch
      %19 = sbr.rel (0) target = $region9
    $region8: #{lenet_forward.3} parent=1 // pred_region
      _
    $region9: #{lenet_forward.3} parent=1 // pred_fallthru
      _
    // Predicated region
    $region10: #{lenet_forward.3} parent=1 // pred_check
      _
    $region11: #{lenet_forward.3} parent=1 // pred_check_branch
      %21 = sbr.rel (0) target = $region13
    $region12: #{lenet_forward.3} parent=1 // pred_region
      _
    $region13: #{lenet_forward.3} parent=1 // pred_fallthru
      _
    // Predicated region
    $region14: #{lenet_forward.3} parent=1 // pred_check
      _
    $region15: #{lenet_forward.3} parent=1 // pred_check_branch
      %23 = sbr.rel (0) target = $region17
    $region16: #{lenet_forward.3} parent=1 // pred_region
      _
    $region17: #{lenet_forward.3} parent=1 // pred_fallthru
      _
    // Predicated region
    $region18: #{lenet_forward.3} parent=1 // pred_check
      _
    $region19: #{lenet_forward.3} parent=1 // pred_check_branch
      %25 = sbr.rel (0) target = $region21
    $region20: #{lenet_forward.3} parent=1 // pred_region
      _
    $region21: #{lenet_forward.3} parent=1 // pred_fallthru
      _
    // Predicated region
    $region22: #{lenet_forward.3} parent=1 // pred_check
      _
    $region23: #{lenet_forward.3} parent=1 // pred_check_branch
      %27 = sbr.rel (0) target = $region25
    $region24: #{lenet_forward.3} parent=1 // pred_region
      _
    $region25: #{lenet_forward.3} parent=1 // pred_fallthru
      _
    // Predicated region
    $region26: #{lenet_forward.3} parent=1 // pred_check
      _
    $region27: #{lenet_forward.3} parent=1 // pred_check_branch
      %29 = sbr.rel (0) target = $region29
    $region28: #{lenet_forward.3} parent=1 // pred_region
      _
    $region29: #{lenet_forward.3} parent=1 // pred_fallthru
      _
    // Predicated region
    $region30: #{lenet_forward.3} parent=1 // pred_check
      _
    $region31: #{lenet_forward.3} parent=1 // pred_check_branch
      %31 = sbr.rel (0) target = $region33
    $region32: #{lenet_forward.3} parent=1 // pred_region
      _
    $region33: #{lenet_forward.3} parent=1 // pred_fallthru
      _
    // Predicated region
    $region34: #{lenet_forward.3} parent=1 // pred_check
      _
    $region35: #{lenet_forward.3} parent=1 // pred_check_branch
      %33 = sbr.rel (0) target = $region37
    $region36: #{lenet_forward.3} parent=1 // pred_region
      _
    $region37: #{lenet_forward.3} parent=1 // pred_fallthru
      _
    // Predicated region
    $region38: #{lenet_forward.3} parent=1 // pred_check
      _
    $region39: #{lenet_forward.3} parent=1 // pred_check_branch
      %35 = sbr.rel (0) target = $region41
    $region40: #{lenet_forward.3} parent=1 // pred_region
      _
    $region41: #{lenet_forward.3} parent=1 // pred_fallthru
      _
    %v36 = vld [vmem:[%s1] sm:$0xff]
    %v37 = vld [vmem:[%s1 + $0x8] sm:$0xff]
    %v38 = vld [vmem:[%s1 + $0x10] sm:$0xff]
    %v39 = vld [vmem:[%s1 + $0x18] sm:$0xff]
    %v40 = vld [vmem:[%s0] sm:$0xff]
    %v41 = vld [vmem:[%s0 + $0x8] sm:$0xff]
    %v42 = vld [vmem:[%s0 + $0x10] sm:$0xff]
    %v43 = vld [vmem:[%s0 + $0x18] sm:$0xff]
    %v44 = vld [vmem:[%s0 + $0x20] sm:$0xff]
    %v45 = vld [vmem:[%s0 + $0x28] sm:$0xff]
    %v46 = vld [vmem:[%s0 + $0x30] sm:$0xff]
    %v47 = vld [vmem:[%s0 + $0x38] sm:$0xff]
    %v48 = vld [vmem:[%s0 + $0x40] sm:$0xff]
    %v49 = vld [vmem:[%s0 + $0x48] sm:$0xff]
    %v50 = vld [vmem:[%s0 + $0x50] sm:$0xff]
    %v51 = vld [vmem:[%s0 + $0x58] sm:$0xff]
    %v52 = vld [vmem:[%s0 + $0x60] sm:$0xff]
    %v53 = vld [vmem:[%s0 + $0x68] sm:$0xff]
    %v54 = vld [vmem:[%s0 + $0x70] sm:$0xff]
    %v55 = vld [vmem:[%s0 + $0x78] sm:$0xff]
    %v56 = vld [vmem:[%s0 + $0x80] sm:$0xff]
    %v57 = vld [vmem:[%s0 + $0x88] sm:$0xff]
    %v58 = vld [vmem:[%s0 + $0x90] sm:$0xff]
    %v59 = vld [vmem:[%s0 + $0x98] sm:$0xff]
    %v60 = vld [vmem:[%s0 + $0xa0] sm:$0xff]
    %v61 = vld [vmem:[%s0 + $0xa8] sm:$0xff]
    %v62 = vld [vmem:[%s0 + $0xb0] sm:$0xff]
    %v63 = vld [vmem:[%s0 + $0xb8] sm:$0xff]
    %v64 = vld [vmem:[%s0 + $0xc0] sm:$0xff]
    %v65 = vld [vmem:[%s0 + $0xc8] sm:$0xff]
    %v66 = vld [vmem:[%s0 + $0xd0] sm:$0xff]
    %v67 = vld [vmem:[%s0 + $0xd8] sm:$0xff]
    %v68 = vld [vmem:[%s0 + $0xe0] sm:$0xff]
    %v69 = vld [vmem:[%s0 + $0xe8] sm:$0xff]
    %v70 = vld [vmem:[%s0 + $0xf0] sm:$0xff]
    %v71 = vld [vmem:[%s0 + $0xf8] sm:$0xff]
    %72 = vmatprep.subr.mxu0 0.0
    %73 = vmatpush1.msra.mxu0 %v40
    %74 = vmatprep.subr.mxu0 0.0
    %75 = vmatpush1.msra.mxu0 %v41
    %76 = vmatprep.subr.mxu0 0.0
    %77 = vmatpush1.msra.mxu0 %v42
    %78 = vmatprep.subr.mxu0 0.0
    %79 = vmatpush1.msra.mxu0 %v43
    %80 = vmatprep.subr.mxu0 0.0
    %81 = vmatpush1.msra.mxu0 %v44
    %82 = vmatprep.subr.mxu0 0.0
    %83 = vmatpush1.msra.mxu0 %v45
    %84 = vmatprep.subr.mxu0 0.0
    %85 = vmatpush1.msra.mxu0 %v46
    %86 = vmatprep.subr.mxu0 0.0
    %87 = vmatpush1.msra.mxu0 %v47
    %88 = vmatprep.subr.mxu0 0.0
    %89 = vmatpush1.msra.mxu0 %v48
    %90 = vmatprep.subr.mxu0 0.0
    %91 = vmatpush1.msra.mxu0 %v49
    %92 = vmatprep.subr.mxu0 0.0
    %93 = vmatpush1.msra.mxu0 %v50
    %94 = vmatprep.subr.mxu0 0.0
    %95 = vmatpush1.msra.mxu0 %v51
    %96 = vmatprep.subr.mxu0 0.0
    %97 = vmatpush1.msra.mxu0 %v52
    %98 = vmatprep.subr.mxu0 0.0
    %99 = vmatpush1.msra.mxu0 %v53
    %100 = vmatprep.subr.mxu0 0.0
    %101 = vmatpush1.msra.mxu0 %v54
    %102 = vmatprep.subr.mxu0 0.0
    %103 = vmatpush1.msra.mxu0 %v55
    %104 = vmatprep.subr.mxu0 0.0
    %105 = vmatpush1.msra.mxu0 %v56
    %106 = vmatprep.subr.mxu0 0.0
    %107 = vmatpush1.msra.mxu0 %v57
    %108 = vmatprep.subr.mxu0 0.0
    %109 = vmatpush1.msra.mxu0 %v58
    %110 = vmatprep.subr.mxu0 0.0
    %111 = vmatpush1.msra.mxu0 %v59
    %112 = vmatprep.subr.mxu0 0.0
    %113 = vmatpush1.msra.mxu0 %v60
    %114 = vmatprep.subr.mxu0 0.0
    %115 = vmatpush1.msra.mxu0 %v61
    %116 = vmatprep.subr.mxu0 0.0
    %117 = vmatpush1.msra.mxu0 %v62
    %118 = vmatprep.subr.mxu0 0.0
    %119 = vmatpush1.msra.mxu0 %v63
    %120 = vmatprep.subr.mxu0 0.0
    %121 = vmatpush1.msra.mxu0 %v64
    %122 = vmatprep.subr.mxu0 0.0
    %123 = vmatpush1.msra.mxu0 %v65
    %124 = vmatprep.subr.mxu0 0.0
    %125 = vmatpush1.msra.mxu0 %v66
    %126 = vmatprep.subr.mxu0 0.0
    %127 = vmatpush1.msra.mxu0 %v67
    %128 = vmatprep.subr.mxu0 0.0
    %129 = vmatpush1.msra.mxu0 %v68
    %130 = vmatprep.subr.mxu0 0.0
    %131 = vmatpush1.msra.mxu0 %v69
    %132 = vmatprep.subr.mxu0 0.0
    %133 = vmatpush1.msra.mxu0 %v70
    %134 = vmatprep.subr.mxu0 0.0
    %135 = vmatpush1.msra.mxu0 %v71
    %136 = vmatprep.mubr.f32.mxu0 %v37
    %137 = vmatmul.mubr.f32.gmra.mrb[0].mxu0 %v36
    %v138 = vpop.f32.mrb[0].mxu0
    %v139 = vadd.f32 0.0, %v138
    %v140 = vpop.f32.mrb[0].mxu0
    %141 = vmatprep.mubr.f32.mxu0 %v39
    %142 = vmatmul.mubr.f32.gmra.mrb[0].mxu0 %v38
    %v143 = vpop.f32.mrb[0].mxu0
    %v144 = vadd.f32 0.0, %v143
    %v145 = vpop.f32.mrb[0].mxu0
    %146 = vdwg.mxu0
    %s147 = scalar_lea.vmem %s0, 256
    %v148 = vld [vmem:[%s147] sm:$0xff]
    %v149 = vld [vmem:[%s147 + $0x8] sm:$0xff]
    %v150 = vld [vmem:[%s147 + $0x10] sm:$0xff]
    %v151 = vld [vmem:[%s147 + $0x18] sm:$0xff]
    %v152 = vld [vmem:[%s147 + $0x20] sm:$0xff]
    %v153 = vld [vmem:[%s147 + $0x28] sm:$0xff]
    %v154 = vld [vmem:[%s147 + $0x30] sm:$0xff]
    %v155 = vld [vmem:[%s147 + $0x38] sm:$0xff]
    %v156 = vld [vmem:[%s147 + $0x40] sm:$0xff]
    %v157 = vld [vmem:[%s147 + $0x48] sm:$0xff]
    %v158 = vld [vmem:[%s147 + $0x50] sm:$0xff]
    %v159 = vld [vmem:[%s147 + $0x58] sm:$0xff]
    %v160 = vld [vmem:[%s147 + $0x60] sm:$0xff]
    %v161 = vld [vmem:[%s147 + $0x68] sm:$0xff]
    %v162 = vld [vmem:[%s147 + $0x70] sm:$0xff]
    %v163 = vld [vmem:[%s147 + $0x78] sm:$0xff]
    %v164 = vld [vmem:[%s147 + $0x80] sm:$0xff]
    %v165 = vld [vmem:[%s147 + $0x88] sm:$0xff]
    %v166 = vld [vmem:[%s147 + $0x90] sm:$0xff]
    %v167 = vld [vmem:[%s147 + $0x98] sm:$0xff]
    %v168 = vld [vmem:[%s147 + $0xa0] sm:$0xff]
    %v169 = vld [vmem:[%s147 + $0xa8] sm:$0xff]
    %v170 = vld [vmem:[%s147 + $0xb0] sm:$0xff]
    %v171 = vld [vmem:[%s147 + $0xb8] sm:$0xff]
    %v172 = vld [vmem:[%s147 + $0xc0] sm:$0xff]
    %v173 = vld [vmem:[%s147 + $0xc8] sm:$0xff]
    %v174 = vld [vmem:[%s147 + $0xd0] sm:$0xff]
    %v175 = vld [vmem:[%s147 + $0xd8] sm:$0xff]
    %v176 = vld [vmem:[%s147 + $0xe0] sm:$0xff]
    %v177 = vld [vmem:[%s147 + $0xe8] sm:$0xff]
    %v178 = vld [vmem:[%s147 + $0xf0] sm:$0xff]
    %v179 = vld [vmem:[%s147 + $0xf8] sm:$0xff]
    %180 = vmatprep.subr.mxu0 0.0
    %181 = vmatpush1.msra.mxu0 %v148
    %182 = vmatprep.subr.mxu0 0.0
    %183 = vmatpush1.msra.mxu0 %v149
    %184 = vmatprep.subr.mxu0 0.0
    %185 = vmatpush1.msra.mxu0 %v150
    %186 = vmatprep.subr.mxu0 0.0
    %187 = vmatpush1.msra.mxu0 %v151
    %188 = vmatprep.subr.mxu0 0.0
    %189 = vmatpush1.msra.mxu0 %v152
    %190 = vmatprep.subr.mxu0 0.0
    %191 = vmatpush1.msra.mxu0 %v153
    %192 = vmatprep.subr.mxu0 0.0
    %193 = vmatpush1.msra.mxu0 %v154
    %194 = vmatprep.subr.mxu0 0.0
    %195 = vmatpush1.msra.mxu0 %v155
    %196 = vmatprep.subr.mxu0 0.0
    %197 = vmatpush1.msra.mxu0 %v156
    %198 = vmatprep.subr.mxu0 0.0
    %199 = vmatpush1.msra.mxu0 %v157
    %200 = vmatprep.subr.mxu0 0.0
    %201 = vmatpush1.msra.mxu0 %v158
    %202 = vmatprep.subr.mxu0 0.0
    %203 = vmatpush1.msra.mxu0 %v159
    %204 = vmatprep.subr.mxu0 0.0
    %205 = vmatpush1.msra.mxu0 %v160
    %206 = vmatprep.subr.mxu0 0.0
    %207 = vmatpush1.msra.mxu0 %v161
    %208 = vmatprep.subr.mxu0 0.0
    %209 = vmatpush1.msra.mxu0 %v162
    %210 = vmatprep.subr.mxu0 0.0
    %211 = vmatpush1.msra.mxu0 %v163
    %212 = vmatprep.subr.mxu0 0.0
    %213 = vmatpush1.msra.mxu0 %v164
    %214 = vmatprep.subr.mxu0 0.0
    %215 = vmatpush1.msra.mxu0 %v165
    %216 = vmatprep.subr.mxu0 0.0
    %217 = vmatpush1.msra.mxu0 %v166
    %218 = vmatprep.subr.mxu0 0.0
    %219 = vmatpush1.msra.mxu0 %v167
    %220 = vmatprep.subr.mxu0 0.0
    %221 = vmatpush1.msra.mxu0 %v168
    %222 = vmatprep.subr.mxu0 0.0
    %223 = vmatpush1.msra.mxu0 %v169
    %224 = vmatprep.subr.mxu0 0.0
    %225 = vmatpush1.msra.mxu0 %v170
    %226 = vmatprep.subr.mxu0 0.0
    %227 = vmatpush1.msra.mxu0 %v171
    %228 = vmatprep.subr.mxu0 0.0
    %229 = vmatpush1.msra.mxu0 %v172
    %230 = vmatprep.subr.mxu0 0.0
    %231 = vmatpush1.msra.mxu0 %v173
    %232 = vmatprep.subr.mxu0 0.0
    %233 = vmatpush1.msra.mxu0 %v174
    %234 = vmatprep.subr.mxu0 0.0
    %235 = vmatpush1.msra.mxu0 %v175
    %236 = vmatprep.subr.mxu0 0.0
    %237 = vmatpush1.msra.mxu0 %v176
    %238 = vmatprep.subr.mxu0 0.0
    %239 = vmatpush1.msra.mxu0 %v177
    %240 = vmatprep.subr.mxu0 0.0
    %241 = vmatpush1.msra.mxu0 %v178
    %242 = vmatprep.subr.mxu0 0.0
    %243 = vmatpush1.msra.mxu0 %v179
    %244 = vmatprep.mubr.f32.mxu0 %v37
    %245 = vmatmul.mubr.f32.gmra.mrb[0].mxu0 %v36
    %v246 = vpop.f32.mrb[0].mxu0
    %v247 = vadd.f32 0.0, %v246
    %v248 = vpop.f32.mrb[0].mxu0
    %249 = vmatprep.mubr.f32.mxu0 %v39
    %250 = vmatmul.mubr.f32.gmra.mrb[0].mxu0 %v38
    %v251 = vpop.f32.mrb[0].mxu0
    %v252 = vadd.f32 0.0, %v251
    %v253 = vpop.f32.mrb[0].mxu0
    %254 = vdwg.mxu0
    %s255 = scalar_lea.vmem %s0, 512
    %v256 = vld [vmem:[%s255] sm:$0xff]
    %v257 = vld [vmem:[%s255 + $0x8] sm:$0xff]
    %v258 = vld [vmem:[%s255 + $0x10] sm:$0xff]
    %v259 = vld [vmem:[%s255 + $0x18] sm:$0xff]
    %v260 = vld [vmem:[%s255 + $0x20] sm:$0xff]
    %v261 = vld [vmem:[%s255 + $0x28] sm:$0xff]
    %v262 = vld [vmem:[%s255 + $0x30] sm:$0xff]
    %v263 = vld [vmem:[%s255 + $0x38] sm:$0xff]
    %v264 = vld [vmem:[%s255 + $0x40] sm:$0xff]
    %v265 = vld [vmem:[%s255 + $0x48] sm:$0xff]
    %v266 = vld [vmem:[%s255 + $0x50] sm:$0xff]
    %v267 = vld [vmem:[%s255 + $0x58] sm:$0xff]
    %v268 = vld [vmem:[%s255 + $0x60] sm:$0xff]
    %v269 = vld [vmem:[%s255 + $0x68] sm:$0xff]
    %v270 = vld [vmem:[%s255 + $0x70] sm:$0xff]
    %v271 = vld [vmem:[%s255 + $0x78] sm:$0xff]
    %v272 = vld [vmem:[%s255 + $0x80] sm:$0xff]
    %v273 = vld [vmem:[%s255 + $0x88] sm:$0xff]
    %v274 = vld [vmem:[%s255 + $0x90] sm:$0xff]
    %v275 = vld [vmem:[%s255 + $0x98] sm:$0xff]
    %v276 = vld [vmem:[%s255 + $0xa0] sm:$0xff]
    %v277 = vld [vmem:[%s255 + $0xa8] sm:$0xff]
    %v278 = vld [vmem:[%s255 + $0xb0] sm:$0xff]
    %v279 = vld [vmem:[%s255 + $0xb8] sm:$0xff]
    %v280 = vld [vmem:[%s255 + $0xc0] sm:$0xff]
    %v281 = vld [vmem:[%s255 + $0xc8] sm:$0xff]
    %v282 = vld [vmem:[%s255 + $0xd0] sm:$0xff]
    %v283 = vld [vmem:[%s255 + $0xd8] sm:$0xff]
    %v284 = vld [vmem:[%s255 + $0xe0] sm:$0xff]
    %v285 = vld [vmem:[%s255 + $0xe8] sm:$0xff]
    %v286 = vld [vmem:[%s255 + $0xf0] sm:$0xff]
    %v287 = vld [vmem:[%s255 + $0xf8] sm:$0xff]
    %288 = vmatprep.subr.mxu0 0.0
    %289 = vmatpush1.msra.mxu0 %v256
    %290 = vmatprep.subr.mxu0 0.0
    %291 = vmatpush1.msra.mxu0 %v257
    %292 = vmatprep.subr.mxu0 0.0
    %293 = vmatpush1.msra.mxu0 %v258
    %294 = vmatprep.subr.mxu0 0.0
    %295 = vmatpush1.msra.mxu0 %v259
    %296 = vmatprep.subr.mxu0 0.0
    %297 = vmatpush1.msra.mxu0 %v260
    %298 = vmatprep.subr.mxu0 0.0
    %299 = vmatpush1.msra.mxu0 %v261
    %300 = vmatprep.subr.mxu0 0.0
    %301 = vmatpush1.msra.mxu0 %v262
    %302 = vmatprep.subr.mxu0 0.0
    %303 = vmatpush1.msra.mxu0 %v263
    %304 = vmatprep.subr.mxu0 0.0
    %305 = vmatpush1.msra.mxu0 %v264
    %306 = vmatprep.subr.mxu0 0.0
    %307 = vmatpush1.msra.mxu0 %v265
    %308 = vmatprep.subr.mxu0 0.0
    %309 = vmatpush1.msra.mxu0 %v266
    %310 = vmatprep.subr.mxu0 0.0
    %311 = vmatpush1.msra.mxu0 %v267
    %312 = vmatprep.subr.mxu0 0.0
    %313 = vmatpush1.msra.mxu0 %v268
    %314 = vmatprep.subr.mxu0 0.0
    %315 = vmatpush1.msra.mxu0 %v269
    %316 = vmatprep.subr.mxu0 0.0
    %317 = vmatpush1.msra.mxu0 %v270
    %318 = vmatprep.subr.mxu0 0.0
    %319 = vmatpush1.msra.mxu0 %v271
    %320 = vmatprep.subr.mxu0 0.0
    %321 = vmatpush1.msra.mxu0 %v272
    %322 = vmatprep.subr.mxu0 0.0
    %323 = vmatpush1.msra.mxu0 %v273
    %324 = vmatprep.subr.mxu0 0.0
    %325 = vmatpush1.msra.mxu0 %v274
    %326 = vmatprep.subr.mxu0 0.0
    %327 = vmatpush1.msra.mxu0 %v275
    %328 = vmatprep.subr.mxu0 0.0
    %329 = vmatpush1.msra.mxu0 %v276
    %330 = vmatprep.subr.mxu0 0.0
    %331 = vmatpush1.msra.mxu0 %v277
    %332 = vmatprep.subr.mxu0 0.0
    %333 = vmatpush1.msra.mxu0 %v278
    %334 = vmatprep.subr.mxu0 0.0
    %335 = vmatpush1.msra.mxu0 %v279
    %336 = vmatprep.subr.mxu0 0.0
    %337 = vmatpush1.msra.mxu0 %v280
    %338 = vmatprep.subr.mxu0 0.0
    %339 = vmatpush1.msra.mxu0 %v281
    %340 = vmatprep.subr.mxu0 0.0
    %341 = vmatpush1.msra.mxu0 %v282
    %342 = vmatprep.subr.mxu0 0.0
    %343 = vmatpush1.msra.mxu0 %v283
    %344 = vmatprep.subr.mxu0 0.0
    %345 = vmatpush1.msra.mxu0 %v284
    %346 = vmatprep.subr.mxu0 0.0
    %347 = vmatpush1.msra.mxu0 %v285
    %348 = vmatprep.subr.mxu0 0.0
    %349 = vmatpush1.msra.mxu0 %v286
    %350 = vmatprep.subr.mxu0 0.0
    %351 = vmatpush1.msra.mxu0 %v287
    %352 = vmatprep.mubr.f32.mxu0 %v37
    %353 = vmatmul.mubr.f32.gmra.mrb[0].mxu0 %v36
    %v354 = vpop.f32.mrb[0].mxu0
    %v355 = vadd.f32 0.0, %v354
    %v356 = vpop.f32.mrb[0].mxu0
    %357 = vmatprep.mubr.f32.mxu0 %v39
    %358 = vmatmul.mubr.f32.gmra.mrb[0].mxu0 %v38
    %v359 = vpop.f32.mrb[0].mxu0
    %v360 = vadd.f32 0.0, %v359
    %v361 = vpop.f32.mrb[0].mxu0
    %362 = vdwg.mxu0
    %s363 = scalar_lea.vmem %s0, 768
    %v364 = vld [vmem:[%s363] sm:$0xff]
    %v365 = vld [vmem:[%s363 + $0x8] sm:$0xff]
    %v366 = vld [vmem:[%s363 + $0x10] sm:$0xff]
    %v367 = vld [vmem:[%s363 + $0x18] sm:$0xff]
    %v368 = vld [vmem:[%s363 + $0x20] sm:$0xff]
    %v369 = vld [vmem:[%s363 + $0x28] sm:$0xff]
    %v370 = vld [vmem:[%s363 + $0x30] sm:$0xff]
    %v371 = vld [vmem:[%s363 + $0x38] sm:$0xff]
    %v372 = vld [vmem:[%s363 + $0x40] sm:$0xff]
    %v373 = vld [vmem:[%s363 + $0x48] sm:$0xff]
    %v374 = vld [vmem:[%s363 + $0x50] sm:$0xff]
    %v375 = vld [vmem:[%s363 + $0x58] sm:$0xff]
    %v376 = vld [vmem:[%s363 + $0x60] sm:$0xff]
    %v377 = vld [vmem:[%s363 + $0x68] sm:$0xff]
    %v378 = vld [vmem:[%s363 + $0x70] sm:$0xff]
    %v379 = vld [vmem:[%s363 + $0x78] sm:$0xff]
    %v380 = vld [vmem:[%s363 + $0x80] sm:$0xff]
    %v381 = vld [vmem:[%s363 + $0x88] sm:$0xff]
    %v382 = vld [vmem:[%s363 + $0x90] sm:$0xff]
    %v383 = vld [vmem:[%s363 + $0x98] sm:$0xff]
    %v384 = vld [vmem:[%s363 + $0xa0] sm:$0xff]
    %v385 = vld [vmem:[%s363 + $0xa8] sm:$0xff]
    %v386 = vld [vmem:[%s363 + $0xb0] sm:$0xff]
    %v387 = vld [vmem:[%s363 + $0xb8] sm:$0xff]
    %v388 = vld [vmem:[%s363 + $0xc0] sm:$0xff]
    %v389 = vld [vmem:[%s363 + $0xc8] sm:$0xff]
    %v390 = vld [vmem:[%s363 + $0xd0] sm:$0xff]
    %v391 = vld [vmem:[%s363 + $0xd8] sm:$0xff]
    %v392 = vld [vmem:[%s363 + $0xe0] sm:$0xff]
    %v393 = vld [vmem:[%s363 + $0xe8] sm:$0xff]
    %v394 = vld [vmem:[%s363 + $0xf0] sm:$0xff]
    %v395 = vld [vmem:[%s363 + $0xf8] sm:$0xff]
    %396 = vmatprep.subr.mxu0 0.0
    %397 = vmatpush1.msra.mxu0 %v364
    %398 = vmatprep.subr.mxu0 0.0
    %399 = vmatpush1.msra.mxu0 %v365
    %400 = vmatprep.subr.mxu0 0.0
    %401 = vmatpush1.msra.mxu0 %v366
    %402 = vmatprep.subr.mxu0 0.0
    %403 = vmatpush1.msra.mxu0 %v367
    %404 = vmatprep.subr.mxu0 0.0
    %405 = vmatpush1.msra.mxu0 %v368
    %406 = vmatprep.subr.mxu0 0.0
    %407 = vmatpush1.msra.mxu0 %v369
    %408 = vmatprep.subr.mxu0 0.0
    %409 = vmatpush1.msra.mxu0 %v370
    %410 = vmatprep.subr.mxu0 0.0
    %411 = vmatpush1.msra.mxu0 %v371
    %412 = vmatprep.subr.mxu0 0.0
    %413 = vmatpush1.msra.mxu0 %v372
    %414 = vmatprep.subr.mxu0 0.0
    %415 = vmatpush1.msra.mxu0 %v373
    %416 = vmatprep.subr.mxu0 0.0
    %417 = vmatpush1.msra.mxu0 %v374
    %418 = vmatprep.subr.mxu0 0.0
    %419 = vmatpush1.msra.mxu0 %v375
    %420 = vmatprep.subr.mxu0 0.0
    %421 = vmatpush1.msra.mxu0 %v376
    %422 = vmatprep.subr.mxu0 0.0
    %423 = vmatpush1.msra.mxu0 %v377
    %424 = vmatprep.subr.mxu0 0.0
    %425 = vmatpush1.msra.mxu0 %v378
    %426 = vmatprep.subr.mxu0 0.0
    %427 = vmatpush1.msra.mxu0 %v379
    %428 = vmatprep.subr.mxu0 0.0
    %429 = vmatpush1.msra.mxu0 %v380
    %430 = vmatprep.subr.mxu0 0.0
    %431 = vmatpush1.msra.mxu0 %v381
    %432 = vmatprep.subr.mxu0 0.0
    %433 = vmatpush1.msra.mxu0 %v382
    %434 = vmatprep.subr.mxu0 0.0
    %435 = vmatpush1.msra.mxu0 %v383
    %436 = vmatprep.subr.mxu0 0.0
    %437 = vmatpush1.msra.mxu0 %v384
    %438 = vmatprep.subr.mxu0 0.0
    %439 = vmatpush1.msra.mxu0 %v385
    %440 = vmatprep.subr.mxu0 0.0
    %441 = vmatpush1.msra.mxu0 %v386
    %442 = vmatprep.subr.mxu0 0.0
    %443 = vmatpush1.msra.mxu0 %v387
    %444 = vmatprep.subr.mxu0 0.0
    %445 = vmatpush1.msra.mxu0 %v388
    %446 = vmatprep.subr.mxu0 0.0
    %447 = vmatpush1.msra.mxu0 %v389
    %448 = vmatprep.subr.mxu0 0.0
    %449 = vmatpush1.msra.mxu0 %v390
    %450 = vmatprep.subr.mxu0 0.0
    %451 = vmatpush1.msra.mxu0 %v391
    %452 = vmatprep.subr.mxu0 0.0
    %453 = vmatpush1.msra.mxu0 %v392
    %454 = vmatprep.subr.mxu0 0.0
    %455 = vmatpush1.msra.mxu0 %v393
    %456 = vmatprep.subr.mxu0 0.0
    %457 = vmatpush1.msra.mxu0 %v394
    %458 = vmatprep.subr.mxu0 0.0
    %459 = vmatpush1.msra.mxu0 %v395
    %460 = vmatprep.mubr.f32.mxu0 %v37
    %461 = vmatmul.mubr.f32.gmra.mrb[0].mxu0 %v36
    %v462 = vpop.f32.mrb[0].mxu0
    %v463 = vadd.f32 0.0, %v462
    %v464 = vpop.f32.mrb[0].mxu0
    %465 = vmatprep.mubr.f32.mxu0 %v39
    %466 = vmatmul.mubr.f32.gmra.mrb[0].mxu0 %v38
    %v467 = vpop.f32.mrb[0].mxu0
    %v468 = vadd.f32 0.0, %v467
    %v469 = vpop.f32.mrb[0].mxu0
    %470 = vdwg.mxu0
    %v471 = vadd.f32 %v139, %v247
    %v472 = vadd.f32 %v144, %v252
    %v473 = vadd.f32 %v471, %v355
    %v474 = vadd.f32 %v472, %v360
    %v475 = vadd.f32 %v473, %v463
    %v476 = vadd.f32 %v474, %v468
    %vm477 = vcmask 408576
    %v478 = vsel %vm477, %v475, 0.0
    %479 = vadd.xlane.f32.xlu0 %v478
    %v480 = vpop.xlane.xlu0 %479
    %v481 = vsel %vm477, %v476, 0.0
    %482 = vadd.xlane.f32.xlu0 %v481
    %v483 = vpop.xlane.xlu0 %482
    %v484 = vmul.f32 %v139, %v139
    %v485 = vmul.f32 %v144, %v144
    %v486 = vmul.f32 %v247, %v247
    %v487 = vmul.f32 %v252, %v252
    %v488 = vadd.f32 %v484, %v486
    %v489 = vadd.f32 %v485, %v487
    %v490 = vmul.f32 %v355, %v355
    %v491 = vmul.f32 %v360, %v360
    %v492 = vadd.f32 %v488, %v490
    %v493 = vadd.f32 %v489, %v491
    %v494 = vmul.f32 %v463, %v463
    %v495 = vmul.f32 %v468, %v468
    %v496 = vadd.f32 %v492, %v494
    %v497 = vadd.f32 %v493, %v495
    %v498 = vsel %vm477, %v496, 0.0
    %499 = vadd.xlane.f32.xlu0 %v498
    %v500 = vpop.xlane.xlu0 %499
    %v501 = vsel %vm477, %v497, 0.0
    %502 = vadd.xlane.f32.xlu0 %v501
    %v503 = vpop.xlane.xlu0 %502
    %v504 = vmul.f32 %v480, 0.005
    %v505 = vmul.f32 %v483, 0.005
    %v506 = vmul.f32 %v500, 0.005
    %v507 = vmul.f32 %v503, 0.005
    %v508 = vmul.f32 %v504, %v504
    %v509 = vmul.f32 %v505, %v505
    %v510 = vsub.f32 %v506, %v508
    %v511 = vsub.f32 %v507, %v509
    %v512 = vmax.f32 %v510, 0.0
    %v513 = vmax.f32 %v511, 0.0
    %v514 = vld [vmem:[%s2] sm:$0xff]
    %v515 = vld [vmem:[%s2 + $0x8] sm:$0xff]
    %v516 = vadd.f32 %v512, 1e-05
    %v517 = vadd.f32 %v513, 1e-05
    %v518 = vrsqrt.pop %v516
    %v519 = vrsqrt.pop %v517
    %v520 = vmul.f32 %v514, %v518
    %v521 = vmul.f32 %v515, %v519
    %v522 = vld [vmem:[%s3] sm:$0xff]
    %v523 = vld [vmem:[%s3 + $0x8] sm:$0xff]
    %v524 = vmul.f32 %v504, %v520
    %v525 = vmul.f32 %v505, %v521
    %v526 = vsub.f32 %v522, %v524
    %v527 = vsub.f32 %v523, %v525
    %529 = vset.pattern.permute.xlu0 0
    %530 = vperm.xlu0 %529, %v520
    %v531 = vpop.permute.xlu0 %530
    %534 = vset.pattern.permute.xlu0 0
    %535 = vperm.xlu0 %534, %v521
    %v536 = vpop.permute.xlu0 %535
    %v538 = vmul.f32 %v139, %v531
    %v539 = vmul.f32 %v144, %v536
    %541 = vset.pattern.permute.xlu0 0
    %542 = vperm.xlu0 %541, %v526
    %v543 = vpop.permute.xlu0 %542
    %546 = vset.pattern.permute.xlu0 0
    %547 = vperm.xlu0 %546, %v527
    %v548 = vpop.permute.xlu0 %547
    %v550 = vadd.f32 %v538, %v543
    %v551 = vadd.f32 %v539, %v548
    %v552 = vmul.f32 %v247, %v531
    %v553 = vmul.f32 %v252, %v536
    %v554 = vadd.f32 %v552, %v543
    %v555 = vadd.f32 %v553, %v548
    %v556 = vmax.f32 %v550, %v554
    %v557 = vmax.f32 %v551, %v555
    %v558 = vmul.f32 %v355, %v531
    %v559 = vmul.f32 %v360, %v536
    %v560 = vadd.f32 %v558, %v543
    %v561 = vadd.f32 %v559, %v548
    %v562 = vmul.f32 %v463, %v531
    %v563 = vmul.f32 %v468, %v536
    %v564 = vadd.f32 %v562, %v543
    %v565 = vadd.f32 %v563, %v548
    %v566 = vmax.f32 %v560, %v564
    %v567 = vmax.f32 %v561, %v565
    %v568 = vmax.f32 %v556, %v566
    %v569 = vmax.f32 %v557, %v567
    %v570 = vmax.f32 %v568, 0.0
    %v571 = vmax.f32 %v569, 0.0
    %572 = vst.msk [vmem:[#allocation2] sm:$0xff] %vm477, %v570
    %573 = vst.msk [vmem:[#allocation2 + $0x8] sm:$0xff] %vm477, %v571
    %v574 = vld [vmem:[#allocation2] sm:$0x1]
    %vm575 = vcmask 196608
    %576 = vst.msk [vmem:[#allocation3] sm:$0x1] %vm575, %v574
    %v577 = vld [vmem:[#allocation2 + $0x1] sm:$0x1]
    %v580 = vunpack.c.l.s4 1983009808
    %v581 = vunpack.c.0.s8 %v580
    %v582 = vlaneseq
    %v583 = vshrl.u32 %v582, 7
    %v584 = vsub.s32 %v581, %v583
    %v585 = vrot.slane %v577, %v584
    %586 = vrot.lane.b32.xlu0 %v585, 25
    %v587 = vpop.permute.xlu0 %586
    %vm589 = vcmask 401608
    %590 = vst.msk [vmem:[#allocation3] sm:$0x1] %vm589, %v587
    %v591 = vld [vmem:[#allocation2 + $0x2] sm:$0x1]
    %v594 = vunpack.c.l.s4 1983009808
    %v595 = vunpack.c.0.s8 %v594
    %v596 = vlaneseq
    %v597 = vshrl.u32 %v596, 7
    %v598 = vsub.s32 %v595, %v597
    %v599 = vrot.slane %v591, %v598
    %600 = vrot.lane.b32.xlu0 %v599, 50
    %v601 = vpop.permute.xlu0 %600
    %vm603 = vcmask 606608
    %604 = vst.msk [vmem:[#allocation3] sm:$0x1] %vm603, %v601
    %v605 = vld [vmem:[#allocation2 + $0x3] sm:$0x1]
    %v608 = vunpack.c.l.s4 1983009808
    %v609 = vunpack.c.0.s8 %v608
    %v610 = vlaneseq
    %v611 = vshrl.u32 %v610, 7
    %v612 = vsub.s32 %v609, %v611
    %v613 = vrot.slane %v605, %v612
    %614 = vrot.lane.b32.xlu0 %v613, 75
    %v615 = vpop.permute.xlu0 %614
    %vm617 = vcmask 811608
    %618 = vst.msk [vmem:[#allocation3] sm:$0x1] %vm617, %v615
    %v619 = vld [vmem:[#allocation2 + $0x4] sm:$0x1]
    %v622 = vunpack.c.l.s4 1983009808
    %v623 = vunpack.c.0.s8 %v622
    %v624 = vlaneseq
    %v625 = vshrl.u32 %v624, 7
    %v626 = vsub.s32 %v623, %v625
    %v627 = vrot.slane %v619, %v626
    %628 = vrot.lane.b32.xlu0 %v627, 100
    %v629 = vpop.permute.xlu0 %628
    %vm631 = vcmask 1016608
    %632 = vst.msk [vmem:[#allocation3] sm:$0x1] %vm631, %v629
    %v633 = vld [vmem:[#allocation2 + $0x5] sm:$0x1]
    %v636 = vunpack.c.l.s4 1983009808
    %v637 = vunpack.c.0.s8 %v636
    %v638 = vlaneseq
    %v639 = vshrl.u32 %v638, 7
    %v640 = vsub.s32 %v637, %v639
    %v641 = vrot.slane %v633, %v640
    %642 = vrot.lane.b32.xlu0 %v641, 125
    %v643 = vpop.permute.xlu0 %642
    %v644 = vrot.slane %v643, 6
    %vm645 = vcmask 1022976
    %v646 = vsel %vm645, %v644, %v643
    %vm648 = vcmask 1041384
    %vm649 = vcmask 174082
    %vm650 = vmor %vm649, %vm648
    %651 = vst.msk [vmem:[#allocation3] sm:$0x5] %vm650, %v646
    %v652 = vld [vmem:[#allocation2 + $0x6] sm:$0x1]
    %v655 = vunpack.c.l.s4 1983009808
    %v656 = vunpack.c.0.s8 %v655
    %v657 = vlaneseq
    %v658 = vshrl.u32 %v657, 7
    %v659 = vsub.s32 %v656, %v658
    %v660 = vrot.slane %v652, %v659
    %661 = vrot.lane.b32.xlu0 %v660, 22
    %v662 = vpop.permute.xlu0 %661
    %vm664 = vcmask 377008
    %665 = vst.msk [vmem:[#allocation3 + $0x2] sm:$0x1] %vm664, %v662
    %v666 = vld [vmem:[#allocation2 + $0x7] sm:$0x1]
    %v669 = vunpack.c.l.s4 1983009808
    %v670 = vunpack.c.0.s8 %v669
    %v671 = vlaneseq
    %v672 = vshrl.u32 %v671, 7
    %v673 = vsub.s32 %v670, %v672
    %v674 = vrot.slane %v666, %v673
    %675 = vrot.lane.b32.xlu0 %v674, 47
    %v676 = vpop.permute.xlu0 %675
    %vm678 = vcmask 582008
    %679 = vst.msk [vmem:[#allocation3 + $0x2] sm:$0x1] %vm678, %v676
    %v680 = vld [vmem:[#allocation2 + $0x8] sm:$0x1]
    %v683 = vunpack.c.l.s4 1983009808
    %v684 = vunpack.c.0.s8 %v683
    %v685 = vlaneseq
    %v686 = vshrl.u32 %v685, 7
    %v687 = vsub.s32 %v684, %v686
    %v688 = vrot.slane %v680, %v687
    %689 = vrot.lane.b32.xlu0 %v688, 72
    %v690 = vpop.permute.xlu0 %689
    %vm692 = vcmask 787008
    %693 = vst.msk [vmem:[#allocation3 + $0x2] sm:$0x1] %vm692, %v690
    %v694 = vld [vmem:[#allocation2 + $0x9] sm:$0x1]
    %v697 = vunpack.c.l.s4 1983009808
    %v698 = vunpack.c.0.s8 %v697
    %v699 = vlaneseq
    %v700 = vshrl.u32 %v699, 7
    %v701 = vsub.s32 %v698, %v700
    %v702 = vrot.slane %v694, %v701
    %703 = vrot.lane.b32.xlu0 %v702, 97
    %v704 = vpop.permute.xlu0 %703
    %vm706 = vcmask 992008
    %707 = vst.msk [vmem:[#allocation3 + $0x2] sm:$0x1] %vm706, %v704
    %v708 = vld [vmem:[#allocation2 + $0xa] sm:$0x1]
    %v711 = vunpack.c.l.s4 1983009808
    %v712 = vunpack.c.0.s8 %v711
    %v713 = vlaneseq
    %v714 = vshrl.u32 %v713, 7
    %v715 = vsub.s32 %v712, %v714
    %v716 = vrot.slane %v708, %v715
    %717 = vrot.lane.b32.xlu0 %v716, 122
    %v718 = vpop.permute.xlu0 %717
    %v719 = vrot.slane %v718, 6
    %vm720 = vcmask 998400
    %v721 = vsel %vm720, %v719, %v718
    %vm723 = vcmask 1041360
    %vm724 = vcmask 149506
    %vm725 = vmor %vm724, %vm723
    %726 = vst.msk [vmem:[#allocation3 + $0x2] sm:$0x5] %vm725, %v721
    %v727 = vld [vmem:[#allocation2 + $0xb] sm:$0x1]
    %v730 = vunpack.c.l.s4 1983009808
    %v731 = vunpack.c.0.s8 %v730
    %v732 = vlaneseq
    %v733 = vshrl.u32 %v732, 7
    %v734 = vsub.s32 %v731, %v733
    %v735 = vrot.slane %v727, %v734
    %736 = vrot.lane.b32.xlu0 %v735, 19
    %v737 = vpop.permute.xlu0 %736
    %vm739 = vcmask 352408
    %740 = vst.msk [vmem:[#allocation3 + $0x4] sm:$0x1] %vm739, %v737
    %v741 = vld [vmem:[#allocation2 + $0xc] sm:$0x1]
    %v744 = vunpack.c.l.s4 1983009808
    %v745 = vunpack.c.0.s8 %v744
    %v746 = vlaneseq
    %v747 = vshrl.u32 %v746, 7
    %v748 = vsub.s32 %v745, %v747
    %v749 = vrot.slane %v741, %v748
    %750 = vrot.lane.b32.xlu0 %v749, 44
    %v751 = vpop.permute.xlu0 %750
    %vm753 = vcmask 557408
    %754 = vst.msk [vmem:[#allocation3 + $0x4] sm:$0x1] %vm753, %v751
    %v755 = vld [vmem:[#allocation2 + $0xd] sm:$0x1]
    %v758 = vunpack.c.l.s4 1983009808
    %v759 = vunpack.c.0.s8 %v758
    %v760 = vlaneseq
    %v761 = vshrl.u32 %v760, 7
    %v762 = vsub.s32 %v759, %v761
    %v763 = vrot.slane %v755, %v762
    %764 = vrot.lane.b32.xlu0 %v763, 69
    %v765 = vpop.permute.xlu0 %764
    %vm767 = vcmask 762408
    %768 = vst.msk [vmem:[#allocation3 + $0x4] sm:$0x1] %vm767, %v765
    %v769 = vld [vmem:[#allocation2 + $0xe] sm:$0x1]
    %v772 = vunpack.c.l.s4 1983009808
    %v773 = vunpack.c.0.s8 %v772
    %v774 = vlaneseq
    %v775 = vshrl.u32 %v774, 7
    %v776 = vsub.s32 %v773, %v775
    %v777 = vrot.slane %v769, %v776
    %778 = vrot.lane.b32.xlu0 %v777, 94
    %v779 = vpop.permute.xlu0 %778
    %vm781 = vcmask 967408
    %782 = vst.msk [vmem:[#allocation3 + $0x4] sm:$0x1] %vm781, %v779
    %v783 = vld [vmem:[#allocation2 + $0xf] sm:$0x1]
    %v786 = vunpack.c.l.s4 1983009808
    %v787 = vunpack.c.0.s8 %v786
    %v788 = vlaneseq
    %v789 = vshrl.u32 %v788, 7
    %v790 = vsub.s32 %v787, %v789
    %v791 = vrot.slane %v783, %v790
    %792 = vrot.lane.b32.xlu0 %v791, 119
    %v793 = vpop.permute.xlu0 %792
    %v794 = vrot.slane %v793, 6
    %vm795 = vcmask 973824
    %v796 = vsel %vm795, %v794, %v793
    %vm798 = vcmask 1041336
    %vm799 = vcmask 124930
    %vm800 = vmor %vm799, %vm798
    %801 = vst.msk [vmem:[#allocation3 + $0x4] sm:$0x5] %vm800, %v796
    %v802 = vld [vmem:[#allocation2] sm:$0x1]
    %v805 = vunpack.c.l.s4 1983009808
    %v806 = vunpack.c.0.s8 %v805
    %v807 = vlaneseq
    %v808 = vshrl.u32 %v807, 7
    %v809 = vsub.s32 %v806, %v808
    %v810 = vrot.slane %v802, %v809
    %811 = vrot.lane.b32.xlu0 %v810, 103
    %v812 = vpop.permute.xlu0 %811
    %814 = vst.msk [vmem:[#allocation3 + $0x1] sm:$0x1] %vm575, %v812
    %v815 = vld [vmem:[#allocation2 + $0x1] sm:$0x1]
    %816 = vst.msk [vmem:[#allocation3 + $0x1] sm:$0x1] %vm589, %v815
    %v817 = vld [vmem:[#allocation2 + $0x2] sm:$0x1]
    %v820 = vunpack.c.l.s4 1983009808
    %v821 = vunpack.c.0.s8 %v820
    %v822 = vlaneseq
    %v823 = vshrl.u32 %v822, 7
    %v824 = vsub.s32 %v821, %v823
    %v825 = vrot.slane %v817, %v824
    %826 = vrot.lane.b32.xlu0 %v825, 25
    %v827 = vpop.permute.xlu0 %826
    %829 = vst.msk [vmem:[#allocation3 + $0x1] sm:$0x1] %vm603, %v827
    %v830 = vld [vmem:[#allocation2 + $0x3] sm:$0x1]
    %v833 = vunpack.c.l.s4 1983009808
    %v834 = vunpack.c.0.s8 %v833
    %v835 = vlaneseq
    %v836 = vshrl.u32 %v835, 7
    %v837 = vsub.s32 %v834, %v836
    %v838 = vrot.slane %v830, %v837
    %839 = vrot.lane.b32.xlu0 %v838, 50
    %v840 = vpop.permute.xlu0 %839
    %842 = vst.msk [vmem:[#allocation3 + $0x1] sm:$0x1] %vm617, %v840
    %v843 = vld [vmem:[#allocation2 + $0x4] sm:$0x1]
    %v846 = vunpack.c.l.s4 1983009808
    %v847 = vunpack.c.0.s8 %v846
    %v848 = vlaneseq
    %v849 = vshrl.u32 %v848, 7
    %v850 = vsub.s32 %v847, %v849
    %v851 = vrot.slane %v843, %v850
    %852 = vrot.lane.b32.xlu0 %v851, 75
    %v853 = vpop.permute.xlu0 %852
    %855 = vst.msk [vmem:[#allocation3 + $0x1] sm:$0x1] %vm631, %v853
    %v856 = vld [vmem:[#allocation2 + $0x5] sm:$0x1]
    %v859 = vunpack.c.l.s4 1983009808
    %v860 = vunpack.c.0.s8 %v859
    %v861 = vlaneseq
    %v862 = vshrl.u32 %v861, 7
    %v863 = vsub.s32 %v860, %v862
    %v864 = vrot.slane %v856, %v863
    %865 = vrot.lane.b32.xlu0 %v864, 100
    %v866 = vpop.permute.xlu0 %865
    %v867 = vrot.slane %v866, 6
    %vm868 = vcmask 818176
    %v869 = vsel %vm868, %v867, %v866
    %871 = vst.msk [vmem:[#allocation3 + $0x1] sm:$0x5] %vm650, %v869
    %v872 = vld [vmem:[#allocation2 + $0x6] sm:$0x1]
    %v875 = vunpack.c.l.s4 1983009808
    %v876 = vunpack.c.0.s8 %v875
    %v877 = vlaneseq
    %v878 = vshrl.u32 %v877, 7
    %v879 = vsub.s32 %v876, %v878
    %v880 = vrot.slane %v872, %v879
    %881 = vrot.lane.b32.xlu0 %v880, 125
    %v882 = vpop.permute.xlu0 %881
    %884 = vst.msk [vmem:[#allocation3 + $0x3] sm:$0x1] %vm664, %v882
    %v885 = vld [vmem:[#allocation2 + $0x7] sm:$0x1]
    %v888 = vunpack.c.l.s4 1983009808
    %v889 = vunpack.c.0.s8 %v888
    %v890 = vlaneseq
    %v891 = vshrl.u32 %v890, 7
    %v892 = vsub.s32 %v889, %v891
    %v893 = vrot.slane %v885, %v892
    %894 = vrot.lane.b32.xlu0 %v893, 22
    %v895 = vpop.permute.xlu0 %894
    %897 = vst.msk [vmem:[#allocation3 + $0x3] sm:$0x1] %vm678, %v895
    %v898 = vld [vmem:[#allocation2 + $0x8] sm:$0x1]
    %v901 = vunpack.c.l.s4 1983009808
    %v902 = vunpack.c.0.s8 %v901
    %v903 = vlaneseq
    %v904 = vshrl.u32 %v903, 7
    %v905 = vsub.s32 %v902, %v904
    %v906 = vrot.slane %v898, %v905
    %907 = vrot.lane.b32.xlu0 %v906, 47
    %v908 = vpop.permute.xlu0 %907
    %910 = vst.msk [vmem:[#allocation3 + $0x3] sm:$0x1] %vm692, %v908
    %v911 = vld [vmem:[#allocation2 + $0x9] sm:$0x1]
    %v914 = vunpack.c.l.s4 1983009808
    %v915 = vunpack.c.0.s8 %v914
    %v916 = vlaneseq
    %v917 = vshrl.u32 %v916, 7
    %v918 = vsub.s32 %v915, %v917
    %v919 = vrot.slane %v911, %v918
    %920 = vrot.lane.b32.xlu0 %v919, 72
    %v921 = vpop.permute.xlu0 %920
    %923 = vst.msk [vmem:[#allocation3 + $0x3] sm:$0x1] %vm706, %v921
    %v924 = vld [vmem:[#allocation2 + $0xa] sm:$0x1]
    %v927 = vunpack.c.l.s4 1983009808
    %v928 = vunpack.c.0.s8 %v927
    %v929 = vlaneseq
    %v930 = vshrl.u32 %v929, 7
    %v931 = vsub.s32 %v928, %v930
    %v932 = vrot.slane %v924, %v931
    %933 = vrot.lane.b32.xlu0 %v932, 97
    %v934 = vpop.permute.xlu0 %933
    %v935 = vrot.slane %v934, 6
    %vm936 = vcmask 793600
    %v937 = vsel %vm936, %v935, %v934
    %939 = vst.msk [vmem:[#allocation3 + $0x3] sm:$0x5] %vm725, %v937
    %v940 = vld [vmem:[#allocation2 + $0xb] sm:$0x1]
    %v943 = vunpack.c.l.s4 1983009808
    %v944 = vunpack.c.0.s8 %v943
    %v945 = vlaneseq
    %v946 = vshrl.u32 %v945, 7
    %v947 = vsub.s32 %v944, %v946
    %v948 = vrot.slane %v940, %v947
    %949 = vrot.lane.b32.xlu0 %v948, 122
    %v950 = vpop.permute.xlu0 %949
    %952 = vst.msk [vmem:[#allocation3 + $0x5] sm:$0x1] %vm739, %v950
    %v953 = vld [vmem:[#allocation2 + $0xc] sm:$0x1]
    %v956 = vunpack.c.l.s4 1983009808
    %v957 = vunpack.c.0.s8 %v956
    %v958 = vlaneseq
    %v959 = vshrl.u32 %v958, 7
    %v960 = vsub.s32 %v957, %v959
    %v961 = vrot.slane %v953, %v960
    %962 = vrot.lane.b32.xlu0 %v961, 19
    %v963 = vpop.permute.xlu0 %962
    %965 = vst.msk [vmem:[#allocation3 + $0x5] sm:$0x1] %vm753, %v963
    %v966 = vld [vmem:[#allocation2 + $0xd] sm:$0x1]
    %v969 = vunpack.c.l.s4 1983009808
    %v970 = vunpack.c.0.s8 %v969
    %v971 = vlaneseq
    %v972 = vshrl.u32 %v971, 7
    %v973 = vsub.s32 %v970, %v972
    %v974 = vrot.slane %v966, %v973
    %975 = vrot.lane.b32.xlu0 %v974, 44
    %v976 = vpop.permute.xlu0 %975
    %978 = vst.msk [vmem:[#allocation3 + $0x5] sm:$0x1] %vm767, %v976
    %v979 = vld [vmem:[#allocation2 + $0xe] sm:$0x1]
    %v982 = vunpack.c.l.s4 1983009808
    %v983 = vunpack.c.0.s8 %v982
    %v984 = vlaneseq
    %v985 = vshrl.u32 %v984, 7
    %v986 = vsub.s32 %v983, %v985
    %v987 = vrot.slane %v979, %v986
    %988 = vrot.lane.b32.xlu0 %v987, 69
    %v989 = vpop.permute.xlu0 %988
    %991 = vst.msk [vmem:[#allocation3 + $0x5] sm:$0x1] %vm781, %v989
    %v992 = vld [vmem:[#allocation2 + $0xf] sm:$0x1]
    %v995 = vunpack.c.l.s4 1983009808
    %v996 = vunpack.c.0.s8 %v995
    %v997 = vlaneseq
    %v998 = vshrl.u32 %v997, 7
    %v999 = vsub.s32 %v996, %v998
    %v1000 = vrot.slane %v992, %v999
    %1001 = vrot.lane.b32.xlu0 %v1000, 94
    %v1002 = vpop.permute.xlu0 %1001
    %v1003 = vrot.slane %v1002, 6
    %vm1004 = vcmask 769024
    %v1005 = vsel %vm1004, %v1003, %v1002
    %1007 = vst.msk [vmem:[#allocation3 + $0x5] sm:$0x5] %vm800, %v1005
    %v1008 = vld [vmem:[#allocation3] sm:$0xff]
    %v1009 = vld [vmem:[%s4] sm:$0xff]
    %v1010 = vld [vmem:[%s4 + $0x8] sm:$0xff]
    %v1011 = vld [vmem:[%s4 + $0x10] sm:$0xff]
    %v1012 = vld [vmem:[%s4 + $0x18] sm:$0xff]
    %v1013 = vld [vmem:[%s4 + $0x20] sm:$0xff]
    %v1014 = vld [vmem:[%s4 + $0x28] sm:$0xff]
    %v1015 = vld [vmem:[%s4 + $0x30] sm:$0xff]
    %v1016 = vld [vmem:[%s4 + $0x38] sm:$0xff]
    %v1017 = vld [vmem:[%s4 + $0x40] sm:$0xff]
    %v1018 = vld [vmem:[%s4 + $0x48] sm:$0xff]
    %v1019 = vld [vmem:[%s4 + $0x50] sm:$0xff]
    %v1020 = vld [vmem:[%s4 + $0x58] sm:$0xff]
    %v1021 = vld [vmem:[%s4 + $0x60] sm:$0xff]
    %v1022 = vld [vmem:[%s4 + $0x68] sm:$0xff]
    %v1023 = vld [vmem:[%s4 + $0x70] sm:$0xff]
    %v1024 = vld [vmem:[%s4 + $0x78] sm:$0xff]
    %v1025 = vld [vmem:[%s4 + $0x80] sm:$0xff]
    %v1026 = vld [vmem:[%s4 + $0x88] sm:$0xff]
    %v1027 = vld [vmem:[%s4 + $0x90] sm:$0xff]
    %v1028 = vld [vmem:[%s4 + $0x98] sm:$0xff]
    %v1029 = vld [vmem:[%s4 + $0xa0] sm:$0xff]
    %v1030 = vld [vmem:[%s4 + $0xa8] sm:$0xff]
    %v1031 = vld [vmem:[%s4 + $0xb0] sm:$0xff]
    %v1032 = vld [vmem:[%s4 + $0xb8] sm:$0xff]
    %v1033 = vld [vmem:[%s4 + $0xc0] sm:$0xff]
    %v1034 = vld [vmem:[%s4 + $0xc8] sm:$0xff]
    %v1035 = vld [vmem:[%s4 + $0xd0] sm:$0xff]
    %v1036 = vld [vmem:[%s4 + $0xd8] sm:$0xff]
    %v1037 = vld [vmem:[%s4 + $0xe0] sm:$0xff]
    %v1038 = vld [vmem:[%s4 + $0xe8] sm:$0xff]
    %v1039 = vld [vmem:[%s4 + $0xf0] sm:$0xff]
    %v1040 = vld [vmem:[%s4 + $0xf8] sm:$0xff]
    %v1041 = vld [vmem:[%s4 + $0x100] sm:$0xff]
    %v1042 = vld [vmem:[%s4 + $0x108] sm:$0xff]
    %v1043 = vld [vmem:[%s4 + $0x110] sm:$0xff]
    %v1044 = vld [vmem:[%s4 + $0x118] sm:$0xff]
    %v1045 = vld [vmem:[%s4 + $0x120] sm:$0xff]
    %v1046 = vld [vmem:[%s4 + $0x128] sm:$0xff]
    %v1047 = vld [vmem:[%s4 + $0x130] sm:$0xff]
    %v1048 = vld [vmem:[%s4 + $0x138] sm:$0xff]
    %v1049 = vld [vmem:[%s4 + $0x140] sm:$0xff]
    %v1050 = vld [vmem:[%s4 + $0x148] sm:$0xff]
    %v1051 = vld [vmem:[%s4 + $0x150] sm:$0xff]
    %v1052 = vld [vmem:[%s4 + $0x158] sm:$0xff]
    %v1053 = vld [vmem:[%s4 + $0x160] sm:$0xff]
    %v1054 = vld [vmem:[%s4 + $0x168] sm:$0xff]
    %v1055 = vld [vmem:[%s4 + $0x170] sm:$0xff]
    %v1056 = vld [vmem:[%s4 + $0x178] sm:$0xff]
    %v1057 = vld [vmem:[%s4 + $0x180] sm:$0xff]
    %v1058 = vld [vmem:[%s4 + $0x188] sm:$0xff]
    %v1059 = vld [vmem:[%s5] sm:$0x1]
    %v1061 = vlaneseq
    %v1062 = vshrl.u32 %v1061, 7
    %v1063 = vsub.s32 0, %v1062
    %v1064 = vrot.slane %v1059, %v1063
    %v1067 = vcombine.high %v1008, %v1008
    %v1069 = vunpack.c.l.s4 1983009808
    %v1070 = vunpack.c.0.s8 %v1069
    %v1071 = vlaneseq
    %v1072 = vshrl.u32 %v1071, 7
    %v1073 = vsub.s32 %v1070, %v1072
    %v1074 = vrot.slane %v1008, %v1073
    %v1076 = vunpack.c.l.s4 1983009808
    %v1077 = vunpack.c.0.s8 %v1076
    %v1078 = vlaneseq
    %v1079 = vshrl.u32 %v1078, 7
    %v1080 = vsub.s32 %v1077, %v1079
    %v1081 = vrot.slane %v1067, %v1080
    %v1082 = vcombine.high %v1074, %v1074
    %v1083 = vcombine.high %v1081, %v1081
    %vm1087 = vcmask 130048
    %v1088 = vsel %vm1087, %v1083, 0
    %1090 = vmatprep.subr.mxu0 0.0
    %1091 = vmatpush1.msra.mxu0 %v1009
    %1092 = vmatprep.subr.mxu0 0.0
    %1093 = vmatpush1.msra.mxu0 %v1010
    %1094 = vmatprep.subr.mxu0 0.0
    %1095 = vmatpush1.msra.mxu0 %v1011
    %1096 = vmatprep.subr.mxu0 0.0
    %1097 = vmatpush1.msra.mxu0 %v1012
    %1098 = vmatprep.subr.mxu0 0.0
    %1099 = vmatpush1.msra.mxu0 %v1013
    %1100 = vmatprep.subr.mxu0 0.0
    %1101 = vmatpush1.msra.mxu0 %v1014
    %1102 = vmatprep.subr.mxu0 0.0
    %1103 = vmatpush1.msra.mxu0 %v1015
    %1104 = vmatprep.subr.mxu0 0.0
    %1105 = vmatpush1.msra.mxu0 %v1016
    %1106 = vmatprep.subr.mxu0 0.0
    %1107 = vmatpush1.msra.mxu0 %v1017
    %1108 = vmatprep.subr.mxu0 0.0
    %1109 = vmatpush1.msra.mxu0 %v1018
    %1110 = vmatprep.subr.mxu0 0.0
    %1111 = vmatpush1.msra.mxu0 %v1019
    %1112 = vmatprep.subr.mxu0 0.0
    %1113 = vmatpush1.msra.mxu0 %v1020
    %1114 = vmatprep.subr.mxu0 0.0
    %1115 = vmatpush1.msra.mxu0 %v1021
    %1116 = vmatprep.subr.mxu0 0.0
    %1117 = vmatpush1.msra.mxu0 %v1022
    %1118 = vmatprep.subr.mxu0 0.0
    %1119 = vmatpush1.msra.mxu0 %v1023
    %1120 = vmatprep.subr.mxu0 0.0
    %1121 = vmatpush1.msra.mxu0 %v1024
    %1122 = vmatprep.subr.mxu0 0.0
    %1123 = vmatpush1.msra.mxu0 %v1025
    %1124 = vmatprep.subr.mxu0 0.0
    %1125 = vmatpush1.msra.mxu0 %v1026
    %1126 = vmatprep.subr.mxu0 0.0
    %1127 = vmatpush1.msra.mxu0 %v1027
    %1128 = vmatprep.subr.mxu0 0.0
    %1129 = vmatpush1.msra.mxu0 %v1028
    %1130 = vmatprep.subr.mxu0 0.0
    %1131 = vmatpush1.msra.mxu0 %v1029
    %1132 = vmatprep.subr.mxu0 0.0
    %1133 = vmatpush1.msra.mxu0 %v1030
    %1134 = vmatprep.subr.mxu0 0.0
    %1135 = vmatpush1.msra.mxu0 %v1031
    %1136 = vmatprep.subr.mxu0 0.0
    %1137 = vmatpush1.msra.mxu0 %v1032
    %1138 = vmatprep.subr.mxu0 0.0
    %1139 = vmatpush1.msra.mxu0 %v1033
    %1140 = vmatprep.subr.mxu0 0.0
    %1141 = vmatpush1.msra.mxu0 %v1034
    %1142 = vmatprep.subr.mxu0 0.0
    %1143 = vmatpush1.msra.mxu0 %v1035
    %1144 = vmatprep.subr.mxu0 0.0
    %1145 = vmatpush1.msra.mxu0 %v1036
    %1146 = vmatprep.subr.mxu0 0.0
    %1147 = vmatpush1.msra.mxu0 %v1037
    %1148 = vmatprep.subr.mxu0 0.0
    %1149 = vmatpush1.msra.mxu0 %v1038
    %1150 = vmatprep.subr.mxu0 0.0
    %1151 = vmatpush1.msra.mxu0 %v1039
    %1152 = vmatprep.subr.mxu0 0.0
    %1153 = vmatpush1.msra.mxu0 %v1040
    %1154 = vmatprep.mubr.f32.mxu0 %v1082
    %1155 = vmatmul.mubr.f32.gmra.mrb[0].mxu0 %v1074
    %v1156 = vpop.f32.mrb[0].mxu0
    %v1157 = vadd.f32 %v1064, %v1156
    %v1158 = vpop.f32.mrb[0].mxu0
    %1159 = vdwg.mxu0
    %1160 = vmatprep.subr.mxu0 0.0
    %1161 = vmatpush1.msra.mxu0 %v1041
    %1162 = vmatprep.subr.mxu0 0.0
    %1163 = vmatpush1.msra.mxu0 %v1042
    %1164 = vmatprep.subr.mxu0 0.0
    %1165 = vmatpush1.msra.mxu0 %v1043
    %1166 = vmatprep.subr.mxu0 0.0
    %1167 = vmatpush1.msra.mxu0 %v1044
    %1168 = vmatprep.subr.mxu0 0.0
    %1169 = vmatpush1.msra.mxu0 %v1045
    %1170 = vmatprep.subr.mxu0 0.0
    %1171 = vmatpush1.msra.mxu0 %v1046
    %1172 = vmatprep.subr.mxu0 0.0
    %1173 = vmatpush1.msra.mxu0 %v1047
    %1174 = vmatprep.subr.mxu0 0.0
    %1175 = vmatpush1.msra.mxu0 %v1048
    %1176 = vmatprep.subr.mxu0 0.0
    %1177 = vmatpush1.msra.mxu0 %v1049
    %1178 = vmatprep.subr.mxu0 0.0
    %1179 = vmatpush1.msra.mxu0 %v1050
    %1180 = vmatprep.subr.mxu0 0.0
    %1181 = vmatpush1.msra.mxu0 %v1051
    %1182 = vmatprep.subr.mxu0 0.0
    %1183 = vmatpush1.msra.mxu0 %v1052
    %1184 = vmatprep.subr.mxu0 0.0
    %1185 = vmatpush1.msra.mxu0 %v1053
    %1186 = vmatprep.subr.mxu0 0.0
    %1187 = vmatpush1.msra.mxu0 %v1054
    %1188 = vmatprep.subr.mxu0 0.0
    %1189 = vmatpush1.msra.mxu0 %v1055
    %1190 = vmatprep.subr.mxu0 0.0
    %1191 = vmatpush1.msra.mxu0 %v1056
    %1192 = vmatprep.subr.mxu0 0.0
    %1193 = vmatpush1.msra.mxu0 %v1057
    %1194 = vmatprep.subr.mxu0 0.0
    %1195 = vmatpush1.msra.mxu0 %v1058
    %1196 = vmatprep.subr.mxu0 0.0
    %1197 = vmatpush1.msra.mxu0 0.0
    %1198 = vmatprep.subr.mxu0 0.0
    %1199 = vmatpush1.msra.mxu0 0.0
    %1200 = vmatprep.subr.mxu0 0.0
    %1201 = vmatpush1.msra.mxu0 0.0
    %1202 = vmatprep.subr.mxu0 0.0
    %1203 = vmatpush1.msra.mxu0 0.0
    %1204 = vmatprep.subr.mxu0 0.0
    %1205 = vmatpush1.msra.mxu0 0.0
    %1206 = vmatprep.subr.mxu0 0.0
    %1207 = vmatpush1.msra.mxu0 0.0
    %1208 = vmatprep.subr.mxu0 0.0
    %1209 = vmatpush1.msra.mxu0 0.0
    %1210 = vmatprep.subr.mxu0 0.0
    %1211 = vmatpush1.msra.mxu0 0.0
    %1212 = vmatprep.subr.mxu0 0.0
    %1213 = vmatpush1.msra.mxu0 0.0
    %1214 = vmatprep.subr.mxu0 0.0
    %1215 = vmatpush1.msra.mxu0 0.0
    %1216 = vmatprep.subr.mxu0 0.0
    %1217 = vmatpush1.msra.mxu0 0.0
    %1218 = vmatprep.subr.mxu0 0.0
    %1219 = vmatpush1.msra.mxu0 0.0
    %1220 = vmatprep.subr.mxu0 0.0
    %1221 = vmatpush1.msra.mxu0 0.0
    %1222 = vmatprep.subr.mxu0 0.0
    %1223 = vmatpush1.msra.mxu0 0.0
    %1224 = vmatprep.mubr.f32.mxu0 %v1088
    %1225 = vmatmul.mubr.f32.gmra.mrb[0].mxu0 %v1081
    %v1226 = vpop.f32.mrb[0].mxu0
    %v1227 = vadd.f32 %v1157, %v1226
    %v1228 = vpop.f32.mrb[0].mxu0
    %1229 = vdwg.mxu0
    %v1230 = vmax.f32 %v1227, 0.0
    %v1231 = vld [vmem:[%s6] sm:$0xff]
    %v1232 = vld [vmem:[%s6 + $0x8] sm:$0xff]
    %v1233 = vld [vmem:[%s6 + $0x10] sm:$0xff]
    %v1234 = vld [vmem:[%s6 + $0x18] sm:$0xff]
    %v1235 = vld [vmem:[%s6 + $0x20] sm:$0xff]
    %v1236 = vld [vmem:[%s6 + $0x28] sm:$0xff]
    %v1237 = vld [vmem:[%s6 + $0x30] sm:$0xff]
    %v1238 = vld [vmem:[%s6 + $0x38] sm:$0xff]
    %v1239 = vld [vmem:[%s6 + $0x40] sm:$0xff]
    %v1240 = vld [vmem:[%s6 + $0x48] sm:$0xff]
    %v1241 = vld [vmem:[%s6 + $0x50] sm:$0xff]
    %v1242 = vld [vmem:[%s6 + $0x58] sm:$0xff]
    %v1243 = vld [vmem:[%s6 + $0x60] sm:$0xff]
    %v1244 = vld [vmem:[%s6 + $0x68] sm:$0xff]
    %v1245 = vld [vmem:[%s6 + $0x70] sm:$0xff]
    %v1246 = vld [vmem:[%s7] sm:$0x1]
    %v1248 = vlaneseq
    %v1249 = vshrl.u32 %v1248, 7
    %v1250 = vsub.s32 0, %v1249
    %v1251 = vrot.slane %v1246, %v1250
    %vm1253 = vcmask 982016
    %v1255 = vsel %vm1253, %v1230, 0
    %1257 = vmatprep.subr.mxu0 0.0
    %1258 = vmatpush1.msra.mxu0 %v1231
    %1259 = vmatprep.subr.mxu0 0.0
    %1260 = vmatpush1.msra.mxu0 %v1232
    %1261 = vmatprep.subr.mxu0 0.0
    %1262 = vmatpush1.msra.mxu0 %v1233
    %1263 = vmatprep.subr.mxu0 0.0
    %1264 = vmatpush1.msra.mxu0 %v1234
    %1265 = vmatprep.subr.mxu0 0.0
    %1266 = vmatpush1.msra.mxu0 %v1235
    %1267 = vmatprep.subr.mxu0 0.0
    %1268 = vmatpush1.msra.mxu0 %v1236
    %1269 = vmatprep.subr.mxu0 0.0
    %1270 = vmatpush1.msra.mxu0 %v1237
    %1271 = vmatprep.subr.mxu0 0.0
    %1272 = vmatpush1.msra.mxu0 %v1238
    %1273 = vmatprep.subr.mxu0 0.0
    %1274 = vmatpush1.msra.mxu0 %v1239
    %1275 = vmatprep.subr.mxu0 0.0
    %1276 = vmatpush1.msra.mxu0 %v1240
    %1277 = vmatprep.subr.mxu0 0.0
    %1278 = vmatpush1.msra.mxu0 %v1241
    %1279 = vmatprep.subr.mxu0 0.0
    %1280 = vmatpush1.msra.mxu0 %v1242
    %1281 = vmatprep.subr.mxu0 0.0
    %1282 = vmatpush1.msra.mxu0 %v1243
    %1283 = vmatprep.subr.mxu0 0.0
    %1284 = vmatpush1.msra.mxu0 %v1244
    %1285 = vmatprep.subr.mxu0 0.0
    %1286 = vmatpush1.msra.mxu0 %v1245
    %1287 = vmatprep.subr.mxu0 0.0
    %1288 = vmatpush1.msra.mxu0 0.0
    %1289 = vmatprep.subr.mxu0 0.0
    %1290 = vmatpush1.msra.mxu0 0.0
    %1291 = vmatprep.subr.mxu0 0.0
    %1292 = vmatpush1.msra.mxu0 0.0
    %1293 = vmatprep.subr.mxu0 0.0
    %1294 = vmatpush1.msra.mxu0 0.0
    %1295 = vmatprep.subr.mxu0 0.0
    %1296 = vmatpush1.msra.mxu0 0.0
    %1297 = vmatprep.subr.mxu0 0.0
    %1298 = vmatpush1.msra.mxu0 0.0
    %1299 = vmatprep.subr.mxu0 0.0
    %1300 = vmatpush1.msra.mxu0 0.0
    %1301 = vmatprep.subr.mxu0 0.0
    %1302 = vmatpush1.msra.mxu0 0.0
    %1303 = vmatprep.subr.mxu0 0.0
    %1304 = vmatpush1.msra.mxu0 0.0
    %1305 = vmatprep.subr.mxu0 0.0
    %1306 = vmatpush1.msra.mxu0 0.0
    %1307 = vmatprep.subr.mxu0 0.0
    %1308 = vmatpush1.msra.mxu0 0.0
    %1309 = vmatprep.subr.mxu0 0.0
    %1310 = vmatpush1.msra.mxu0 0.0
    %1311 = vmatprep.subr.mxu0 0.0
    %1312 = vmatpush1.msra.mxu0 0.0
    %1313 = vmatprep.subr.mxu0 0.0
    %1314 = vmatpush1.msra.mxu0 0.0
    %1315 = vmatprep.subr.mxu0 0.0
    %1316 = vmatpush1.msra.mxu0 0.0
    %1317 = vmatprep.subr.mxu0 0.0
    %1318 = vmatpush1.msra.mxu0 0.0
    %1319 = vmatprep.subr.mxu0 0.0
    %1320 = vmatpush1.msra.mxu0 0.0
    %1321 = vmatprep.mubr.f32.mxu0 0.0
    %1322 = vmatmul.mubr.f32.gmra.mrb[0].mxu0 %v1255
    %v1323 = vpop.f32.mrb[0].mxu0
    %v1324 = vadd.f32 %v1251, %v1323
    %v1325 = vpop.f32.mrb[0].mxu0
    %1326 = vdwg.mxu0
    %v1327 = vmax.f32 %v1324, 0.0
    %v1328 = vld [vmem:[%s8] sm:$0xff]
    %v1329 = vld [vmem:[%s8 + $0x8] sm:$0xff]
    %v1330 = vld [vmem:[%s8 + $0x10] sm:$0xff]
    %v1331 = vld [vmem:[%s8 + $0x18] sm:$0xff]
    %v1332 = vld [vmem:[%s8 + $0x20] sm:$0xff]
    %v1333 = vld [vmem:[%s8 + $0x28] sm:$0xff]
    %v1334 = vld [vmem:[%s8 + $0x30] sm:$0xff]
    %v1335 = vld [vmem:[%s8 + $0x38] sm:$0xff]
    %v1336 = vld [vmem:[%s8 + $0x40] sm:$0xff]
    %v1337 = vld [vmem:[%s8 + $0x48] sm:$0xff]
    %v1338 = vld [vmem:[%s8 + $0x50] sm:$0xf]
    %v1339 = vld [vmem:[%s9] sm:$0x1]
    %v1341 = vlaneseq
    %v1342 = vshrl.u32 %v1341, 7
    %v1343 = vsub.s32 0, %v1342
    %v1344 = vrot.slane %v1339, %v1343
    %vm1346 = vcmask 687104
    %v1348 = vsel %vm1346, %v1327, 0
    %vm1350 = vcmask 1043456
    %v1352 = vsel %vm1350, %v1338, 0
    %1354 = vmatprep.subr.mxu0 0.0
    %1355 = vmatpush1.msra.mxu0 %v1328
    %1356 = vmatprep.subr.mxu0 0.0
    %1357 = vmatpush1.msra.mxu0 %v1329
    %1358 = vmatprep.subr.mxu0 0.0
    %1359 = vmatpush1.msra.mxu0 %v1330
    %1360 = vmatprep.subr.mxu0 0.0
    %1361 = vmatpush1.msra.mxu0 %v1331
    %1362 = vmatprep.subr.mxu0 0.0
    %1363 = vmatpush1.msra.mxu0 %v1332
    %1364 = vmatprep.subr.mxu0 0.0
    %1365 = vmatpush1.msra.mxu0 %v1333
    %1366 = vmatprep.subr.mxu0 0.0
    %1367 = vmatpush1.msra.mxu0 %v1334
    %1368 = vmatprep.subr.mxu0 0.0
    %1369 = vmatpush1.msra.mxu0 %v1335
    %1370 = vmatprep.subr.mxu0 0.0
    %1371 = vmatpush1.msra.mxu0 %v1336
    %1372 = vmatprep.subr.mxu0 0.0
    %1373 = vmatpush1.msra.mxu0 %v1337
    %1374 = vmatprep.subr.mxu0 0.0
    %1375 = vmatpush1.msra.mxu0 %v1352
    %1376 = vmatprep.subr.mxu0 0.0
    %1377 = vmatpush1.msra.mxu0 0.0
    %1378 = vmatprep.subr.mxu0 0.0
    %1379 = vmatpush1.msra.mxu0 0.0
    %1380 = vmatprep.subr.mxu0 0.0
    %1381 = vmatpush1.msra.mxu0 0.0
    %1382 = vmatprep.subr.mxu0 0.0
    %1383 = vmatpush1.msra.mxu0 0.0
    %1384 = vmatprep.subr.mxu0 0.0
    %1385 = vmatpush1.msra.mxu0 0.0
    %1386 = vmatprep.subr.mxu0 0.0
    %1387 = vmatpush1.msra.mxu0 0.0
    %1388 = vmatprep.subr.mxu0 0.0
    %1389 = vmatpush1.msra.mxu0 0.0
    %1390 = vmatprep.subr.mxu0 0.0
    %1391 = vmatpush1.msra.mxu0 0.0
    %1392 = vmatprep.subr.mxu0 0.0
    %1393 = vmatpush1.msra.mxu0 0.0
    %1394 = vmatprep.subr.mxu0 0.0
    %1395 = vmatpush1.msra.mxu0 0.0
    %1396 = vmatprep.subr.mxu0 0.0
    %1397 = vmatpush1.msra.mxu0 0.0
    %1398 = vmatprep.subr.mxu0 0.0
    %1399 = vmatpush1.msra.mxu0 0.0
    %1400 = vmatprep.subr.mxu0 0.0
    %1401 = vmatpush1.msra.mxu0 0.0
    %1402 = vmatprep.subr.mxu0 0.0
    %1403 = vmatpush1.msra.mxu0 0.0
    %1404 = vmatprep.subr.mxu0 0.0
    %1405 = vmatpush1.msra.mxu0 0.0
    %1406 = vmatprep.subr.mxu0 0.0
    %1407 = vmatpush1.msra.mxu0 0.0
    %1408 = vmatprep.subr.mxu0 0.0
    %1409 = vmatpush1.msra.mxu0 0.0
    %1410 = vmatprep.subr.mxu0 0.0
    %1411 = vmatpush1.msra.mxu0 0.0
    %1412 = vmatprep.subr.mxu0 0.0
    %1413 = vmatpush1.msra.mxu0 0.0
    %1414 = vmatprep.subr.mxu0 0.0
    %1415 = vmatpush1.msra.mxu0 0.0
    %1416 = vmatprep.subr.mxu0 0.0
    %1417 = vmatpush1.msra.mxu0 0.0
    %1418 = vmatprep.mubr.f32.mxu0 0.0
    %1419 = vmatmul.mubr.f32.gmra.mrb[0].mxu0 %v1348
    %v1420 = vpop.f32.mrb[0].mxu0
    %v1421 = vadd.f32 %v1344, %v1420
    %v1422 = vpop.f32.mrb[0].mxu0
    %1423 = vdwg.mxu0
    %vm1424 = vcmask 74752
    %1425 = vst.msk [vmem:[#allocation4] sm:$0x3] %vm1424, %v1421
    // Predicated region
    $region42: #{lenet_forward.3} parent=1 // pred_check
      _
    $region43: #{lenet_forward.3} parent=1 // pred_check_branch
      %1427 = sbr.rel (0) target = $region45
    $region44: #{lenet_forward.3} parent=1 // pred_region
      %s1429 = ssub.s32 32, 32
      %1430 = vsyncadd [#allocation5], %s1429
      %s1432 = sshll.u32 [#allocation4], 4
      %s1433 = int_to_ptr.vmem [resolvable:$true] %s1432
      %1435 = dma.vmem_to_hbm [thread:$0]  %s1433, 32, %s10, [#allocation5]
    $region45: #{lenet_forward.3} parent=1 // pred_fallthru
      _
    // Predicated region
    $region46: #{lenet_forward.3} parent=1 // pred_check
      _
    $region47: #{lenet_forward.3} parent=1 // pred_check_branch
      %1437 = sbr.rel (0) target = $region49
    $region48: #{lenet_forward.3} parent=1 // pred_region
      %1438 = dma.done [#allocation5], 32
    $region49: #{lenet_forward.3} parent=1 // pred_fallthru
      _
    %1439 = vsyncpa [#allocation5], 1

</llo_original>
